<compile_context>
chip_gen: v7x
topology: tpu7x:2x2x1
jax: 0.10.0
libtpu: 0.0.40
codegen_flags: <defaults>
</compile_context>

<pallas_src>
import jax
import jax.numpy as jnp
import numpy as np
from jax import lax
from jax.experimental import pallas as pl
from jax.experimental.pallas import tpu as pltpu

# Small hyperparameters consistent with LanguageModel.__init__
FEAT_SIZE = 8
EMB_SIZE = 16
HIDDEN_SIZE = 32
MAX_LEN = 8
RNN_NUM_LAYERS = 2
VOCAB_SIZE = 64
BATCH = 2

LANE = 128
V_PAD = ((VOCAB_SIZE + LANE - 1) // LANE) * LANE  # FC output padded to full lanes


def make_lm_kernel(num_layers, hidden, max_len, batch, vocab, vocab_pad):
    T, B, H, V = max_len, batch, hidden, vocab

    def kernel(*refs):
        # inputs: feat (B,F), cap_tm (T*B,1) i32, mask (T*B,1) f32,
        #         emb_proj (V,4H), wfp (F,E), bfp (1,E),
        #         wih0 (E,4H), whh0 (H,4H), b0 (1,4H),
        #         [wih_l (H,4H), whh_l (H,4H), b_l (1,4H)] for l>=1,
        #         wfc (H,V_PAD), bfc (1,V_PAD)
        # output: out (T*B, V_PAD)
        # scratch: hstack (T*B, H)
        (feat_ref, cap_ref, mask_ref, embp_ref, wfp_ref, bfp_ref,
         wih0_ref, whh0_ref, b0_ref) = refs[:9]
        rest = refs[9:]
        nlr = 3 * (num_layers - 1)
        wih = [rest[3 * i][...] for i in range(num_layers - 1)]
        whh = [rest[3 * i + 1][...] for i in range(num_layers - 1)]
        bl = [rest[3 * i + 2][...] for i in range(num_layers - 1)]
        wfc_ref, bfc_ref = rest[nlr], rest[nlr + 1]
        out_ref = rest[nlr + 2]
        hstack_ref = rest[nlr + 3]

        # ---------- off-critical-path preamble ----------
        # feature_project_layer: Linear + ReLU
        feat_emb = jnp.maximum(
            jnp.dot(feat_ref[...], wfp_ref[...],
                    preferred_element_type=jnp.float32) + bfp_ref[...], 0.0)   # (B, E)

        # Embedding gather + layer-0 input projection fused: emb_proj = emb@wih0
        # was folded in the wrapper, so one (T*B,V)@(V,4H) push covers both.
        tok = cap_ref[...]                                                     # (T*B, 1)
        onehot = (tok == lax.broadcasted_iota(jnp.int32, (T * B, V), 1)
                  ).astype(jnp.float32)                                        # (T*B, V)
        b0 = b0_ref[...]
        gates_words = jnp.dot(onehot, embp_ref[...],
                              preferred_element_type=jnp.float32) + b0         # (T*B, 4H)
        gates_feat = jnp.dot(feat_emb, wih0_ref[...],
                             preferred_element_type=jnp.float32) + b0          # (B, 4H)

        whh0 = whh0_ref[...]

        h = [jnp.zeros((B, H), jnp.float32) for _ in range(num_layers)]
        c = [jnp.zeros((B, H), jnp.float32) for _ in range(num_layers)]
        # Pre-issued recurrent halves.  h == 0 initially, so:
        #   layer 0: rec = 0 (bias lives on the precomputed input projections),
        #   layer l>=1: rec = b_l.
        rec = [jnp.zeros((B, 4 * H), jnp.float32)]
        for l in range(1, num_layers):
            rec.append(jnp.broadcast_to(bl[l - 1], (B, 4 * H)))

        def gates_to_hc(gates, c_prev):
            # Gate columns are permuted to [i, f, o, g] in the wrapper:
            # sigmoid on lanes [0:3H], tanh on [3H:4H] only (no wasted EUP work).
            sg = jax.nn.sigmoid(gates[:, :3 * H])
            g = jnp.tanh(gates[:, 3 * H:])
            i = sg[:, 0 * H:1 * H]
            f = sg[:, 1 * H:2 * H]
            o = sg[:, 2 * H:3 * H]
            c_new = f * c_prev + i * g
            h_new = o * jnp.tanh(c_new)
            return h_new, c_new

        def step(gx0):
            # layer 0: recurrent matmul was pre-issued last step; only the add
            # + activations sit on the serial chain here.
            gates0 = gx0 + rec[0]
            h[0], c[0] = gates_to_hc(gates0, c[0])
            rec[0] = jnp.dot(h[0], whh0, preferred_element_type=jnp.float32)   # pre-issue
            x = h[0]
            # layers >= 1: gates = x @ Wih + rec, rec pre-issued from h[l] of
            # the previous step (sum-of-dots form; MRB-accumulate friendly on v7x).
            for l in range(1, num_layers):
                gates = jnp.dot(x, wih[l - 1],
                                preferred_element_type=jnp.float32) + rec[l]
                h[l], c[l] = gates_to_hc(gates, c[l])
                rec[l] = jnp.dot(h[l], whh[l - 1],
                                 preferred_element_type=jnp.float32) + bl[l - 1]
                x = h[l]
            return x

        # init_inject step: prime the LSTM state with the projected feature.
        step(gates_feat)
        # Caption steps (fully unrolled; T and num_layers are small & static).
        # Stream each top-layer output into scratch to release vregs.
        for t in range(T):
            x = step(gates_words[t * B:(t + 1) * B, :])
            hstack_ref[t * B:(t + 1) * B, :] = x

        # ---------- hoisted epilogue (off the recurrent chain) ----------
        # pad_packed_sequence: zero hidden rows with t >= cap_lens[b].
        masked = hstack_ref[...] * mask_ref[...]                               # (T*B, H)
        logits = jnp.dot(masked, wfc_ref[...],
                         preferred_element_type=jnp.float32) + bfc_ref[...]    # (T*B, V_PAD)
        out_ref[...] = logits                                                  # full-lane store

    return kernel


def _permute_gates(w):
    """Permute trailing 4H gate dim from PyTorch [i,f,g,o] to kernel [i,f,o,g]."""
    i, f, g, o = jnp.split(w, 4, axis=-1)
    return jnp.concatenate([i, f, o, g], axis=-1)


@jax.jit
def language_model_forward(feat, cap_gt, cap_lens, params):
    """Pallas implementation of LanguageModel.forward.

    feat: (B, FEAT_SIZE) f32, cap_gt: (B, MAX_LEN) int, cap_lens: (B,) int
    returns predicts: (B, MAX_LEN, VOCAB_SIZE) f32
    """
    B, T = cap_gt.shape
    H, V, L = HIDDEN_SIZE, VOCAB_SIZE, RNN_NUM_LAYERS

    # --- tiny layout / weight prep, fused into the same jitted executable ---
    wih0 = _permute_gates(params["wih0"].astype(jnp.float32))
    whh0 = _permute_gates(params["whh0"].astype(jnp.float32))
    b0 = _permute_gates(params["b0"].astype(jnp.float32))
    # Fold the embedding table into the layer-0 input projection: (V, 4H).
    emb_proj = jnp.dot(params["emb"].astype(jnp.float32), wih0)

    cap_tm = jnp.transpose(cap_gt.astype(jnp.int32)).reshape(T * B, 1)   # time-major tokens
    mask_rows = (jnp.arange(T, dtype=jnp.int32)[:, None]
                 < cap_lens.astype(jnp.int32)[None, :]
                 ).reshape(T * B, 1).astype(jnp.float32)                 # row r = t*B + b

    # Zero-pad FC to full 128 lanes -> unmasked output store.
    wfc_pad = jnp.pad(params["wfc"].astype(jnp.float32), ((0, 0), (0, V_PAD - V)))
    bfc_pad = jnp.pad(params["bfc"].astype(jnp.float32), ((0, 0), (0, V_PAD - V)))

    inputs = [feat.astype(jnp.float32), cap_tm, mask_rows, emb_proj,
              params["wfp"].astype(jnp.float32), params["bfp"].astype(jnp.float32),
              wih0, whh0, b0]
    for l in range(1, L):
        inputs += [_permute_gates(params[f"wih{l}"].astype(jnp.float32)),
                   _permute_gates(params[f"whh{l}"].astype(jnp.float32)),
                   _permute_gates(params[f"b{l}"].astype(jnp.float32))]
    inputs += [wfc_pad, bfc_pad]

    # Advisory cost estimate so XLA schedules neighbors sensibly.
    flops = 2 * (B * FEAT_SIZE * EMB_SIZE
                 + T * B * V * 4 * H
                 + B * EMB_SIZE * 4 * H
                 + (T + 1) * (1 + 2 * (L - 1)) * B * H * 4 * H
                 + T * B * H * V_PAD)
    transcendentals = (T + 1) * L * B * 5 * H
    bytes_accessed = 4 * (sum(int(x.size) for x in inputs) + T * B * V_PAD)

    kernel = make_lm_kernel(L, H, T, B, V, V_PAD)
    out_tm = pl.pallas_call(
        kernel,
        out_shape=jax.ShapeDtypeStruct((T * B, V_PAD), jnp.float32),
        in_specs=[pl.BlockSpec(memory_space=pltpu.MemorySpace.VMEM)] * len(inputs),
        out_specs=pl.BlockSpec(memory_space=pltpu.MemorySpace.VMEM),
        scratch_shapes=[pltpu.VMEM((T * B, H), jnp.float32)],
        cost_estimate=pl.CostEstimate(flops=flops,
                                      transcendentals=transcendentals,
                                      bytes_accessed=bytes_accessed),
    )(*inputs)
    # (T*B, V_PAD) time-major -> (B, T, V) batch-first (tiny, fused under jit).
    return jnp.transpose(out_tm.reshape(T, B, V_PAD), (1, 0, 2))[:, :, :V]


def ref_forward(feat, cap_gt, cap_lens, params):
    """Pure-JAX reference mirroring the PyTorch forward pass (i,f,g,o order)."""
    B, T = cap_gt.shape
    H = HIDDEN_SIZE
    word_emb = params["emb"][cap_gt].astype(jnp.float32)
    feat_emb = jnp.maximum(feat @ params["wfp"] + params["bfp"], 0.0)
    h = [jnp.zeros((B, H), jnp.float32) for _ in range(RNN_NUM_LAYERS)]
    c = [jnp.zeros((B, H), jnp.float32) for _ in range(RNN_NUM_LAYERS)]

    def cell(x, h_, c_, l):
        gates = x @ params[f"wih{l}"] + h_ @ params[f"whh{l}"] + params[f"b{l}"]
        i = jax.nn.sigmoid(gates[:, :H])
        f = jax.nn.sigmoid(gates[:, H:2 * H])
        g = jnp.tanh(gates[:, 2 * H:3 * H])
        o = jax.nn.sigmoid(gates[:, 3 * H:])
        c2 = f * c_ + i * g
        return o * jnp.tanh(c2), c2

    x = feat_emb
    for l in range(RNN_NUM_LAYERS):
        h[l], c[l] = cell(x, h[l], c[l], l)
        x = h[l]
    outs = []
    for t in range(T):
        x = word_emb[:, t, :]
        for l in range(RNN_NUM_LAYERS):
            h[l], c[l] = cell(x, h[l], c[l], l)
            x = h[l]
        outs.append(h[-1])
    outs = jnp.stack(outs, axis=1)  # (B, T, H)
    mask = (jnp.arange(T)[None, :] < cap_lens[:, None]).astype(jnp.float32)[..., None]
    outs = outs * mask
    return outs @ params["wfc"] + params["bfc"]


if __name__ == "__main__":
    key = jax.random.PRNGKey(0)
    keys = jax.random.split(key, 16)

    def init(k, shape, scale=0.1):
        return scale * jax.random.normal(k, shape, jnp.float32)

    params = {
        "emb": init(keys[0], (VOCAB_SIZE, EMB_SIZE)),          # nn.Embedding
        "wfp": init(keys[1], (FEAT_SIZE, EMB_SIZE)),           # feature_project Linear (W^T)
        "bfp": init(keys[2], (1, EMB_SIZE)),
        # TODO(synk): self.fc_layer is referenced in forward() but never defined
        # in __init__; synthesized here as Linear(hidden_size, vocab_size).
        "wfc": init(keys[3], (HIDDEN_SIZE, VOCAB_SIZE)),
        "bfc": init(keys[4], (1, VOCAB_SIZE)),
    }
    kidx = 5
    for l in range(RNN_NUM_LAYERS):
        in_size = EMB_SIZE if l == 0 else HIDDEN_SIZE
        params[f"wih{l}"] = init(keys[kidx], (in_size, 4 * HIDDEN_SIZE)); kidx += 1
        params[f"whh{l}"] = init(keys[kidx], (HIDDEN_SIZE, 4 * HIDDEN_SIZE)); kidx += 1
        params[f"b{l}"] = init(keys[kidx], (1, 4 * HIDDEN_SIZE)); kidx += 1

    feat = jax.random.normal(keys[13], (BATCH, FEAT_SIZE), jnp.float32)
    cap_gt = jax.random.randint(keys[14], (BATCH, MAX_LEN), 0, VOCAB_SIZE, dtype=jnp.int32)
    cap_lens = jnp.array([MAX_LEN, MAX_LEN - 3], dtype=jnp.int32)

    out = jax.block_until_ready(language_model_forward(feat, cap_gt, cap_lens, params))
    assert out.shape == (BATCH, MAX_LEN, VOCAB_SIZE)

    ref = ref_forward(feat, cap_gt, cap_lens, params)
    np.testing.assert_allclose(np.asarray(out), np.asarray(ref), atol=1e-4, rtol=1e-4)
    print("KERNEL_OK")
</pallas_src>

<mosaic_0001>
module attributes {stable_mosaic.version = 11 : i64} {
  func.func @kernel(%arg0: memref<2x8xf32, #tpu.memory_space<vmem>>, %arg1: memref<16x1xi32, #tpu.memory_space<vmem>>, %arg2: memref<16x1xf32, #tpu.memory_space<vmem>>, %arg3: memref<64x128xf32, #tpu.memory_space<vmem>>, %arg4: memref<8x16xf32, #tpu.memory_space<vmem>>, %arg5: memref<1x16xf32, #tpu.memory_space<vmem>>, %arg6: memref<16x128xf32, #tpu.memory_space<vmem>>, %arg7: memref<32x128xf32, #tpu.memory_space<vmem>>, %arg8: memref<1x128xf32, #tpu.memory_space<vmem>>, %arg9: memref<32x128xf32, #tpu.memory_space<vmem>>, %arg10: memref<32x128xf32, #tpu.memory_space<vmem>>, %arg11: memref<1x128xf32, #tpu.memory_space<vmem>>, %arg12: memref<32x128xf32, #tpu.memory_space<vmem>>, %arg13: memref<1x128xf32, #tpu.memory_space<vmem>>, %arg14: memref<16x128xf32, #tpu.memory_space<vmem>>, %arg15: memref<16x32xf32, #tpu.memory_space<vmem>>) attributes {dimension_semantics = [], scalar_prefetch = 0 : i64, scratch_operands = 1 : i64, tpu.core_type = #tpu.core_type<tc>} {
    %c0 = arith.constant 0 : index
    %c0_0 = arith.constant 0 : index
    %0 = vector.load %arg9[%c0, %c0_0] : memref<32x128xf32, #tpu.memory_space<vmem>>, vector<32x128xf32>
    %c0_1 = arith.constant 0 : index
    %c0_2 = arith.constant 0 : index
    %1 = vector.load %arg10[%c0_1, %c0_2] : memref<32x128xf32, #tpu.memory_space<vmem>>, vector<32x128xf32>
    %c0_3 = arith.constant 0 : index
    %c0_4 = arith.constant 0 : index
    %2 = vector.load %arg11[%c0_3, %c0_4] : memref<1x128xf32, #tpu.memory_space<vmem>>, vector<1x128xf32>
    %c0_5 = arith.constant 0 : index
    %c0_6 = arith.constant 0 : index
    %3 = vector.load %arg0[%c0_5, %c0_6] : memref<2x8xf32, #tpu.memory_space<vmem>>, vector<2x8xf32>
    %c0_7 = arith.constant 0 : index
    %c0_8 = arith.constant 0 : index
    %4 = vector.load %arg4[%c0_7, %c0_8] : memref<8x16xf32, #tpu.memory_space<vmem>>, vector<8x16xf32>
    %cst = arith.constant dense<0.000000e+00> : vector<2x16xf32>
    %5 = tpu.matmul %3, %4, %cst {dimension_numbers = #tpu.dot_dimension_numbers<[1], [0], [0], [1], [0, 0, 1, 1], [], []>} : vector<2x8xf32>, vector<8x16xf32>, vector<2x16xf32> -> vector<2x16xf32>
    %c0_9 = arith.constant 0 : index
    %c0_10 = arith.constant 0 : index
    %6 = vector.load %arg5[%c0_9, %c0_10] : memref<1x16xf32, #tpu.memory_space<vmem>>, vector<1x16xf32>
    %7 = vector.broadcast %6 : vector<1x16xf32> to vector<2x16xf32>
    %8 = arith.addf %5, %7 : vector<2x16xf32>
    %cst_11 = arith.constant 0.000000e+00 : f32
    %9 = vector.broadcast %cst_11 : f32 to vector<2x16xf32>
    %10 = arith.maximumf %8, %9 : vector<2x16xf32>
    %c0_12 = arith.constant 0 : index
    %c0_13 = arith.constant 0 : index
    %11 = vector.load %arg1[%c0_12, %c0_13] : memref<16x1xi32, #tpu.memory_space<vmem>>, vector<16x1xi32>
    %12 = tpu.iota {dimensions = array<i32: 1>} : vector<16x64xi32>
    %13 = vector.broadcast %11 : vector<16x1xi32> to vector<16x64xi32>
    %14 = arith.cmpi eq, %13, %12 : vector<16x64xi32>
    %15 = arith.extui %14 : vector<16x64xi1> to vector<16x64xi32>
    %16 = arith.sitofp %15 : vector<16x64xi32> to vector<16x64xf32>
    %c0_14 = arith.constant 0 : index
    %c0_15 = arith.constant 0 : index
    %17 = vector.load %arg8[%c0_14, %c0_15] : memref<1x128xf32, #tpu.memory_space<vmem>>, vector<1x128xf32>
    %c0_16 = arith.constant 0 : index
    %c0_17 = arith.constant 0 : index
    %18 = vector.load %arg3[%c0_16, %c0_17] : memref<64x128xf32, #tpu.memory_space<vmem>>, vector<64x128xf32>
    %cst_18 = arith.constant dense<0.000000e+00> : vector<16x128xf32>
    %19 = tpu.matmul %16, %18, %cst_18 {dimension_numbers = #tpu.dot_dimension_numbers<[1], [0], [0], [1], [0, 0, 1, 1], [], []>} : vector<16x64xf32>, vector<64x128xf32>, vector<16x128xf32> -> vector<16x128xf32>
    %20 = vector.broadcast %17 : vector<1x128xf32> to vector<16x128xf32>
    %21 = arith.addf %19, %20 : vector<16x128xf32>
    %c0_19 = arith.constant 0 : index
    %c0_20 = arith.constant 0 : index
    %22 = vector.load %arg6[%c0_19, %c0_20] : memref<16x128xf32, #tpu.memory_space<vmem>>, vector<16x128xf32>
    %cst_21 = arith.constant dense<0.000000e+00> : vector<2x128xf32>
    %23 = tpu.matmul %10, %22, %cst_21 {dimension_numbers = #tpu.dot_dimension_numbers<[1], [0], [0], [1], [0, 0, 1, 1], [], []>} : vector<2x16xf32>, vector<16x128xf32>, vector<2x128xf32> -> vector<2x128xf32>
    %24 = vector.broadcast %17 : vector<1x128xf32> to vector<2x128xf32>
    %25 = arith.addf %23, %24 : vector<2x128xf32>
    %c0_22 = arith.constant 0 : index
    %c0_23 = arith.constant 0 : index
    %26 = vector.load %arg7[%c0_22, %c0_23] : memref<32x128xf32, #tpu.memory_space<vmem>>, vector<32x128xf32>
    %cst_24 = arith.constant 0.000000e+00 : f32
    %27 = vector.broadcast %cst_24 : f32 to vector<2x32xf32>
    %cst_25 = arith.constant 0.000000e+00 : f32
    %28 = vector.broadcast %cst_25 : f32 to vector<2x32xf32>
    %cst_26 = arith.constant 0.000000e+00 : f32
    %29 = vector.broadcast %cst_26 : f32 to vector<2x128xf32>
    %30 = vector.shape_cast %2 : vector<1x128xf32> to vector<1x128xf32>
    %31 = vector.broadcast %30 : vector<1x128xf32> to vector<2x128xf32>
    %32 = arith.addf %25, %29 : vector<2x128xf32>
    %33 = vector.extract_strided_slice %32 {offsets = [0, 0], sizes = [2, 96], strides = [1, 1]} : vector<2x128xf32> to vector<2x96xf32>
    %34 = arith.negf %33 : vector<2x96xf32>
    %35 = math.exp %34 : vector<2x96xf32>
    %cst_27 = arith.constant 1.000000e+00 : f32
    %36 = vector.broadcast %cst_27 : f32 to vector<2x96xf32>
    %37 = arith.addf %36, %35 : vector<2x96xf32>
    %38 = arith.divf %36, %37 : vector<2x96xf32>
    %39 = vector.extract_strided_slice %32 {offsets = [0, 96], sizes = [2, 32], strides = [1, 1]} : vector<2x128xf32> to vector<2x32xf32>
    %40 = math.tanh %39 : vector<2x32xf32>
    %41 = vector.extract_strided_slice %38 {offsets = [0, 0], sizes = [2, 32], strides = [1, 1]} : vector<2x96xf32> to vector<2x32xf32>
    %42 = vector.extract_strided_slice %38 {offsets = [0, 32], sizes = [2, 32], strides = [1, 1]} : vector<2x96xf32> to vector<2x32xf32>
    %43 = vector.extract_strided_slice %38 {offsets = [0, 64], sizes = [2, 32], strides = [1, 1]} : vector<2x96xf32> to vector<2x32xf32>
    %44 = arith.mulf %42, %27 : vector<2x32xf32>
    %45 = arith.mulf %41, %40 : vector<2x32xf32>
    %46 = arith.addf %44, %45 : vector<2x32xf32>
    %47 = math.tanh %46 : vector<2x32xf32>
    %48 = arith.mulf %43, %47 : vector<2x32xf32>
    %cst_28 = arith.constant dense<0.000000e+00> : vector<2x128xf32>
    %49 = tpu.matmul %48, %26, %cst_28 {dimension_numbers = #tpu.dot_dimension_numbers<[1], [0], [0], [1], [0, 0, 1, 1], [], []>} : vector<2x32xf32>, vector<32x128xf32>, vector<2x128xf32> -> vector<2x128xf32>
    %cst_29 = arith.constant dense<0.000000e+00> : vector<2x128xf32>
    %50 = tpu.matmul %48, %0, %cst_29 {dimension_numbers = #tpu.dot_dimension_numbers<[1], [0], [0], [1], [0, 0, 1, 1], [], []>} : vector<2x32xf32>, vector<32x128xf32>, vector<2x128xf32> -> vector<2x128xf32>
    %51 = arith.addf %50, %31 : vector<2x128xf32>
    %52 = vector.extract_strided_slice %51 {offsets = [0, 0], sizes = [2, 96], strides = [1, 1]} : vector<2x128xf32> to vector<2x96xf32>
    %53 = arith.negf %52 : vector<2x96xf32>
    %54 = math.exp %53 : vector<2x96xf32>
    %cst_30 = arith.constant 1.000000e+00 : f32
    %55 = vector.broadcast %cst_30 : f32 to vector<2x96xf32>
    %56 = arith.addf %55, %54 : vector<2x96xf32>
    %57 = arith.divf %55, %56 : vector<2x96xf32>
    %58 = vector.extract_strided_slice %51 {offsets = [0, 96], sizes = [2, 32], strides = [1, 1]} : vector<2x128xf32> to vector<2x32xf32>
    %59 = math.tanh %58 : vector<2x32xf32>
    %60 = vector.extract_strided_slice %57 {offsets = [0, 0], sizes = [2, 32], strides = [1, 1]} : vector<2x96xf32> to vector<2x32xf32>
    %61 = vector.extract_strided_slice %57 {offsets = [0, 32], sizes = [2, 32], strides = [1, 1]} : vector<2x96xf32> to vector<2x32xf32>
    %62 = vector.extract_strided_slice %57 {offsets = [0, 64], sizes = [2, 32], strides = [1, 1]} : vector<2x96xf32> to vector<2x32xf32>
    %63 = arith.mulf %61, %28 : vector<2x32xf32>
    %64 = arith.mulf %60, %59 : vector<2x32xf32>
    %65 = arith.addf %63, %64 : vector<2x32xf32>
    %66 = math.tanh %65 : vector<2x32xf32>
    %67 = arith.mulf %62, %66 : vector<2x32xf32>
    %cst_31 = arith.constant dense<0.000000e+00> : vector<2x128xf32>
    %68 = tpu.matmul %67, %1, %cst_31 {dimension_numbers = #tpu.dot_dimension_numbers<[1], [0], [0], [1], [0, 0, 1, 1], [], []>} : vector<2x32xf32>, vector<32x128xf32>, vector<2x128xf32> -> vector<2x128xf32>
    %69 = vector.broadcast %2 : vector<1x128xf32> to vector<2x128xf32>
    %70 = arith.addf %68, %69 : vector<2x128xf32>
    %71 = vector.extract_strided_slice %21 {offsets = [0, 0], sizes = [2, 128], strides = [1, 1]} : vector<16x128xf32> to vector<2x128xf32>
    %72 = arith.addf %71, %49 : vector<2x128xf32>
    %73 = vector.extract_strided_slice %72 {offsets = [0, 0], sizes = [2, 96], strides = [1, 1]} : vector<2x128xf32> to vector<2x96xf32>
    %74 = arith.negf %73 : vector<2x96xf32>
    %75 = math.exp %74 : vector<2x96xf32>
    %cst_32 = arith.constant 1.000000e+00 : f32
    %76 = vector.broadcast %cst_32 : f32 to vector<2x96xf32>
    %77 = arith.addf %76, %75 : vector<2x96xf32>
    %78 = arith.divf %76, %77 : vector<2x96xf32>
    %79 = vector.extract_strided_slice %72 {offsets = [0, 96], sizes = [2, 32], strides = [1, 1]} : vector<2x128xf32> to vector<2x32xf32>
    %80 = math.tanh %79 : vector<2x32xf32>
    %81 = vector.extract_strided_slice %78 {offsets = [0, 0], sizes = [2, 32], strides = [1, 1]} : vector<2x96xf32> to vector<2x32xf32>
    %82 = vector.extract_strided_slice %78 {offsets = [0, 32], sizes = [2, 32], strides = [1, 1]} : vector<2x96xf32> to vector<2x32xf32>
    %83 = vector.extract_strided_slice %78 {offsets = [0, 64], sizes = [2, 32], strides = [1, 1]} : vector<2x96xf32> to vector<2x32xf32>
    %84 = arith.mulf %82, %46 : vector<2x32xf32>
    %85 = arith.mulf %81, %80 : vector<2x32xf32>
    %86 = arith.addf %84, %85 : vector<2x32xf32>
    %87 = math.tanh %86 : vector<2x32xf32>
    %88 = arith.mulf %83, %87 : vector<2x32xf32>
    %cst_33 = arith.constant dense<0.000000e+00> : vector<2x128xf32>
    %89 = tpu.matmul %88, %26, %cst_33 {dimension_numbers = #tpu.dot_dimension_numbers<[1], [0], [0], [1], [0, 0, 1, 1], [], []>} : vector<2x32xf32>, vector<32x128xf32>, vector<2x128xf32> -> vector<2x128xf32>
    %cst_34 = arith.constant dense<0.000000e+00> : vector<2x128xf32>
    %90 = tpu.matmul %88, %0, %cst_34 {dimension_numbers = #tpu.dot_dimension_numbers<[1], [0], [0], [1], [0, 0, 1, 1], [], []>} : vector<2x32xf32>, vector<32x128xf32>, vector<2x128xf32> -> vector<2x128xf32>
    %91 = arith.addf %90, %70 : vector<2x128xf32>
    %92 = vector.extract_strided_slice %91 {offsets = [0, 0], sizes = [2, 96], strides = [1, 1]} : vector<2x128xf32> to vector<2x96xf32>
    %93 = arith.negf %92 : vector<2x96xf32>
    %94 = math.exp %93 : vector<2x96xf32>
    %cst_35 = arith.constant 1.000000e+00 : f32
    %95 = vector.broadcast %cst_35 : f32 to vector<2x96xf32>
    %96 = arith.addf %95, %94 : vector<2x96xf32>
    %97 = arith.divf %95, %96 : vector<2x96xf32>
    %98 = vector.extract_strided_slice %91 {offsets = [0, 96], sizes = [2, 32], strides = [1, 1]} : vector<2x128xf32> to vector<2x32xf32>
    %99 = math.tanh %98 : vector<2x32xf32>
    %100 = vector.extract_strided_slice %97 {offsets = [0, 0], sizes = [2, 32], strides = [1, 1]} : vector<2x96xf32> to vector<2x32xf32>
    %101 = vector.extract_strided_slice %97 {offsets = [0, 32], sizes = [2, 32], strides = [1, 1]} : vector<2x96xf32> to vector<2x32xf32>
    %102 = vector.extract_strided_slice %97 {offsets = [0, 64], sizes = [2, 32], strides = [1, 1]} : vector<2x96xf32> to vector<2x32xf32>
    %103 = arith.mulf %101, %65 : vector<2x32xf32>
    %104 = arith.mulf %100, %99 : vector<2x32xf32>
    %105 = arith.addf %103, %104 : vector<2x32xf32>
    %106 = math.tanh %105 : vector<2x32xf32>
    %107 = arith.mulf %102, %106 : vector<2x32xf32>
    %cst_36 = arith.constant dense<0.000000e+00> : vector<2x128xf32>
    %108 = tpu.matmul %107, %1, %cst_36 {dimension_numbers = #tpu.dot_dimension_numbers<[1], [0], [0], [1], [0, 0, 1, 1], [], []>} : vector<2x32xf32>, vector<32x128xf32>, vector<2x128xf32> -> vector<2x128xf32>
    %109 = vector.broadcast %2 : vector<1x128xf32> to vector<2x128xf32>
    %110 = arith.addf %108, %109 : vector<2x128xf32>
    %c0_37 = arith.constant 0 : index
    %c0_38 = arith.constant 0 : index
    %111 = vector.load %arg15[%c0_37, %c0_38] : memref<16x32xf32, #tpu.memory_space<vmem>>, vector<2x32xf32>
    tpu.vector_store %arg15[%c0_37, %c0_38], %107 {strides = array<i32>} : memref<16x32xf32, #tpu.memory_space<vmem>>, vector<2x32xf32>,
    %112 = vector.extract_strided_slice %21 {offsets = [2, 0], sizes = [2, 128], strides = [1, 1]} : vector<16x128xf32> to vector<2x128xf32>
    %113 = arith.addf %112, %89 : vector<2x128xf32>
    %114 = vector.extract_strided_slice %113 {offsets = [0, 0], sizes = [2, 96], strides = [1, 1]} : vector<2x128xf32> to vector<2x96xf32>
    %115 = arith.negf %114 : vector<2x96xf32>
    %116 = math.exp %115 : vector<2x96xf32>
    %cst_39 = arith.constant 1.000000e+00 : f32
    %117 = vector.broadcast %cst_39 : f32 to vector<2x96xf32>
    %118 = arith.addf %117, %116 : vector<2x96xf32>
    %119 = arith.divf %117, %118 : vector<2x96xf32>
    %120 = vector.extract_strided_slice %113 {offsets = [0, 96], sizes = [2, 32], strides = [1, 1]} : vector<2x128xf32> to vector<2x32xf32>
    %121 = math.tanh %120 : vector<2x32xf32>
    %122 = vector.extract_strided_slice %119 {offsets = [0, 0], sizes = [2, 32], strides = [1, 1]} : vector<2x96xf32> to vector<2x32xf32>
    %123 = vector.extract_strided_slice %119 {offsets = [0, 32], sizes = [2, 32], strides = [1, 1]} : vector<2x96xf32> to vector<2x32xf32>
    %124 = vector.extract_strided_slice %119 {offsets = [0, 64], sizes = [2, 32], strides = [1, 1]} : vector<2x96xf32> to vector<2x32xf32>
    %125 = arith.mulf %123, %86 : vector<2x32xf32>
    %126 = arith.mulf %122, %121 : vector<2x32xf32>
    %127 = arith.addf %125, %126 : vector<2x32xf32>
    %128 = math.tanh %127 : vector<2x32xf32>
    %129 = arith.mulf %124, %128 : vector<2x32xf32>
    %cst_40 = arith.constant dense<0.000000e+00> : vector<2x128xf32>
    %130 = tpu.matmul %129, %26, %cst_40 {dimension_numbers = #tpu.dot_dimension_numbers<[1], [0], [0], [1], [0, 0, 1, 1], [], []>} : vector<2x32xf32>, vector<32x128xf32>, vector<2x128xf32> -> vector<2x128xf32>
    %cst_41 = arith.constant dense<0.000000e+00> : vector<2x128xf32>
    %131 = tpu.matmul %129, %0, %cst_41 {dimension_numbers = #tpu.dot_dimension_numbers<[1], [0], [0], [1], [0, 0, 1, 1], [], []>} : vector<2x32xf32>, vector<32x128xf32>, vector<2x128xf32> -> vector<2x128xf32>
    %132 = arith.addf %131, %110 : vector<2x128xf32>
    %133 = vector.extract_strided_slice %132 {offsets = [0, 0], sizes = [2, 96], strides = [1, 1]} : vector<2x128xf32> to vector<2x96xf32>
    %134 = arith.negf %133 : vector<2x96xf32>
    %135 = math.exp %134 : vector<2x96xf32>
    %cst_42 = arith.constant 1.000000e+00 : f32
    %136 = vector.broadcast %cst_42 : f32 to vector<2x96xf32>
    %137 = arith.addf %136, %135 : vector<2x96xf32>
    %138 = arith.divf %136, %137 : vector<2x96xf32>
    %139 = vector.extract_strided_slice %132 {offsets = [0, 96], sizes = [2, 32], strides = [1, 1]} : vector<2x128xf32> to vector<2x32xf32>
    %140 = math.tanh %139 : vector<2x32xf32>
    %141 = vector.extract_strided_slice %138 {offsets = [0, 0], sizes = [2, 32], strides = [1, 1]} : vector<2x96xf32> to vector<2x32xf32>
    %142 = vector.extract_strided_slice %138 {offsets = [0, 32], sizes = [2, 32], strides = [1, 1]} : vector<2x96xf32> to vector<2x32xf32>
    %143 = vector.extract_strided_slice %138 {offsets = [0, 64], sizes = [2, 32], strides = [1, 1]} : vector<2x96xf32> to vector<2x32xf32>
    %144 = arith.mulf %142, %105 : vector<2x32xf32>
    %145 = arith.mulf %141, %140 : vector<2x32xf32>
    %146 = arith.addf %144, %145 : vector<2x32xf32>
    %147 = math.tanh %146 : vector<2x32xf32>
    %148 = arith.mulf %143, %147 : vector<2x32xf32>
    %cst_43 = arith.constant dense<0.000000e+00> : vector<2x128xf32>
    %149 = tpu.matmul %148, %1, %cst_43 {dimension_numbers = #tpu.dot_dimension_numbers<[1], [0], [0], [1], [0, 0, 1, 1], [], []>} : vector<2x32xf32>, vector<32x128xf32>, vector<2x128xf32> -> vector<2x128xf32>
    %150 = vector.broadcast %2 : vector<1x128xf32> to vector<2x128xf32>
    %151 = arith.addf %149, %150 : vector<2x128xf32>
    %c2 = arith.constant 2 : index
    %c0_44 = arith.constant 0 : index
    %152 = vector.load %arg15[%c2, %c0_44] : memref<16x32xf32, #tpu.memory_space<vmem>>, vector<2x32xf32>
    tpu.vector_store %arg15[%c2, %c0_44], %148 {strides = array<i32>} : memref<16x32xf32, #tpu.memory_space<vmem>>, vector<2x32xf32>,
    %153 = vector.extract_strided_slice %21 {offsets = [4, 0], sizes = [2, 128], strides = [1, 1]} : vector<16x128xf32> to vector<2x128xf32>
    %154 = arith.addf %153, %130 : vector<2x128xf32>
    %155 = vector.extract_strided_slice %154 {offsets = [0, 0], sizes = [2, 96], strides = [1, 1]} : vector<2x128xf32> to vector<2x96xf32>
    %156 = arith.negf %155 : vector<2x96xf32>
    %157 = math.exp %156 : vector<2x96xf32>
    %cst_45 = arith.constant 1.000000e+00 : f32
    %158 = vector.broadcast %cst_45 : f32 to vector<2x96xf32>
    %159 = arith.addf %158, %157 : vector<2x96xf32>
    %160 = arith.divf %158, %159 : vector<2x96xf32>
    %161 = vector.extract_strided_slice %154 {offsets = [0, 96], sizes = [2, 32], strides = [1, 1]} : vector<2x128xf32> to vector<2x32xf32>
    %162 = math.tanh %161 : vector<2x32xf32>
    %163 = vector.extract_strided_slice %160 {offsets = [0, 0], sizes = [2, 32], strides = [1, 1]} : vector<2x96xf32> to vector<2x32xf32>
    %164 = vector.extract_strided_slice %160 {offsets = [0, 32], sizes = [2, 32], strides = [1, 1]} : vector<2x96xf32> to vector<2x32xf32>
    %165 = vector.extract_strided_slice %160 {offsets = [0, 64], sizes = [2, 32], strides = [1, 1]} : vector<2x96xf32> to vector<2x32xf32>
    %166 = arith.mulf %164, %127 : vector<2x32xf32>
    %167 = arith.mulf %163, %162 : vector<2x32xf32>
    %168 = arith.addf %166, %167 : vector<2x32xf32>
    %169 = math.tanh %168 : vector<2x32xf32>
    %170 = arith.mulf %165, %169 : vector<2x32xf32>
    %cst_46 = arith.constant dense<0.000000e+00> : vector<2x128xf32>
    %171 = tpu.matmul %170, %26, %cst_46 {dimension_numbers = #tpu.dot_dimension_numbers<[1], [0], [0], [1], [0, 0, 1, 1], [], []>} : vector<2x32xf32>, vector<32x128xf32>, vector<2x128xf32> -> vector<2x128xf32>
    %cst_47 = arith.constant dense<0.000000e+00> : vector<2x128xf32>
    %172 = tpu.matmul %170, %0, %cst_47 {dimension_numbers = #tpu.dot_dimension_numbers<[1], [0], [0], [1], [0, 0, 1, 1], [], []>} : vector<2x32xf32>, vector<32x128xf32>, vector<2x128xf32> -> vector<2x128xf32>
    %173 = arith.addf %172, %151 : vector<2x128xf32>
    %174 = vector.extract_strided_slice %173 {offsets = [0, 0], sizes = [2, 96], strides = [1, 1]} : vector<2x128xf32> to vector<2x96xf32>
    %175 = arith.negf %174 : vector<2x96xf32>
    %176 = math.exp %175 : vector<2x96xf32>
    %cst_48 = arith.constant 1.000000e+00 : f32
    %177 = vector.broadcast %cst_48 : f32 to vector<2x96xf32>
    %178 = arith.addf %177, %176 : vector<2x96xf32>
    %179 = arith.divf %177, %178 : vector<2x96xf32>
    %180 = vector.extract_strided_slice %173 {offsets = [0, 96], sizes = [2, 32], strides = [1, 1]} : vector<2x128xf32> to vector<2x32xf32>
    %181 = math.tanh %180 : vector<2x32xf32>
    %182 = vector.extract_strided_slice %179 {offsets = [0, 0], sizes = [2, 32], strides = [1, 1]} : vector<2x96xf32> to vector<2x32xf32>
    %183 = vector.extract_strided_slice %179 {offsets = [0, 32], sizes = [2, 32], strides = [1, 1]} : vector<2x96xf32> to vector<2x32xf32>
    %184 = vector.extract_strided_slice %179 {offsets = [0, 64], sizes = [2, 32], strides = [1, 1]} : vector<2x96xf32> to vector<2x32xf32>
    %185 = arith.mulf %183, %146 : vector<2x32xf32>
    %186 = arith.mulf %182, %181 : vector<2x32xf32>
    %187 = arith.addf %185, %186 : vector<2x32xf32>
    %188 = math.tanh %187 : vector<2x32xf32>
    %189 = arith.mulf %184, %188 : vector<2x32xf32>
    %cst_49 = arith.constant dense<0.000000e+00> : vector<2x128xf32>
    %190 = tpu.matmul %189, %1, %cst_49 {dimension_numbers = #tpu.dot_dimension_numbers<[1], [0], [0], [1], [0, 0, 1, 1], [], []>} : vector<2x32xf32>, vector<32x128xf32>, vector<2x128xf32> -> vector<2x128xf32>
    %191 = vector.broadcast %2 : vector<1x128xf32> to vector<2x128xf32>
    %192 = arith.addf %190, %191 : vector<2x128xf32>
    %c4 = arith.constant 4 : index
    %c0_50 = arith.constant 0 : index
    %193 = vector.load %arg15[%c4, %c0_50] : memref<16x32xf32, #tpu.memory_space<vmem>>, vector<2x32xf32>
    tpu.vector_store %arg15[%c4, %c0_50], %189 {strides = array<i32>} : memref<16x32xf32, #tpu.memory_space<vmem>>, vector<2x32xf32>,
    %194 = vector.extract_strided_slice %21 {offsets = [6, 0], sizes = [2, 128], strides = [1, 1]} : vector<16x128xf32> to vector<2x128xf32>
    %195 = arith.addf %194, %171 : vector<2x128xf32>
    %196 = vector.extract_strided_slice %195 {offsets = [0, 0], sizes = [2, 96], strides = [1, 1]} : vector<2x128xf32> to vector<2x96xf32>
    %197 = arith.negf %196 : vector<2x96xf32>
    %198 = math.exp %197 : vector<2x96xf32>
    %cst_51 = arith.constant 1.000000e+00 : f32
    %199 = vector.broadcast %cst_51 : f32 to vector<2x96xf32>
    %200 = arith.addf %199, %198 : vector<2x96xf32>
    %201 = arith.divf %199, %200 : vector<2x96xf32>
    %202 = vector.extract_strided_slice %195 {offsets = [0, 96], sizes = [2, 32], strides = [1, 1]} : vector<2x128xf32> to vector<2x32xf32>
    %203 = math.tanh %202 : vector<2x32xf32>
    %204 = vector.extract_strided_slice %201 {offsets = [0, 0], sizes = [2, 32], strides = [1, 1]} : vector<2x96xf32> to vector<2x32xf32>
    %205 = vector.extract_strided_slice %201 {offsets = [0, 32], sizes = [2, 32], strides = [1, 1]} : vector<2x96xf32> to vector<2x32xf32>
    %206 = vector.extract_strided_slice %201 {offsets = [0, 64], sizes = [2, 32], strides = [1, 1]} : vector<2x96xf32> to vector<2x32xf32>
    %207 = arith.mulf %205, %168 : vector<2x32xf32>
    %208 = arith.mulf %204, %203 : vector<2x32xf32>
    %209 = arith.addf %207, %208 : vector<2x32xf32>
    %210 = math.tanh %209 : vector<2x32xf32>
    %211 = arith.mulf %206, %210 : vector<2x32xf32>
    %cst_52 = arith.constant dense<0.000000e+00> : vector<2x128xf32>
    %212 = tpu.matmul %211, %26, %cst_52 {dimension_numbers = #tpu.dot_dimension_numbers<[1], [0], [0], [1], [0, 0, 1, 1], [], []>} : vector<2x32xf32>, vector<32x128xf32>, vector<2x128xf32> -> vector<2x128xf32>
    %cst_53 = arith.constant dense<0.000000e+00> : vector<2x128xf32>
    %213 = tpu.matmul %211, %0, %cst_53 {dimension_numbers = #tpu.dot_dimension_numbers<[1], [0], [0], [1], [0, 0, 1, 1], [], []>} : vector<2x32xf32>, vector<32x128xf32>, vector<2x128xf32> -> vector<2x128xf32>
    %214 = arith.addf %213, %192 : vector<2x128xf32>
    %215 = vector.extract_strided_slice %214 {offsets = [0, 0], sizes = [2, 96], strides = [1, 1]} : vector<2x128xf32> to vector<2x96xf32>
    %216 = arith.negf %215 : vector<2x96xf32>
    %217 = math.exp %216 : vector<2x96xf32>
    %cst_54 = arith.constant 1.000000e+00 : f32
    %218 = vector.broadcast %cst_54 : f32 to vector<2x96xf32>
    %219 = arith.addf %218, %217 : vector<2x96xf32>
    %220 = arith.divf %218, %219 : vector<2x96xf32>
    %221 = vector.extract_strided_slice %214 {offsets = [0, 96], sizes = [2, 32], strides = [1, 1]} : vector<2x128xf32> to vector<2x32xf32>
    %222 = math.tanh %221 : vector<2x32xf32>
    %223 = vector.extract_strided_slice %220 {offsets = [0, 0], sizes = [2, 32], strides = [1, 1]} : vector<2x96xf32> to vector<2x32xf32>
    %224 = vector.extract_strided_slice %220 {offsets = [0, 32], sizes = [2, 32], strides = [1, 1]} : vector<2x96xf32> to vector<2x32xf32>
    %225 = vector.extract_strided_slice %220 {offsets = [0, 64], sizes = [2, 32], strides = [1, 1]} : vector<2x96xf32> to vector<2x32xf32>
    %226 = arith.mulf %224, %187 : vector<2x32xf32>
    %227 = arith.mulf %223, %222 : vector<2x32xf32>
    %228 = arith.addf %226, %227 : vector<2x32xf32>
    %229 = math.tanh %228 : vector<2x32xf32>
    %230 = arith.mulf %225, %229 : vector<2x32xf32>
    %cst_55 = arith.constant dense<0.000000e+00> : vector<2x128xf32>
    %231 = tpu.matmul %230, %1, %cst_55 {dimension_numbers = #tpu.dot_dimension_numbers<[1], [0], [0], [1], [0, 0, 1, 1], [], []>} : vector<2x32xf32>, vector<32x128xf32>, vector<2x128xf32> -> vector<2x128xf32>
    %232 = vector.broadcast %2 : vector<1x128xf32> to vector<2x128xf32>
    %233 = arith.addf %231, %232 : vector<2x128xf32>
    %c6 = arith.constant 6 : index
    %c0_56 = arith.constant 0 : index
    %234 = vector.load %arg15[%c6, %c0_56] : memref<16x32xf32, #tpu.memory_space<vmem>>, vector<2x32xf32>
    tpu.vector_store %arg15[%c6, %c0_56], %230 {strides = array<i32>} : memref<16x32xf32, #tpu.memory_space<vmem>>, vector<2x32xf32>,
    %235 = vector.extract_strided_slice %21 {offsets = [8, 0], sizes = [2, 128], strides = [1, 1]} : vector<16x128xf32> to vector<2x128xf32>
    %236 = arith.addf %235, %212 : vector<2x128xf32>
    %237 = vector.extract_strided_slice %236 {offsets = [0, 0], sizes = [2, 96], strides = [1, 1]} : vector<2x128xf32> to vector<2x96xf32>
    %238 = arith.negf %237 : vector<2x96xf32>
    %239 = math.exp %238 : vector<2x96xf32>
    %cst_57 = arith.constant 1.000000e+00 : f32
    %240 = vector.broadcast %cst_57 : f32 to vector<2x96xf32>
    %241 = arith.addf %240, %239 : vector<2x96xf32>
    %242 = arith.divf %240, %241 : vector<2x96xf32>
    %243 = vector.extract_strided_slice %236 {offsets = [0, 96], sizes = [2, 32], strides = [1, 1]} : vector<2x128xf32> to vector<2x32xf32>
    %244 = math.tanh %243 : vector<2x32xf32>
    %245 = vector.extract_strided_slice %242 {offsets = [0, 0], sizes = [2, 32], strides = [1, 1]} : vector<2x96xf32> to vector<2x32xf32>
    %246 = vector.extract_strided_slice %242 {offsets = [0, 32], sizes = [2, 32], strides = [1, 1]} : vector<2x96xf32> to vector<2x32xf32>
    %247 = vector.extract_strided_slice %242 {offsets = [0, 64], sizes = [2, 32], strides = [1, 1]} : vector<2x96xf32> to vector<2x32xf32>
    %248 = arith.mulf %246, %209 : vector<2x32xf32>
    %249 = arith.mulf %245, %244 : vector<2x32xf32>
    %250 = arith.addf %248, %249 : vector<2x32xf32>
    %251 = math.tanh %250 : vector<2x32xf32>
    %252 = arith.mulf %247, %251 : vector<2x32xf32>
    %cst_58 = arith.constant dense<0.000000e+00> : vector<2x128xf32>
    %253 = tpu.matmul %252, %26, %cst_58 {dimension_numbers = #tpu.dot_dimension_numbers<[1], [0], [0], [1], [0, 0, 1, 1], [], []>} : vector<2x32xf32>, vector<32x128xf32>, vector<2x128xf32> -> vector<2x128xf32>
    %cst_59 = arith.constant dense<0.000000e+00> : vector<2x128xf32>
    %254 = tpu.matmul %252, %0, %cst_59 {dimension_numbers = #tpu.dot_dimension_numbers<[1], [0], [0], [1], [0, 0, 1, 1], [], []>} : vector<2x32xf32>, vector<32x128xf32>, vector<2x128xf32> -> vector<2x128xf32>
    %255 = arith.addf %254, %233 : vector<2x128xf32>
    %256 = vector.extract_strided_slice %255 {offsets = [0, 0], sizes = [2, 96], strides = [1, 1]} : vector<2x128xf32> to vector<2x96xf32>
    %257 = arith.negf %256 : vector<2x96xf32>
    %258 = math.exp %257 : vector<2x96xf32>
    %cst_60 = arith.constant 1.000000e+00 : f32
    %259 = vector.broadcast %cst_60 : f32 to vector<2x96xf32>
    %260 = arith.addf %259, %258 : vector<2x96xf32>
    %261 = arith.divf %259, %260 : vector<2x96xf32>
    %262 = vector.extract_strided_slice %255 {offsets = [0, 96], sizes = [2, 32], strides = [1, 1]} : vector<2x128xf32> to vector<2x32xf32>
    %263 = math.tanh %262 : vector<2x32xf32>
    %264 = vector.extract_strided_slice %261 {offsets = [0, 0], sizes = [2, 32], strides = [1, 1]} : vector<2x96xf32> to vector<2x32xf32>
    %265 = vector.extract_strided_slice %261 {offsets = [0, 32], sizes = [2, 32], strides = [1, 1]} : vector<2x96xf32> to vector<2x32xf32>
    %266 = vector.extract_strided_slice %261 {offsets = [0, 64], sizes = [2, 32], strides = [1, 1]} : vector<2x96xf32> to vector<2x32xf32>
    %267 = arith.mulf %265, %228 : vector<2x32xf32>
    %268 = arith.mulf %264, %263 : vector<2x32xf32>
    %269 = arith.addf %267, %268 : vector<2x32xf32>
    %270 = math.tanh %269 : vector<2x32xf32>
    %271 = arith.mulf %266, %270 : vector<2x32xf32>
    %cst_61 = arith.constant dense<0.000000e+00> : vector<2x128xf32>
    %272 = tpu.matmul %271, %1, %cst_61 {dimension_numbers = #tpu.dot_dimension_numbers<[1], [0], [0], [1], [0, 0, 1, 1], [], []>} : vector<2x32xf32>, vector<32x128xf32>, vector<2x128xf32> -> vector<2x128xf32>
    %273 = vector.broadcast %2 : vector<1x128xf32> to vector<2x128xf32>
    %274 = arith.addf %272, %273 : vector<2x128xf32>
    %c8 = arith.constant 8 : index
    %c0_62 = arith.constant 0 : index
    %275 = vector.load %arg15[%c8, %c0_62] : memref<16x32xf32, #tpu.memory_space<vmem>>, vector<2x32xf32>
    tpu.vector_store %arg15[%c8, %c0_62], %271 {strides = array<i32>} : memref<16x32xf32, #tpu.memory_space<vmem>>, vector<2x32xf32>,
    %276 = vector.extract_strided_slice %21 {offsets = [10, 0], sizes = [2, 128], strides = [1, 1]} : vector<16x128xf32> to vector<2x128xf32>
    %277 = arith.addf %276, %253 : vector<2x128xf32>
    %278 = vector.extract_strided_slice %277 {offsets = [0, 0], sizes = [2, 96], strides = [1, 1]} : vector<2x128xf32> to vector<2x96xf32>
    %279 = arith.negf %278 : vector<2x96xf32>
    %280 = math.exp %279 : vector<2x96xf32>
    %cst_63 = arith.constant 1.000000e+00 : f32
    %281 = vector.broadcast %cst_63 : f32 to vector<2x96xf32>
    %282 = arith.addf %281, %280 : vector<2x96xf32>
    %283 = arith.divf %281, %282 : vector<2x96xf32>
    %284 = vector.extract_strided_slice %277 {offsets = [0, 96], sizes = [2, 32], strides = [1, 1]} : vector<2x128xf32> to vector<2x32xf32>
    %285 = math.tanh %284 : vector<2x32xf32>
    %286 = vector.extract_strided_slice %283 {offsets = [0, 0], sizes = [2, 32], strides = [1, 1]} : vector<2x96xf32> to vector<2x32xf32>
    %287 = vector.extract_strided_slice %283 {offsets = [0, 32], sizes = [2, 32], strides = [1, 1]} : vector<2x96xf32> to vector<2x32xf32>
    %288 = vector.extract_strided_slice %283 {offsets = [0, 64], sizes = [2, 32], strides = [1, 1]} : vector<2x96xf32> to vector<2x32xf32>
    %289 = arith.mulf %287, %250 : vector<2x32xf32>
    %290 = arith.mulf %286, %285 : vector<2x32xf32>
    %291 = arith.addf %289, %290 : vector<2x32xf32>
    %292 = math.tanh %291 : vector<2x32xf32>
    %293 = arith.mulf %288, %292 : vector<2x32xf32>
    %cst_64 = arith.constant dense<0.000000e+00> : vector<2x128xf32>
    %294 = tpu.matmul %293, %26, %cst_64 {dimension_numbers = #tpu.dot_dimension_numbers<[1], [0], [0], [1], [0, 0, 1, 1], [], []>} : vector<2x32xf32>, vector<32x128xf32>, vector<2x128xf32> -> vector<2x128xf32>
    %cst_65 = arith.constant dense<0.000000e+00> : vector<2x128xf32>
    %295 = tpu.matmul %293, %0, %cst_65 {dimension_numbers = #tpu.dot_dimension_numbers<[1], [0], [0], [1], [0, 0, 1, 1], [], []>} : vector<2x32xf32>, vector<32x128xf32>, vector<2x128xf32> -> vector<2x128xf32>
    %296 = arith.addf %295, %274 : vector<2x128xf32>
    %297 = vector.extract_strided_slice %296 {offsets = [0, 0], sizes = [2, 96], strides = [1, 1]} : vector<2x128xf32> to vector<2x96xf32>
    %298 = arith.negf %297 : vector<2x96xf32>
    %299 = math.exp %298 : vector<2x96xf32>
    %cst_66 = arith.constant 1.000000e+00 : f32
    %300 = vector.broadcast %cst_66 : f32 to vector<2x96xf32>
    %301 = arith.addf %300, %299 : vector<2x96xf32>
    %302 = arith.divf %300, %301 : vector<2x96xf32>
    %303 = vector.extract_strided_slice %296 {offsets = [0, 96], sizes = [2, 32], strides = [1, 1]} : vector<2x128xf32> to vector<2x32xf32>
    %304 = math.tanh %303 : vector<2x32xf32>
    %305 = vector.extract_strided_slice %302 {offsets = [0, 0], sizes = [2, 32], strides = [1, 1]} : vector<2x96xf32> to vector<2x32xf32>
    %306 = vector.extract_strided_slice %302 {offsets = [0, 32], sizes = [2, 32], strides = [1, 1]} : vector<2x96xf32> to vector<2x32xf32>
    %307 = vector.extract_strided_slice %302 {offsets = [0, 64], sizes = [2, 32], strides = [1, 1]} : vector<2x96xf32> to vector<2x32xf32>
    %308 = arith.mulf %306, %269 : vector<2x32xf32>
    %309 = arith.mulf %305, %304 : vector<2x32xf32>
    %310 = arith.addf %308, %309 : vector<2x32xf32>
    %311 = math.tanh %310 : vector<2x32xf32>
    %312 = arith.mulf %307, %311 : vector<2x32xf32>
    %cst_67 = arith.constant dense<0.000000e+00> : vector<2x128xf32>
    %313 = tpu.matmul %312, %1, %cst_67 {dimension_numbers = #tpu.dot_dimension_numbers<[1], [0], [0], [1], [0, 0, 1, 1], [], []>} : vector<2x32xf32>, vector<32x128xf32>, vector<2x128xf32> -> vector<2x128xf32>
    %314 = vector.broadcast %2 : vector<1x128xf32> to vector<2x128xf32>
    %315 = arith.addf %313, %314 : vector<2x128xf32>
    %c10 = arith.constant 10 : index
    %c0_68 = arith.constant 0 : index
    %316 = vector.load %arg15[%c10, %c0_68] : memref<16x32xf32, #tpu.memory_space<vmem>>, vector<2x32xf32>
    tpu.vector_store %arg15[%c10, %c0_68], %312 {strides = array<i32>} : memref<16x32xf32, #tpu.memory_space<vmem>>, vector<2x32xf32>,
    %317 = vector.extract_strided_slice %21 {offsets = [12, 0], sizes = [2, 128], strides = [1, 1]} : vector<16x128xf32> to vector<2x128xf32>
    %318 = arith.addf %317, %294 : vector<2x128xf32>
    %319 = vector.extract_strided_slice %318 {offsets = [0, 0], sizes = [2, 96], strides = [1, 1]} : vector<2x128xf32> to vector<2x96xf32>
    %320 = arith.negf %319 : vector<2x96xf32>
    %321 = math.exp %320 : vector<2x96xf32>
    %cst_69 = arith.constant 1.000000e+00 : f32
    %322 = vector.broadcast %cst_69 : f32 to vector<2x96xf32>
    %323 = arith.addf %322, %321 : vector<2x96xf32>
    %324 = arith.divf %322, %323 : vector<2x96xf32>
    %325 = vector.extract_strided_slice %318 {offsets = [0, 96], sizes = [2, 32], strides = [1, 1]} : vector<2x128xf32> to vector<2x32xf32>
    %326 = math.tanh %325 : vector<2x32xf32>
    %327 = vector.extract_strided_slice %324 {offsets = [0, 0], sizes = [2, 32], strides = [1, 1]} : vector<2x96xf32> to vector<2x32xf32>
    %328 = vector.extract_strided_slice %324 {offsets = [0, 32], sizes = [2, 32], strides = [1, 1]} : vector<2x96xf32> to vector<2x32xf32>
    %329 = vector.extract_strided_slice %324 {offsets = [0, 64], sizes = [2, 32], strides = [1, 1]} : vector<2x96xf32> to vector<2x32xf32>
    %330 = arith.mulf %328, %291 : vector<2x32xf32>
    %331 = arith.mulf %327, %326 : vector<2x32xf32>
    %332 = arith.addf %330, %331 : vector<2x32xf32>
    %333 = math.tanh %332 : vector<2x32xf32>
    %334 = arith.mulf %329, %333 : vector<2x32xf32>
    %cst_70 = arith.constant dense<0.000000e+00> : vector<2x128xf32>
    %335 = tpu.matmul %334, %26, %cst_70 {dimension_numbers = #tpu.dot_dimension_numbers<[1], [0], [0], [1], [0, 0, 1, 1], [], []>} : vector<2x32xf32>, vector<32x128xf32>, vector<2x128xf32> -> vector<2x128xf32>
    %cst_71 = arith.constant dense<0.000000e+00> : vector<2x128xf32>
    %336 = tpu.matmul %334, %0, %cst_71 {dimension_numbers = #tpu.dot_dimension_numbers<[1], [0], [0], [1], [0, 0, 1, 1], [], []>} : vector<2x32xf32>, vector<32x128xf32>, vector<2x128xf32> -> vector<2x128xf32>
    %337 = arith.addf %336, %315 : vector<2x128xf32>
    %338 = vector.extract_strided_slice %337 {offsets = [0, 0], sizes = [2, 96], strides = [1, 1]} : vector<2x128xf32> to vector<2x96xf32>
    %339 = arith.negf %338 : vector<2x96xf32>
    %340 = math.exp %339 : vector<2x96xf32>
    %cst_72 = arith.constant 1.000000e+00 : f32
    %341 = vector.broadcast %cst_72 : f32 to vector<2x96xf32>
    %342 = arith.addf %341, %340 : vector<2x96xf32>
    %343 = arith.divf %341, %342 : vector<2x96xf32>
    %344 = vector.extract_strided_slice %337 {offsets = [0, 96], sizes = [2, 32], strides = [1, 1]} : vector<2x128xf32> to vector<2x32xf32>
    %345 = math.tanh %344 : vector<2x32xf32>
    %346 = vector.extract_strided_slice %343 {offsets = [0, 0], sizes = [2, 32], strides = [1, 1]} : vector<2x96xf32> to vector<2x32xf32>
    %347 = vector.extract_strided_slice %343 {offsets = [0, 32], sizes = [2, 32], strides = [1, 1]} : vector<2x96xf32> to vector<2x32xf32>
    %348 = vector.extract_strided_slice %343 {offsets = [0, 64], sizes = [2, 32], strides = [1, 1]} : vector<2x96xf32> to vector<2x32xf32>
    %349 = arith.mulf %347, %310 : vector<2x32xf32>
    %350 = arith.mulf %346, %345 : vector<2x32xf32>
    %351 = arith.addf %349, %350 : vector<2x32xf32>
    %352 = math.tanh %351 : vector<2x32xf32>
    %353 = arith.mulf %348, %352 : vector<2x32xf32>
    %cst_73 = arith.constant dense<0.000000e+00> : vector<2x128xf32>
    %354 = tpu.matmul %353, %1, %cst_73 {dimension_numbers = #tpu.dot_dimension_numbers<[1], [0], [0], [1], [0, 0, 1, 1], [], []>} : vector<2x32xf32>, vector<32x128xf32>, vector<2x128xf32> -> vector<2x128xf32>
    %355 = vector.broadcast %2 : vector<1x128xf32> to vector<2x128xf32>
    %356 = arith.addf %354, %355 : vector<2x128xf32>
    %c12 = arith.constant 12 : index
    %c0_74 = arith.constant 0 : index
    %357 = vector.load %arg15[%c12, %c0_74] : memref<16x32xf32, #tpu.memory_space<vmem>>, vector<2x32xf32>
    tpu.vector_store %arg15[%c12, %c0_74], %353 {strides = array<i32>} : memref<16x32xf32, #tpu.memory_space<vmem>>, vector<2x32xf32>,
    %358 = vector.extract_strided_slice %21 {offsets = [14, 0], sizes = [2, 128], strides = [1, 1]} : vector<16x128xf32> to vector<2x128xf32>
    %359 = arith.addf %358, %335 : vector<2x128xf32>
    %360 = vector.extract_strided_slice %359 {offsets = [0, 0], sizes = [2, 96], strides = [1, 1]} : vector<2x128xf32> to vector<2x96xf32>
    %361 = arith.negf %360 : vector<2x96xf32>
    %362 = math.exp %361 : vector<2x96xf32>
    %cst_75 = arith.constant 1.000000e+00 : f32
    %363 = vector.broadcast %cst_75 : f32 to vector<2x96xf32>
    %364 = arith.addf %363, %362 : vector<2x96xf32>
    %365 = arith.divf %363, %364 : vector<2x96xf32>
    %366 = vector.extract_strided_slice %359 {offsets = [0, 96], sizes = [2, 32], strides = [1, 1]} : vector<2x128xf32> to vector<2x32xf32>
    %367 = math.tanh %366 : vector<2x32xf32>
    %368 = vector.extract_strided_slice %365 {offsets = [0, 0], sizes = [2, 32], strides = [1, 1]} : vector<2x96xf32> to vector<2x32xf32>
    %369 = vector.extract_strided_slice %365 {offsets = [0, 32], sizes = [2, 32], strides = [1, 1]} : vector<2x96xf32> to vector<2x32xf32>
    %370 = vector.extract_strided_slice %365 {offsets = [0, 64], sizes = [2, 32], strides = [1, 1]} : vector<2x96xf32> to vector<2x32xf32>
    %371 = arith.mulf %369, %332 : vector<2x32xf32>
    %372 = arith.mulf %368, %367 : vector<2x32xf32>
    %373 = arith.addf %371, %372 : vector<2x32xf32>
    %374 = math.tanh %373 : vector<2x32xf32>
    %375 = arith.mulf %370, %374 : vector<2x32xf32>
    %cst_76 = arith.constant dense<0.000000e+00> : vector<2x128xf32>
    %376 = tpu.matmul %375, %0, %cst_76 {dimension_numbers = #tpu.dot_dimension_numbers<[1], [0], [0], [1], [0, 0, 1, 1], [], []>} : vector<2x32xf32>, vector<32x128xf32>, vector<2x128xf32> -> vector<2x128xf32>
    %377 = arith.addf %376, %356 : vector<2x128xf32>
    %378 = vector.extract_strided_slice %377 {offsets = [0, 0], sizes = [2, 96], strides = [1, 1]} : vector<2x128xf32> to vector<2x96xf32>
    %379 = arith.negf %378 : vector<2x96xf32>
    %380 = math.exp %379 : vector<2x96xf32>
    %cst_77 = arith.constant 1.000000e+00 : f32
    %381 = vector.broadcast %cst_77 : f32 to vector<2x96xf32>
    %382 = arith.addf %381, %380 : vector<2x96xf32>
    %383 = arith.divf %381, %382 : vector<2x96xf32>
    %384 = vector.extract_strided_slice %377 {offsets = [0, 96], sizes = [2, 32], strides = [1, 1]} : vector<2x128xf32> to vector<2x32xf32>
    %385 = math.tanh %384 : vector<2x32xf32>
    %386 = vector.extract_strided_slice %383 {offsets = [0, 0], sizes = [2, 32], strides = [1, 1]} : vector<2x96xf32> to vector<2x32xf32>
    %387 = vector.extract_strided_slice %383 {offsets = [0, 32], sizes = [2, 32], strides = [1, 1]} : vector<2x96xf32> to vector<2x32xf32>
    %388 = vector.extract_strided_slice %383 {offsets = [0, 64], sizes = [2, 32], strides = [1, 1]} : vector<2x96xf32> to vector<2x32xf32>
    %389 = arith.mulf %387, %351 : vector<2x32xf32>
    %390 = arith.mulf %386, %385 : vector<2x32xf32>
    %391 = arith.addf %389, %390 : vector<2x32xf32>
    %392 = math.tanh %391 : vector<2x32xf32>
    %393 = arith.mulf %388, %392 : vector<2x32xf32>
    %c14 = arith.constant 14 : index
    %c0_78 = arith.constant 0 : index
    %394 = vector.load %arg15[%c14, %c0_78] : memref<16x32xf32, #tpu.memory_space<vmem>>, vector<2x32xf32>
    tpu.vector_store %arg15[%c14, %c0_78], %393 {strides = array<i32>} : memref<16x32xf32, #tpu.memory_space<vmem>>, vector<2x32xf32>,
    %c0_79 = arith.constant 0 : index
    %c0_80 = arith.constant 0 : index
    %395 = vector.load %arg15[%c0_79, %c0_80] : memref<16x32xf32, #tpu.memory_space<vmem>>, vector<16x32xf32>
    %c0_81 = arith.constant 0 : index
    %c0_82 = arith.constant 0 : index
    %396 = vector.load %arg2[%c0_81, %c0_82] : memref<16x1xf32, #tpu.memory_space<vmem>>, vector<16x1xf32>
    %397 = vector.broadcast %396 : vector<16x1xf32> to vector<16x32xf32>
    %398 = arith.mulf %395, %397 : vector<16x32xf32>
    %c0_83 = arith.constant 0 : index
    %c0_84 = arith.constant 0 : index
    %399 = vector.load %arg12[%c0_83, %c0_84] : memref<32x128xf32, #tpu.memory_space<vmem>>, vector<32x128xf32>
    %cst_85 = arith.constant dense<0.000000e+00> : vector<16x128xf32>
    %400 = tpu.matmul %398, %399, %cst_85 {dimension_numbers = #tpu.dot_dimension_numbers<[1], [0], [0], [1], [0, 0, 1, 1], [], []>} : vector<16x32xf32>, vector<32x128xf32>, vector<16x128xf32> -> vector<16x128xf32>
    %c0_86 = arith.constant 0 : index
    %c0_87 = arith.constant 0 : index
    %401 = vector.load %arg13[%c0_86, %c0_87] : memref<1x128xf32, #tpu.memory_space<vmem>>, vector<1x128xf32>
    %402 = vector.broadcast %401 : vector<1x128xf32> to vector<16x128xf32>
    %403 = arith.addf %400, %402 : vector<16x128xf32>
    %c0_88 = arith.constant 0 : index
    %c0_89 = arith.constant 0 : index
    %404 = vector.load %arg14[%c0_88, %c0_89] : memref<16x128xf32, #tpu.memory_space<vmem>>, vector<16x128xf32>
    tpu.vector_store %arg14[%c0_88, %c0_89], %403 {strides = array<i32>} : memref<16x128xf32, #tpu.memory_space<vmem>>, vector<16x128xf32>,
    return
  }
}

</mosaic_0001>

<llo_original>
// kernel: language_model_forward.1
$region0: #{language_model_forward.1}
  #allocation0 [shape = 'u32[]', space=smem, size = 0x4, offset = 0x4, fixed_abs, tag = 'smem constant byte address 0x4 - core index']
  #allocation1 [shape = 'u32[144,128]{1,0:T(1,128)}', space=vmem, size = 0x12000, scoped, tag = 'internal scratch']
  #allocation2 [shape = 'f32[16,32]{1,0:T(8,128)}', space=vmem, size = 0x2000, scoped, tag = 'scratch operand']
  %s0 = inlined_call_operand.vmem [shape: f32[2,8], index: 0, kind: input, shape index: {}]
  %s1 = inlined_call_operand.vmem [shape: s32[16,1], index: 1, kind: input, shape index: {}]
  %s2 = inlined_call_operand.vmem [shape: f32[16,1], index: 2, kind: input, shape index: {}]
  %s3 = inlined_call_operand.vmem [shape: f32[64,128], index: 3, kind: input, shape index: {}]
  %s4 = inlined_call_operand.vmem [shape: f32[8,16], index: 4, kind: input, shape index: {}]
  %s5 = inlined_call_operand.vmem [shape: f32[1,16], index: 5, kind: input, shape index: {}]
  %s6 = inlined_call_operand.vmem [shape: f32[16,128], index: 6, kind: input, shape index: {}]
  %s7 = inlined_call_operand.vmem [shape: f32[32,128], index: 7, kind: input, shape index: {}]
  %s8 = inlined_call_operand.vmem [shape: f32[1,128], index: 8, kind: input, shape index: {}]
  %s9 = inlined_call_operand.vmem [shape: f32[32,128], index: 9, kind: input, shape index: {}]
  %s10 = inlined_call_operand.vmem [shape: f32[32,128], index: 10, kind: input, shape index: {}]
  %s11 = inlined_call_operand.vmem [shape: f32[1,128], index: 11, kind: input, shape index: {}]
  %s12 = inlined_call_operand.vmem [shape: f32[32,128], index: 12, kind: input, shape index: {}]
  %s13 = inlined_call_operand.vmem [shape: f32[1,128], index: 13, kind: input, shape index: {}]
  %s14 = inlined_call_operand.vmem [shape: f32[16,128], index: 14, kind: output, shape index: {}]
  %s15 = sld [smem:[#allocation0]]
  $region66: #{language_model_forward.1} parent=0
    _
  %s17 = ssub.s32 1, %s15
  %s18 = scalar_select 0, %s17, %s15
  // Predicated region
  $region2: #{language_model_forward.1} parent=0 // pred_check
    _
  $region3: #{language_model_forward.1} parent=0 // pred_check_branch
    %20 = sbr.rel (0) target = $region5
  $region4: #{language_model_forward.1} parent=0 // pred_region
    _
  $region5: #{language_model_forward.1} parent=0 // pred_fallthru
    _
  // Predicated region
  $region6: #{language_model_forward.1} parent=0 // pred_check
    _
  $region7: #{language_model_forward.1} parent=0 // pred_check_branch
    %22 = sbr.rel (0) target = $region9
  $region8: #{language_model_forward.1} parent=0 // pred_region
    _
  $region9: #{language_model_forward.1} parent=0 // pred_fallthru
    _
  // Predicated region
  $region10: #{language_model_forward.1} parent=0 // pred_check
    _
  $region11: #{language_model_forward.1} parent=0 // pred_check_branch
    %24 = sbr.rel (0) target = $region13
  $region12: #{language_model_forward.1} parent=0 // pred_region
    _
  $region13: #{language_model_forward.1} parent=0 // pred_fallthru
    _
  // Predicated region
  $region14: #{language_model_forward.1} parent=0 // pred_check
    _
  $region15: #{language_model_forward.1} parent=0 // pred_check_branch
    %26 = sbr.rel (0) target = $region17
  $region16: #{language_model_forward.1} parent=0 // pred_region
    _
  $region17: #{language_model_forward.1} parent=0 // pred_fallthru
    _
  // Predicated region
  $region18: #{language_model_forward.1} parent=0 // pred_check
    _
  $region19: #{language_model_forward.1} parent=0 // pred_check_branch
    %28 = sbr.rel (0) target = $region21
  $region20: #{language_model_forward.1} parent=0 // pred_region
    _
  $region21: #{language_model_forward.1} parent=0 // pred_fallthru
    _
  // Predicated region
  $region22: #{language_model_forward.1} parent=0 // pred_check
    _
  $region23: #{language_model_forward.1} parent=0 // pred_check_branch
    %30 = sbr.rel (0) target = $region25
  $region24: #{language_model_forward.1} parent=0 // pred_region
    _
  $region25: #{language_model_forward.1} parent=0 // pred_fallthru
    _
  // Predicated region
  $region26: #{language_model_forward.1} parent=0 // pred_check
    _
  $region27: #{language_model_forward.1} parent=0 // pred_check_branch
    %32 = sbr.rel (0) target = $region29
  $region28: #{language_model_forward.1} parent=0 // pred_region
    _
  $region29: #{language_model_forward.1} parent=0 // pred_fallthru
    _
  // Predicated region
  $region30: #{language_model_forward.1} parent=0 // pred_check
    _
  $region31: #{language_model_forward.1} parent=0 // pred_check_branch
    %34 = sbr.rel (0) target = $region33
  $region32: #{language_model_forward.1} parent=0 // pred_region
    _
  $region33: #{language_model_forward.1} parent=0 // pred_fallthru
    _
  // Predicated region
  $region34: #{language_model_forward.1} parent=0 // pred_check
    _
  $region35: #{language_model_forward.1} parent=0 // pred_check_branch
    %36 = sbr.rel (0) target = $region37
  $region36: #{language_model_forward.1} parent=0 // pred_region
    _
  $region37: #{language_model_forward.1} parent=0 // pred_fallthru
    _
  // Predicated region
  $region38: #{language_model_forward.1} parent=0 // pred_check
    _
  $region39: #{language_model_forward.1} parent=0 // pred_check_branch
    %38 = sbr.rel (0) target = $region41
  $region40: #{language_model_forward.1} parent=0 // pred_region
    _
  $region41: #{language_model_forward.1} parent=0 // pred_fallthru
    _
  // Predicated region
  $region42: #{language_model_forward.1} parent=0 // pred_check
    _
  $region43: #{language_model_forward.1} parent=0 // pred_check_branch
    %40 = sbr.rel (0) target = $region45
  $region44: #{language_model_forward.1} parent=0 // pred_region
    _
  $region45: #{language_model_forward.1} parent=0 // pred_fallthru
    _
  // Predicated region
  $region46: #{language_model_forward.1} parent=0 // pred_check
    _
  $region47: #{language_model_forward.1} parent=0 // pred_check_branch
    %42 = sbr.rel (0) target = $region49
  $region48: #{language_model_forward.1} parent=0 // pred_region
    _
  $region49: #{language_model_forward.1} parent=0 // pred_fallthru
    _
  // Predicated region
  $region50: #{language_model_forward.1} parent=0 // pred_check
    _
  $region51: #{language_model_forward.1} parent=0 // pred_check_branch
    %44 = sbr.rel (0) target = $region53
  $region52: #{language_model_forward.1} parent=0 // pred_region
    _
  $region53: #{language_model_forward.1} parent=0 // pred_fallthru
    _
  // Predicated region
  $region54: #{language_model_forward.1} parent=0 // pred_check
    _
  $region55: #{language_model_forward.1} parent=0 // pred_check_branch
    %46 = sbr.rel (0) target = $region57
  $region56: #{language_model_forward.1} parent=0 // pred_region
    _
  $region57: #{language_model_forward.1} parent=0 // pred_fallthru
    _
  %v47 = vld [vmem:[%s9] sm:$0xff]
  %v48 = vld [vmem:[%s9 + $0x8] sm:$0xff]
  %v49 = vld [vmem:[%s9 + $0x10] sm:$0xff]
  %v50 = vld [vmem:[%s9 + $0x18] sm:$0xff]
  %v51 = vld [vmem:[%s10] sm:$0xff]
  %v52 = vld [vmem:[%s10 + $0x8] sm:$0xff]
  %v53 = vld [vmem:[%s10 + $0x10] sm:$0xff]
  %v54 = vld [vmem:[%s10 + $0x18] sm:$0xff]
  %v55 = vld [vmem:[%s11] sm:$0x1]
  %v56 = vld [vmem:[%s0] sm:$0x3]
  %v57 = vld [vmem:[%s4] sm:$0xff]
  %v58 = vld [vmem:[%s5] sm:$0x1]
  %v60 = vlaneseq
  %v61 = vshrl.u32 %v60, 7
  %v62 = vsub.s32 0, %v61
  %v63 = vrot.slane %v58, %v62
  %vm65 = vcmask 64512
  %v67 = vsel %vm65, %v56, 0
  %69 = vmatprep.subr.mxu0 0.0
  %70 = vmatpush1.msra.mxu0 %v57
  %71 = vmatprep.subr.mxu0 0.0
  %72 = vmatpush1.msra.mxu0 0.0
  %73 = vmatprep.subr.mxu0 0.0
  %74 = vmatpush1.msra.mxu0 0.0
  %75 = vmatprep.subr.mxu0 0.0
  %76 = vmatpush1.msra.mxu0 0.0
  %77 = vmatprep.subr.mxu0 0.0
  %78 = vmatpush1.msra.mxu0 0.0
  %79 = vmatprep.subr.mxu0 0.0
  %80 = vmatpush1.msra.mxu0 0.0
  %81 = vmatprep.subr.mxu0 0.0
  %82 = vmatpush1.msra.mxu0 0.0
  %83 = vmatprep.subr.mxu0 0.0
  %84 = vmatpush1.msra.mxu0 0.0
  %85 = vmatprep.subr.mxu0 0.0
  %86 = vmatpush1.msra.mxu0 0.0
  %87 = vmatprep.subr.mxu0 0.0
  %88 = vmatpush1.msra.mxu0 0.0
  %89 = vmatprep.subr.mxu0 0.0
  %90 = vmatpush1.msra.mxu0 0.0
  %91 = vmatprep.subr.mxu0 0.0
  %92 = vmatpush1.msra.mxu0 0.0
  %93 = vmatprep.subr.mxu0 0.0
  %94 = vmatpush1.msra.mxu0 0.0
  %95 = vmatprep.subr.mxu0 0.0
  %96 = vmatpush1.msra.mxu0 0.0
  %97 = vmatprep.subr.mxu0 0.0
  %98 = vmatpush1.msra.mxu0 0.0
  %99 = vmatprep.subr.mxu0 0.0
  %100 = vmatpush1.msra.mxu0 0.0
  %101 = vmatprep.subr.mxu0 0.0
  %102 = vmatpush1.msra.mxu0 0.0
  %103 = vmatprep.subr.mxu0 0.0
  %104 = vmatpush1.msra.mxu0 0.0
  %105 = vmatprep.subr.mxu0 0.0
  %106 = vmatpush1.msra.mxu0 0.0
  %107 = vmatprep.subr.mxu0 0.0
  %108 = vmatpush1.msra.mxu0 0.0
  %109 = vmatprep.subr.mxu0 0.0
  %110 = vmatpush1.msra.mxu0 0.0
  %111 = vmatprep.subr.mxu0 0.0
  %112 = vmatpush1.msra.mxu0 0.0
  %113 = vmatprep.subr.mxu0 0.0
  %114 = vmatpush1.msra.mxu0 0.0
  %115 = vmatprep.subr.mxu0 0.0
  %116 = vmatpush1.msra.mxu0 0.0
  %117 = vmatprep.subr.mxu0 0.0
  %118 = vmatpush1.msra.mxu0 0.0
  %119 = vmatprep.subr.mxu0 0.0
  %120 = vmatpush1.msra.mxu0 0.0
  %121 = vmatprep.subr.mxu0 0.0
  %122 = vmatpush1.msra.mxu0 0.0
  %123 = vmatprep.subr.mxu0 0.0
  %124 = vmatpush1.msra.mxu0 0.0
  %125 = vmatprep.subr.mxu0 0.0
  %126 = vmatpush1.msra.mxu0 0.0
  %127 = vmatprep.subr.mxu0 0.0
  %128 = vmatpush1.msra.mxu0 0.0
  %129 = vmatprep.subr.mxu0 0.0
  %130 = vmatpush1.msra.mxu0 0.0
  %131 = vmatprep.subr.mxu0 0.0
  %132 = vmatpush1.msra.mxu0 0.0
  %133 = vmatprep.mubr.f32.mxu0 0.0
  %134 = vmatmul.mubr.f32.gmra.mrb[0].mxu0 %v67
  %v135 = vpop.f32.mrb[0].mxu0
  %v136 = vadd.f32 %v63, %v135
  %v137 = vpop.f32.mrb[0].mxu0
  %138 = vdwg.mxu0
  %v139 = vmax.f32 %v136, 0.0
  %v140 = vld [vmem:[%s1] sm:$0xff]
  %v141 = vld [vmem:[%s1 + $0x8] sm:$0xff]
  %v142 = vlaneseq
  %v143 = vand.u32 %v142, 127
  %144 = vset.pattern.permute.xlu0 0
  %145 = vperm.xlu0 %144, %v140
  %v146 = vpop.permute.xlu0 %145
  %147 = vset.pattern.permute.xlu0 0
  %148 = vperm.xlu0 %147, %v141
  %v149 = vpop.permute.xlu0 %148
  %vm150 = vcmp.eq.s32.totalorder %v146, %v143
  %vm151 = vcmp.eq.s32.totalorder %v149, %v143
  %v152 = vsel %vm150, 1, 0
  %v153 = vsel %vm151, 1, 0
  %v154 = vcvt.s32.f32 %v152
  %v155 = vcvt.s32.f32 %v153
  %v156 = vld [vmem:[%s8] sm:$0x1]
  %v157 = vld [vmem:[%s3] sm:$0xff]
  %v158 = vld [vmem:[%s3 + $0x8] sm:$0xff]
  %v159 = vld [vmem:[%s3 + $0x10] sm:$0xff]
  %v160 = vld [vmem:[%s3 + $0x18] sm:$0xff]
  %v161 = vld [vmem:[%s3 + $0x20] sm:$0xff]
  %v162 = vld [vmem:[%s3 + $0x28] sm:$0xff]
  %v163 = vld [vmem:[%s3 + $0x30] sm:$0xff]
  %v164 = vld [vmem:[%s3 + $0x38] sm:$0xff]
  %v166 = vlaneseq
  %v167 = vshrl.u32 %v166, 7
  %v168 = vsub.s32 0, %v167
  %v169 = vrot.slane %v156, %v168
  %vm171 = vcmask 523264
  %v173 = vsel %vm171, %v154, 0
  %v176 = vsel %vm171, %v155, 0
  %178 = vmatprep.subr.mxu0 0.0
  %179 = vmatpush1.msra.mxu0 %v157
  %180 = vmatprep.subr.mxu0 0.0
  %181 = vmatpush1.msra.mxu0 %v158
  %182 = vmatprep.subr.mxu0 0.0
  %183 = vmatpush1.msra.mxu0 %v159
  %184 = vmatprep.subr.mxu0 0.0
  %185 = vmatpush1.msra.mxu0 %v160
  %186 = vmatprep.subr.mxu0 0.0
  %187 = vmatpush1.msra.mxu0 %v161
  %188 = vmatprep.subr.mxu0 0.0
  %189 = vmatpush1.msra.mxu0 %v162
  %190 = vmatprep.subr.mxu0 0.0
  %191 = vmatpush1.msra.mxu0 %v163
  %192 = vmatprep.subr.mxu0 0.0
  %193 = vmatpush1.msra.mxu0 %v164
  %194 = vmatprep.subr.mxu0 0.0
  %195 = vmatpush1.msra.mxu0 0.0
  %196 = vmatprep.subr.mxu0 0.0
  %197 = vmatpush1.msra.mxu0 0.0
  %198 = vmatprep.subr.mxu0 0.0
  %199 = vmatpush1.msra.mxu0 0.0
  %200 = vmatprep.subr.mxu0 0.0
  %201 = vmatpush1.msra.mxu0 0.0
  %202 = vmatprep.subr.mxu0 0.0
  %203 = vmatpush1.msra.mxu0 0.0
  %204 = vmatprep.subr.mxu0 0.0
  %205 = vmatpush1.msra.mxu0 0.0
  %206 = vmatprep.subr.mxu0 0.0
  %207 = vmatpush1.msra.mxu0 0.0
  %208 = vmatprep.subr.mxu0 0.0
  %209 = vmatpush1.msra.mxu0 0.0
  %210 = vmatprep.subr.mxu0 0.0
  %211 = vmatpush1.msra.mxu0 0.0
  %212 = vmatprep.subr.mxu0 0.0
  %213 = vmatpush1.msra.mxu0 0.0
  %214 = vmatprep.subr.mxu0 0.0
  %215 = vmatpush1.msra.mxu0 0.0
  %216 = vmatprep.subr.mxu0 0.0
  %217 = vmatpush1.msra.mxu0 0.0
  %218 = vmatprep.subr.mxu0 0.0
  %219 = vmatpush1.msra.mxu0 0.0
  %220 = vmatprep.subr.mxu0 0.0
  %221 = vmatpush1.msra.mxu0 0.0
  %222 = vmatprep.subr.mxu0 0.0
  %223 = vmatpush1.msra.mxu0 0.0
  %224 = vmatprep.subr.mxu0 0.0
  %225 = vmatpush1.msra.mxu0 0.0
  %226 = vmatprep.subr.mxu0 0.0
  %227 = vmatpush1.msra.mxu0 0.0
  %228 = vmatprep.subr.mxu0 0.0
  %229 = vmatpush1.msra.mxu0 0.0
  %230 = vmatprep.subr.mxu0 0.0
  %231 = vmatpush1.msra.mxu0 0.0
  %232 = vmatprep.subr.mxu0 0.0
  %233 = vmatpush1.msra.mxu0 0.0
  %234 = vmatprep.subr.mxu0 0.0
  %235 = vmatpush1.msra.mxu0 0.0
  %236 = vmatprep.subr.mxu0 0.0
  %237 = vmatpush1.msra.mxu0 0.0
  %238 = vmatprep.subr.mxu0 0.0
  %239 = vmatpush1.msra.mxu0 0.0
  %240 = vmatprep.subr.mxu0 0.0
  %241 = vmatpush1.msra.mxu0 0.0
  %242 = vmatprep.mubr.f32.mxu0 0.0
  %243 = vmatmul.mubr.f32.gmra.mrb[0].mxu0 %v173
  %v244 = vpop.f32.mrb[0].mxu0
  %v245 = vadd.f32 %v169, %v244
  %v246 = vpop.f32.mrb[0].mxu0
  %247 = vmatprep.mubr.f32.mxu0 0.0
  %248 = vmatmul.mubr.f32.gmra.mrb[0].mxu0 %v176
  %v249 = vpop.f32.mrb[0].mxu0
  %v250 = vadd.f32 %v169, %v249
  %v251 = vpop.f32.mrb[0].mxu0
  %252 = vdwg.mxu0
  %v253 = vld [vmem:[%s6] sm:$0xff]
  %v254 = vld [vmem:[%s6 + $0x8] sm:$0xff]
  %vm255 = vcmask 130048
  %v257 = vsel %vm255, %v139, 0
  %259 = vmatprep.subr.mxu0 0.0
  %260 = vmatpush1.msra.mxu0 %v253
  %261 = vmatprep.subr.mxu0 0.0
  %262 = vmatpush1.msra.mxu0 %v254
  %263 = vmatprep.subr.mxu0 0.0
  %264 = vmatpush1.msra.mxu0 0.0
  %265 = vmatprep.subr.mxu0 0.0
  %266 = vmatpush1.msra.mxu0 0.0
  %267 = vmatprep.subr.mxu0 0.0
  %268 = vmatpush1.msra.mxu0 0.0
  %269 = vmatprep.subr.mxu0 0.0
  %270 = vmatpush1.msra.mxu0 0.0
  %271 = vmatprep.subr.mxu0 0.0
  %272 = vmatpush1.msra.mxu0 0.0
  %273 = vmatprep.subr.mxu0 0.0
  %274 = vmatpush1.msra.mxu0 0.0
  %275 = vmatprep.subr.mxu0 0.0
  %276 = vmatpush1.msra.mxu0 0.0
  %277 = vmatprep.subr.mxu0 0.0
  %278 = vmatpush1.msra.mxu0 0.0
  %279 = vmatprep.subr.mxu0 0.0
  %280 = vmatpush1.msra.mxu0 0.0
  %281 = vmatprep.subr.mxu0 0.0
  %282 = vmatpush1.msra.mxu0 0.0
  %283 = vmatprep.subr.mxu0 0.0
  %284 = vmatpush1.msra.mxu0 0.0
  %285 = vmatprep.subr.mxu0 0.0
  %286 = vmatpush1.msra.mxu0 0.0
  %287 = vmatprep.subr.mxu0 0.0
  %288 = vmatpush1.msra.mxu0 0.0
  %289 = vmatprep.subr.mxu0 0.0
  %290 = vmatpush1.msra.mxu0 0.0
  %291 = vmatprep.subr.mxu0 0.0
  %292 = vmatpush1.msra.mxu0 0.0
  %293 = vmatprep.subr.mxu0 0.0
  %294 = vmatpush1.msra.mxu0 0.0
  %295 = vmatprep.subr.mxu0 0.0
  %296 = vmatpush1.msra.mxu0 0.0
  %297 = vmatprep.subr.mxu0 0.0
  %298 = vmatpush1.msra.mxu0 0.0
  %299 = vmatprep.subr.mxu0 0.0
  %300 = vmatpush1.msra.mxu0 0.0
  %301 = vmatprep.subr.mxu0 0.0
  %302 = vmatpush1.msra.mxu0 0.0
  %303 = vmatprep.subr.mxu0 0.0
  %304 = vmatpush1.msra.mxu0 0.0
  %305 = vmatprep.subr.mxu0 0.0
  %306 = vmatpush1.msra.mxu0 0.0
  %307 = vmatprep.subr.mxu0 0.0
  %308 = vmatpush1.msra.mxu0 0.0
  %309 = vmatprep.subr.mxu0 0.0
  %310 = vmatpush1.msra.mxu0 0.0
  %311 = vmatprep.subr.mxu0 0.0
  %312 = vmatpush1.msra.mxu0 0.0
  %313 = vmatprep.subr.mxu0 0.0
  %314 = vmatpush1.msra.mxu0 0.0
  %315 = vmatprep.subr.mxu0 0.0
  %316 = vmatpush1.msra.mxu0 0.0
  %317 = vmatprep.subr.mxu0 0.0
  %318 = vmatpush1.msra.mxu0 0.0
  %319 = vmatprep.subr.mxu0 0.0
  %320 = vmatpush1.msra.mxu0 0.0
  %321 = vmatprep.subr.mxu0 0.0
  %322 = vmatpush1.msra.mxu0 0.0
  %323 = vmatprep.mubr.f32.mxu0 0.0
  %324 = vmatmul.mubr.f32.gmra.mrb[0].mxu0 %v257
  %v325 = vpop.f32.mrb[0].mxu0
  %v326 = vadd.f32 %v169, %v325
  %v327 = vpop.f32.mrb[0].mxu0
  %328 = vdwg.mxu0
  %v329 = vld [vmem:[%s7] sm:$0xff]
  %v330 = vld [vmem:[%s7 + $0x8] sm:$0xff]
  %v331 = vld [vmem:[%s7 + $0x10] sm:$0xff]
  %v332 = vld [vmem:[%s7 + $0x18] sm:$0xff]
  %v334 = vlaneseq
  %v335 = vshrl.u32 %v334, 7
  %v336 = vsub.s32 0, %v335
  %v337 = vrot.slane %v55, %v336
  %v339 = vadd.f32 %v326, 0.0
  %v340 = vxor.u32 %v339, 2147483648
  %v341 = vmul.f32 %v340, 1.442695
  %v342 = vpow.pop %v341
  %v343 = vadd.f32 %v342, 1.0
  %v344 = vrcp.pop %v343
  %v345 = vmul.f32 1.0, %v344
  %v346 = vtanh.pop %v339
  %v347 = vmul.f32 %v345, 0.0
  %349 = vrot.lane.b32.xlu0 %v346, 32
  %v350 = vpop.permute.xlu0 %349
  %v352 = vmul.f32 %v345, %v350
  %354 = vrot.lane.b32.xlu0 %v352, 32
  %v355 = vpop.permute.xlu0 %354
  %v357 = vadd.f32 %v347, %v355
  %v358 = vtanh.pop %v357
  %360 = vrot.lane.b32.xlu0 %v358, 32
  %v361 = vpop.permute.xlu0 %360
  %v363 = vmul.f32 %v345, %v361
  %365 = vrot.lane.b32.xlu0 %v363, 64
  %v366 = vpop.permute.xlu0 %365
  %vm367 = vcmask 261120
  %v368 = vsel %vm367, %v366, 0
  %370 = vmatprep.subr.mxu0 0.0
  %371 = vmatpush1.msra.mxu0 %v329
  %372 = vmatprep.subr.mxu0 0.0
  %373 = vmatpush1.msra.mxu0 %v330
  %374 = vmatprep.subr.mxu0 0.0
  %375 = vmatpush1.msra.mxu0 %v331
  %376 = vmatprep.subr.mxu0 0.0
  %377 = vmatpush1.msra.mxu0 %v332
  %378 = vmatprep.subr.mxu0 0.0
  %379 = vmatpush1.msra.mxu0 0.0
  %380 = vmatprep.subr.mxu0 0.0
  %381 = vmatpush1.msra.mxu0 0.0
  %382 = vmatprep.subr.mxu0 0.0
  %383 = vmatpush1.msra.mxu0 0.0
  %384 = vmatprep.subr.mxu0 0.0
  %385 = vmatpush1.msra.mxu0 0.0
  %386 = vmatprep.subr.mxu0 0.0
  %387 = vmatpush1.msra.mxu0 0.0
  %388 = vmatprep.subr.mxu0 0.0
  %389 = vmatpush1.msra.mxu0 0.0
  %390 = vmatprep.subr.mxu0 0.0
  %391 = vmatpush1.msra.mxu0 0.0
  %392 = vmatprep.subr.mxu0 0.0
  %393 = vmatpush1.msra.mxu0 0.0
  %394 = vmatprep.subr.mxu0 0.0
  %395 = vmatpush1.msra.mxu0 0.0
  %396 = vmatprep.subr.mxu0 0.0
  %397 = vmatpush1.msra.mxu0 0.0
  %398 = vmatprep.subr.mxu0 0.0
  %399 = vmatpush1.msra.mxu0 0.0
  %400 = vmatprep.subr.mxu0 0.0
  %401 = vmatpush1.msra.mxu0 0.0
  %402 = vmatprep.subr.mxu0 0.0
  %403 = vmatpush1.msra.mxu0 0.0
  %404 = vmatprep.subr.mxu0 0.0
  %405 = vmatpush1.msra.mxu0 0.0
  %406 = vmatprep.subr.mxu0 0.0
  %407 = vmatpush1.msra.mxu0 0.0
  %408 = vmatprep.subr.mxu0 0.0
  %409 = vmatpush1.msra.mxu0 0.0
  %410 = vmatprep.subr.mxu0 0.0
  %411 = vmatpush1.msra.mxu0 0.0
  %412 = vmatprep.subr.mxu0 0.0
  %413 = vmatpush1.msra.mxu0 0.0
  %414 = vmatprep.subr.mxu0 0.0
  %415 = vmatpush1.msra.mxu0 0.0
  %416 = vmatprep.subr.mxu0 0.0
  %417 = vmatpush1.msra.mxu0 0.0
  %418 = vmatprep.subr.mxu0 0.0
  %419 = vmatpush1.msra.mxu0 0.0
  %420 = vmatprep.subr.mxu0 0.0
  %421 = vmatpush1.msra.mxu0 0.0
  %422 = vmatprep.subr.mxu0 0.0
  %423 = vmatpush1.msra.mxu0 0.0
  %424 = vmatprep.subr.mxu0 0.0
  %425 = vmatpush1.msra.mxu0 0.0
  %426 = vmatprep.subr.mxu0 0.0
  %427 = vmatpush1.msra.mxu0 0.0
  %428 = vmatprep.subr.mxu0 0.0
  %429 = vmatpush1.msra.mxu0 0.0
  %430 = vmatprep.subr.mxu0 0.0
  %431 = vmatpush1.msra.mxu0 0.0
  %432 = vmatprep.subr.mxu0 0.0
  %433 = vmatpush1.msra.mxu0 0.0
  %434 = vmatprep.mubr.f32.mxu0 0.0
  %435 = vmatmul.mubr.f32.gmra.mrb[0].mxu0 %v368
  %v436 = vpop.f32.mrb[0].mxu0
  %v437 = vadd.f32 0.0, %v436
  %v438 = vpop.f32.mrb[0].mxu0
  %439 = vdwg.mxu0
  %440 = vmatprep.subr.mxu0 0.0
  %441 = vmatpush1.msra.mxu0 %v47
  %442 = vmatprep.subr.mxu0 0.0
  %443 = vmatpush1.msra.mxu0 %v48
  %444 = vmatprep.subr.mxu0 0.0
  %445 = vmatpush1.msra.mxu0 %v49
  %446 = vmatprep.subr.mxu0 0.0
  %447 = vmatpush1.msra.mxu0 %v50
  %448 = vmatprep.subr.mxu0 0.0
  %449 = vmatpush1.msra.mxu0 0.0
  %450 = vmatprep.subr.mxu0 0.0
  %451 = vmatpush1.msra.mxu0 0.0
  %452 = vmatprep.subr.mxu0 0.0
  %453 = vmatpush1.msra.mxu0 0.0
  %454 = vmatprep.subr.mxu0 0.0
  %455 = vmatpush1.msra.mxu0 0.0
  %456 = vmatprep.subr.mxu0 0.0
  %457 = vmatpush1.msra.mxu0 0.0
  %458 = vmatprep.subr.mxu0 0.0
  %459 = vmatpush1.msra.mxu0 0.0
  %460 = vmatprep.subr.mxu0 0.0
  %461 = vmatpush1.msra.mxu0 0.0
  %462 = vmatprep.subr.mxu0 0.0
  %463 = vmatpush1.msra.mxu0 0.0
  %464 = vmatprep.subr.mxu0 0.0
  %465 = vmatpush1.msra.mxu0 0.0
  %466 = vmatprep.subr.mxu0 0.0
  %467 = vmatpush1.msra.mxu0 0.0
  %468 = vmatprep.subr.mxu0 0.0
  %469 = vmatpush1.msra.mxu0 0.0
  %470 = vmatprep.subr.mxu0 0.0
  %471 = vmatpush1.msra.mxu0 0.0
  %472 = vmatprep.subr.mxu0 0.0
  %473 = vmatpush1.msra.mxu0 0.0
  %474 = vmatprep.subr.mxu0 0.0
  %475 = vmatpush1.msra.mxu0 0.0
  %476 = vmatprep.subr.mxu0 0.0
  %477 = vmatpush1.msra.mxu0 0.0
  %478 = vmatprep.subr.mxu0 0.0
  %479 = vmatpush1.msra.mxu0 0.0
  %480 = vmatprep.subr.mxu0 0.0
  %481 = vmatpush1.msra.mxu0 0.0
  %482 = vmatprep.subr.mxu0 0.0
  %483 = vmatpush1.msra.mxu0 0.0
  %484 = vmatprep.subr.mxu0 0.0
  %485 = vmatpush1.msra.mxu0 0.0
  %486 = vmatprep.subr.mxu0 0.0
  %487 = vmatpush1.msra.mxu0 0.0
  %488 = vmatprep.subr.mxu0 0.0
  %489 = vmatpush1.msra.mxu0 0.0
  %490 = vmatprep.subr.mxu0 0.0
  %491 = vmatpush1.msra.mxu0 0.0
  %492 = vmatprep.subr.mxu0 0.0
  %493 = vmatpush1.msra.mxu0 0.0
  %494 = vmatprep.subr.mxu0 0.0
  %495 = vmatpush1.msra.mxu0 0.0
  %496 = vmatprep.subr.mxu0 0.0
  %497 = vmatpush1.msra.mxu0 0.0
  %498 = vmatprep.subr.mxu0 0.0
  %499 = vmatpush1.msra.mxu0 0.0
  %500 = vmatprep.subr.mxu0 0.0
  %501 = vmatpush1.msra.mxu0 0.0
  %502 = vmatprep.subr.mxu0 0.0
  %503 = vmatpush1.msra.mxu0 0.0
  %504 = vmatprep.mubr.f32.mxu0 0.0
  %505 = vmatmul.mubr.f32.gmra.mrb[0].mxu0 %v368
  %v506 = vpop.f32.mrb[0].mxu0
  %v507 = vadd.f32 %v337, %v506
  %v508 = vpop.f32.mrb[0].mxu0
  %509 = vdwg.mxu0
  %v510 = vxor.u32 %v507, 2147483648
  %v511 = vmul.f32 %v510, 1.442695
  %v512 = vpow.pop %v511
  %v513 = vadd.f32 %v512, 1.0
  %v514 = vrcp.pop %v513
  %v515 = vmul.f32 1.0, %v514
  %v516 = vtanh.pop %v507
  %v517 = vmul.f32 %v515, 0.0
  %519 = vrot.lane.b32.xlu0 %v516, 32
  %v520 = vpop.permute.xlu0 %519
  %v522 = vmul.f32 %v515, %v520
  %524 = vrot.lane.b32.xlu0 %v522, 32
  %v525 = vpop.permute.xlu0 %524
  %v527 = vadd.f32 %v517, %v525
  %v528 = vtanh.pop %v527
  %530 = vrot.lane.b32.xlu0 %v528, 32
  %v531 = vpop.permute.xlu0 %530
  %v533 = vmul.f32 %v515, %v531
  %535 = vrot.lane.b32.xlu0 %v533, 64
  %v536 = vpop.permute.xlu0 %535
  %v537 = vsel %vm367, %v536, 0
  %539 = vmatprep.subr.mxu0 0.0
  %540 = vmatpush1.msra.mxu0 %v51
  %541 = vmatprep.subr.mxu0 0.0
  %542 = vmatpush1.msra.mxu0 %v52
  %543 = vmatprep.subr.mxu0 0.0
  %544 = vmatpush1.msra.mxu0 %v53
  %545 = vmatprep.subr.mxu0 0.0
  %546 = vmatpush1.msra.mxu0 %v54
  %547 = vmatprep.subr.mxu0 0.0
  %548 = vmatpush1.msra.mxu0 0.0
  %549 = vmatprep.subr.mxu0 0.0
  %550 = vmatpush1.msra.mxu0 0.0
  %551 = vmatprep.subr.mxu0 0.0
  %552 = vmatpush1.msra.mxu0 0.0
  %553 = vmatprep.subr.mxu0 0.0
  %554 = vmatpush1.msra.mxu0 0.0
  %555 = vmatprep.subr.mxu0 0.0
  %556 = vmatpush1.msra.mxu0 0.0
  %557 = vmatprep.subr.mxu0 0.0
  %558 = vmatpush1.msra.mxu0 0.0
  %559 = vmatprep.subr.mxu0 0.0
  %560 = vmatpush1.msra.mxu0 0.0
  %561 = vmatprep.subr.mxu0 0.0
  %562 = vmatpush1.msra.mxu0 0.0
  %563 = vmatprep.subr.mxu0 0.0
  %564 = vmatpush1.msra.mxu0 0.0
  %565 = vmatprep.subr.mxu0 0.0
  %566 = vmatpush1.msra.mxu0 0.0
  %567 = vmatprep.subr.mxu0 0.0
  %568 = vmatpush1.msra.mxu0 0.0
  %569 = vmatprep.subr.mxu0 0.0
  %570 = vmatpush1.msra.mxu0 0.0
  %571 = vmatprep.subr.mxu0 0.0
  %572 = vmatpush1.msra.mxu0 0.0
  %573 = vmatprep.subr.mxu0 0.0
  %574 = vmatpush1.msra.mxu0 0.0
  %575 = vmatprep.subr.mxu0 0.0
  %576 = vmatpush1.msra.mxu0 0.0
  %577 = vmatprep.subr.mxu0 0.0
  %578 = vmatpush1.msra.mxu0 0.0
  %579 = vmatprep.subr.mxu0 0.0
  %580 = vmatpush1.msra.mxu0 0.0
  %581 = vmatprep.subr.mxu0 0.0
  %582 = vmatpush1.msra.mxu0 0.0
  %583 = vmatprep.subr.mxu0 0.0
  %584 = vmatpush1.msra.mxu0 0.0
  %585 = vmatprep.subr.mxu0 0.0
  %586 = vmatpush1.msra.mxu0 0.0
  %587 = vmatprep.subr.mxu0 0.0
  %588 = vmatpush1.msra.mxu0 0.0
  %589 = vmatprep.subr.mxu0 0.0
  %590 = vmatpush1.msra.mxu0 0.0
  %591 = vmatprep.subr.mxu0 0.0
  %592 = vmatpush1.msra.mxu0 0.0
  %593 = vmatprep.subr.mxu0 0.0
  %594 = vmatpush1.msra.mxu0 0.0
  %595 = vmatprep.subr.mxu0 0.0
  %596 = vmatpush1.msra.mxu0 0.0
  %597 = vmatprep.subr.mxu0 0.0
  %598 = vmatpush1.msra.mxu0 0.0
  %599 = vmatprep.subr.mxu0 0.0
  %600 = vmatpush1.msra.mxu0 0.0
  %601 = vmatprep.subr.mxu0 0.0
  %602 = vmatpush1.msra.mxu0 0.0
  %603 = vmatprep.mubr.f32.mxu0 0.0
  %604 = vmatmul.mubr.f32.gmra.mrb[0].mxu0 %v537
  %v605 = vpop.f32.mrb[0].mxu0
  %v606 = vadd.f32 %v337, %v605
  %v607 = vpop.f32.mrb[0].mxu0
  %608 = vdwg.mxu0
  %v609 = vadd.f32 %v245, %v437
  %v610 = vxor.u32 %v609, 2147483648
  %v611 = vmul.f32 %v610, 1.442695
  %v612 = vpow.pop %v611
  %v613 = vadd.f32 %v612, 1.0
  %v614 = vrcp.pop %v613
  %v615 = vmul.f32 1.0, %v614
  %v616 = vtanh.pop %v609
  %v617 = vmul.f32 %v615, %v357
  %619 = vrot.lane.b32.xlu0 %v616, 32
  %v620 = vpop.permute.xlu0 %619
  %v622 = vmul.f32 %v615, %v620
  %624 = vrot.lane.b32.xlu0 %v622, 32
  %v625 = vpop.permute.xlu0 %624
  %v627 = vadd.f32 %v617, %v625
  %v628 = vtanh.pop %v627
  %630 = vrot.lane.b32.xlu0 %v628, 32
  %v631 = vpop.permute.xlu0 %630
  %v633 = vmul.f32 %v615, %v631
  %635 = vrot.lane.b32.xlu0 %v633, 64
  %v636 = vpop.permute.xlu0 %635
  %v637 = vsel %vm367, %v636, 0
  %639 = vmatprep.subr.mxu0 0.0
  %640 = vmatpush1.msra.mxu0 %v329
  %641 = vmatprep.subr.mxu0 0.0
  %642 = vmatpush1.msra.mxu0 %v330
  %643 = vmatprep.subr.mxu0 0.0
  %644 = vmatpush1.msra.mxu0 %v331
  %645 = vmatprep.subr.mxu0 0.0
  %646 = vmatpush1.msra.mxu0 %v332
  %647 = vmatprep.subr.mxu0 0.0
  %648 = vmatpush1.msra.mxu0 0.0
  %649 = vmatprep.subr.mxu0 0.0
  %650 = vmatpush1.msra.mxu0 0.0
  %651 = vmatprep.subr.mxu0 0.0
  %652 = vmatpush1.msra.mxu0 0.0
  %653 = vmatprep.subr.mxu0 0.0
  %654 = vmatpush1.msra.mxu0 0.0
  %655 = vmatprep.subr.mxu0 0.0
  %656 = vmatpush1.msra.mxu0 0.0
  %657 = vmatprep.subr.mxu0 0.0
  %658 = vmatpush1.msra.mxu0 0.0
  %659 = vmatprep.subr.mxu0 0.0
  %660 = vmatpush1.msra.mxu0 0.0
  %661 = vmatprep.subr.mxu0 0.0
  %662 = vmatpush1.msra.mxu0 0.0
  %663 = vmatprep.subr.mxu0 0.0
  %664 = vmatpush1.msra.mxu0 0.0
  %665 = vmatprep.subr.mxu0 0.0
  %666 = vmatpush1.msra.mxu0 0.0
  %667 = vmatprep.subr.mxu0 0.0
  %668 = vmatpush1.msra.mxu0 0.0
  %669 = vmatprep.subr.mxu0 0.0
  %670 = vmatpush1.msra.mxu0 0.0
  %671 = vmatprep.subr.mxu0 0.0
  %672 = vmatpush1.msra.mxu0 0.0
  %673 = vmatprep.subr.mxu0 0.0
  %674 = vmatpush1.msra.mxu0 0.0
  %675 = vmatprep.subr.mxu0 0.0
  %676 = vmatpush1.msra.mxu0 0.0
  %677 = vmatprep.subr.mxu0 0.0
  %678 = vmatpush1.msra.mxu0 0.0
  %679 = vmatprep.subr.mxu0 0.0
  %680 = vmatpush1.msra.mxu0 0.0
  %681 = vmatprep.subr.mxu0 0.0
  %682 = vmatpush1.msra.mxu0 0.0
  %683 = vmatprep.subr.mxu0 0.0
  %684 = vmatpush1.msra.mxu0 0.0
  %685 = vmatprep.subr.mxu0 0.0
  %686 = vmatpush1.msra.mxu0 0.0
  %687 = vmatprep.subr.mxu0 0.0
  %688 = vmatpush1.msra.mxu0 0.0
  %689 = vmatprep.subr.mxu0 0.0
  %690 = vmatpush1.msra.mxu0 0.0
  %691 = vmatprep.subr.mxu0 0.0
  %692 = vmatpush1.msra.mxu0 0.0
  %693 = vmatprep.subr.mxu0 0.0
  %694 = vmatpush1.msra.mxu0 0.0
  %695 = vmatprep.subr.mxu0 0.0
  %696 = vmatpush1.msra.mxu0 0.0
  %697 = vmatprep.subr.mxu0 0.0
  %698 = vmatpush1.msra.mxu0 0.0
  %699 = vmatprep.subr.mxu0 0.0
  %700 = vmatpush1.msra.mxu0 0.0
  %701 = vmatprep.subr.mxu0 0.0
  %702 = vmatpush1.msra.mxu0 0.0
  %703 = vmatprep.mubr.f32.mxu0 0.0
  %704 = vmatmul.mubr.f32.gmra.mrb[0].mxu0 %v637
  %v705 = vpop.f32.mrb[0].mxu0
  %v706 = vadd.f32 0.0, %v705
  %v707 = vpop.f32.mrb[0].mxu0
  %708 = vdwg.mxu0
  %709 = vmatprep.subr.mxu0 0.0
  %710 = vmatpush1.msra.mxu0 %v47
  %711 = vmatprep.subr.mxu0 0.0
  %712 = vmatpush1.msra.mxu0 %v48
  %713 = vmatprep.subr.mxu0 0.0
  %714 = vmatpush1.msra.mxu0 %v49
  %715 = vmatprep.subr.mxu0 0.0
  %716 = vmatpush1.msra.mxu0 %v50
  %717 = vmatprep.subr.mxu0 0.0
  %718 = vmatpush1.msra.mxu0 0.0
  %719 = vmatprep.subr.mxu0 0.0
  %720 = vmatpush1.msra.mxu0 0.0
  %721 = vmatprep.subr.mxu0 0.0
  %722 = vmatpush1.msra.mxu0 0.0
  %723 = vmatprep.subr.mxu0 0.0
  %724 = vmatpush1.msra.mxu0 0.0
  %725 = vmatprep.subr.mxu0 0.0
  %726 = vmatpush1.msra.mxu0 0.0
  %727 = vmatprep.subr.mxu0 0.0
  %728 = vmatpush1.msra.mxu0 0.0
  %729 = vmatprep.subr.mxu0 0.0
  %730 = vmatpush1.msra.mxu0 0.0
  %731 = vmatprep.subr.mxu0 0.0
  %732 = vmatpush1.msra.mxu0 0.0
  %733 = vmatprep.subr.mxu0 0.0
  %734 = vmatpush1.msra.mxu0 0.0
  %735 = vmatprep.subr.mxu0 0.0
  %736 = vmatpush1.msra.mxu0 0.0
  %737 = vmatprep.subr.mxu0 0.0
  %738 = vmatpush1.msra.mxu0 0.0
  %739 = vmatprep.subr.mxu0 0.0
  %740 = vmatpush1.msra.mxu0 0.0
  %741 = vmatprep.subr.mxu0 0.0
  %742 = vmatpush1.msra.mxu0 0.0
  %743 = vmatprep.subr.mxu0 0.0
  %744 = vmatpush1.msra.mxu0 0.0
  %745 = vmatprep.subr.mxu0 0.0
  %746 = vmatpush1.msra.mxu0 0.0
  %747 = vmatprep.subr.mxu0 0.0
  %748 = vmatpush1.msra.mxu0 0.0
  %749 = vmatprep.subr.mxu0 0.0
  %750 = vmatpush1.msra.mxu0 0.0
  %751 = vmatprep.subr.mxu0 0.0
  %752 = vmatpush1.msra.mxu0 0.0
  %753 = vmatprep.subr.mxu0 0.0
  %754 = vmatpush1.msra.mxu0 0.0
  %755 = vmatprep.subr.mxu0 0.0
  %756 = vmatpush1.msra.mxu0 0.0
  %757 = vmatprep.subr.mxu0 0.0
  %758 = vmatpush1.msra.mxu0 0.0
  %759 = vmatprep.subr.mxu0 0.0
  %760 = vmatpush1.msra.mxu0 0.0
  %761 = vmatprep.subr.mxu0 0.0
  %762 = vmatpush1.msra.mxu0 0.0
  %763 = vmatprep.subr.mxu0 0.0
  %764 = vmatpush1.msra.mxu0 0.0
  %765 = vmatprep.subr.mxu0 0.0
  %766 = vmatpush1.msra.mxu0 0.0
  %767 = vmatprep.subr.mxu0 0.0
  %768 = vmatpush1.msra.mxu0 0.0
  %769 = vmatprep.subr.mxu0 0.0
  %770 = vmatpush1.msra.mxu0 0.0
  %771 = vmatprep.subr.mxu0 0.0
  %772 = vmatpush1.msra.mxu0 0.0
  %773 = vmatprep.mubr.f32.mxu0 0.0
  %774 = vmatmul.mubr.f32.gmra.mrb[0].mxu0 %v637
  %v775 = vpop.f32.mrb[0].mxu0
  %v776 = vadd.f32 %v606, %v775
  %v777 = vpop.f32.mrb[0].mxu0
  %778 = vdwg.mxu0
  %v779 = vxor.u32 %v776, 2147483648
  %v780 = vmul.f32 %v779, 1.442695
  %v781 = vpow.pop %v780
  %v782 = vadd.f32 %v781, 1.0
  %v783 = vrcp.pop %v782
  %v784 = vmul.f32 1.0, %v783
  %v785 = vtanh.pop %v776
  %v786 = vmul.f32 %v784, %v527
  %788 = vrot.lane.b32.xlu0 %v785, 32
  %v789 = vpop.permute.xlu0 %788
  %v791 = vmul.f32 %v784, %v789
  %793 = vrot.lane.b32.xlu0 %v791, 32
  %v794 = vpop.permute.xlu0 %793
  %v796 = vadd.f32 %v786, %v794
  %v797 = vtanh.pop %v796
  %799 = vrot.lane.b32.xlu0 %v797, 32
  %v800 = vpop.permute.xlu0 %799
  %v802 = vmul.f32 %v784, %v800
  %804 = vrot.lane.b32.xlu0 %v802, 64
  %v805 = vpop.permute.xlu0 %804
  %v806 = vsel %vm367, %v805, 0
  %808 = vmatprep.subr.mxu0 0.0
  %809 = vmatpush1.msra.mxu0 %v51
  %810 = vmatprep.subr.mxu0 0.0
  %811 = vmatpush1.msra.mxu0 %v52
  %812 = vmatprep.subr.mxu0 0.0
  %813 = vmatpush1.msra.mxu0 %v53
  %814 = vmatprep.subr.mxu0 0.0
  %815 = vmatpush1.msra.mxu0 %v54
  %816 = vmatprep.subr.mxu0 0.0
  %817 = vmatpush1.msra.mxu0 0.0
  %818 = vmatprep.subr.mxu0 0.0
  %819 = vmatpush1.msra.mxu0 0.0
  %820 = vmatprep.subr.mxu0 0.0
  %821 = vmatpush1.msra.mxu0 0.0
  %822 = vmatprep.subr.mxu0 0.0
  %823 = vmatpush1.msra.mxu0 0.0
  %824 = vmatprep.subr.mxu0 0.0
  %825 = vmatpush1.msra.mxu0 0.0
  %826 = vmatprep.subr.mxu0 0.0
  %827 = vmatpush1.msra.mxu0 0.0
  %828 = vmatprep.subr.mxu0 0.0
  %829 = vmatpush1.msra.mxu0 0.0
  %830 = vmatprep.subr.mxu0 0.0
  %831 = vmatpush1.msra.mxu0 0.0
  %832 = vmatprep.subr.mxu0 0.0
  %833 = vmatpush1.msra.mxu0 0.0
  %834 = vmatprep.subr.mxu0 0.0
  %835 = vmatpush1.msra.mxu0 0.0
  %836 = vmatprep.subr.mxu0 0.0
  %837 = vmatpush1.msra.mxu0 0.0
  %838 = vmatprep.subr.mxu0 0.0
  %839 = vmatpush1.msra.mxu0 0.0
  %840 = vmatprep.subr.mxu0 0.0
  %841 = vmatpush1.msra.mxu0 0.0
  %842 = vmatprep.subr.mxu0 0.0
  %843 = vmatpush1.msra.mxu0 0.0
  %844 = vmatprep.subr.mxu0 0.0
  %845 = vmatpush1.msra.mxu0 0.0
  %846 = vmatprep.subr.mxu0 0.0
  %847 = vmatpush1.msra.mxu0 0.0
  %848 = vmatprep.subr.mxu0 0.0
  %849 = vmatpush1.msra.mxu0 0.0
  %850 = vmatprep.subr.mxu0 0.0
  %851 = vmatpush1.msra.mxu0 0.0
  %852 = vmatprep.subr.mxu0 0.0
  %853 = vmatpush1.msra.mxu0 0.0
  %854 = vmatprep.subr.mxu0 0.0
  %855 = vmatpush1.msra.mxu0 0.0
  %856 = vmatprep.subr.mxu0 0.0
  %857 = vmatpush1.msra.mxu0 0.0
  %858 = vmatprep.subr.mxu0 0.0
  %859 = vmatpush1.msra.mxu0 0.0
  %860 = vmatprep.subr.mxu0 0.0
  %861 = vmatpush1.msra.mxu0 0.0
  %862 = vmatprep.subr.mxu0 0.0
  %863 = vmatpush1.msra.mxu0 0.0
  %864 = vmatprep.subr.mxu0 0.0
  %865 = vmatpush1.msra.mxu0 0.0
  %866 = vmatprep.subr.mxu0 0.0
  %867 = vmatpush1.msra.mxu0 0.0
  %868 = vmatprep.subr.mxu0 0.0
  %869 = vmatpush1.msra.mxu0 0.0
  %870 = vmatprep.subr.mxu0 0.0
  %871 = vmatpush1.msra.mxu0 0.0
  %872 = vmatprep.mubr.f32.mxu0 0.0
  %873 = vmatmul.mubr.f32.gmra.mrb[0].mxu0 %v806
  %v874 = vpop.f32.mrb[0].mxu0
  %v875 = vadd.f32 %v337, %v874
  %v876 = vpop.f32.mrb[0].mxu0
  %877 = vdwg.mxu0
  %vm879 = vcmask 254976
  %880 = vst.msk [vmem:[#allocation2] sm:$0x3] %vm879, %v805
  %v882 = vrot.slane %v706, 6
  %v884 = vadd.f32 %v245, %v882
  %v885 = vxor.u32 %v884, 2147483648
  %v886 = vmul.f32 %v885, 1.442695
  %v887 = vpow.pop %v886
  %v888 = vadd.f32 %v887, 1.0
  %v889 = vrcp.pop %v888
  %v890 = vmul.f32 1.0, %v889
  %v891 = vtanh.pop %v884
  %v893 = vrot.slane %v627, 6
  %v895 = vmul.f32 %v890, %v893
  %897 = vrot.lane.b32.xlu0 %v891, 32
  %v898 = vpop.permute.xlu0 %897
  %v900 = vmul.f32 %v890, %v898
  %902 = vrot.lane.b32.xlu0 %v900, 32
  %v903 = vpop.permute.xlu0 %902
  %v905 = vadd.f32 %v895, %v903
  %v906 = vtanh.pop %v905
  %908 = vrot.lane.b32.xlu0 %v906, 32
  %v909 = vpop.permute.xlu0 %908
  %v911 = vmul.f32 %v890, %v909
  %v913 = vrot.slane %v911, 2
  %914 = vrot.lane.b32.xlu0 %v913, 64
  %v915 = vpop.permute.xlu0 %914
  %v916 = vsel %vm367, %v915, 0
  %918 = vmatprep.subr.mxu0 0.0
  %919 = vmatpush1.msra.mxu0 %v329
  %920 = vmatprep.subr.mxu0 0.0
  %921 = vmatpush1.msra.mxu0 %v330
  %922 = vmatprep.subr.mxu0 0.0
  %923 = vmatpush1.msra.mxu0 %v331
  %924 = vmatprep.subr.mxu0 0.0
  %925 = vmatpush1.msra.mxu0 %v332
  %926 = vmatprep.subr.mxu0 0.0
  %927 = vmatpush1.msra.mxu0 0.0
  %928 = vmatprep.subr.mxu0 0.0
  %929 = vmatpush1.msra.mxu0 0.0
  %930 = vmatprep.subr.mxu0 0.0
  %931 = vmatpush1.msra.mxu0 0.0
  %932 = vmatprep.subr.mxu0 0.0
  %933 = vmatpush1.msra.mxu0 0.0
  %934 = vmatprep.subr.mxu0 0.0
  %935 = vmatpush1.msra.mxu0 0.0
  %936 = vmatprep.subr.mxu0 0.0
  %937 = vmatpush1.msra.mxu0 0.0
  %938 = vmatprep.subr.mxu0 0.0
  %939 = vmatpush1.msra.mxu0 0.0
  %940 = vmatprep.subr.mxu0 0.0
  %941 = vmatpush1.msra.mxu0 0.0
  %942 = vmatprep.subr.mxu0 0.0
  %943 = vmatpush1.msra.mxu0 0.0
  %944 = vmatprep.subr.mxu0 0.0
  %945 = vmatpush1.msra.mxu0 0.0
  %946 = vmatprep.subr.mxu0 0.0
  %947 = vmatpush1.msra.mxu0 0.0
  %948 = vmatprep.subr.mxu0 0.0
  %949 = vmatpush1.msra.mxu0 0.0
  %950 = vmatprep.subr.mxu0 0.0
  %951 = vmatpush1.msra.mxu0 0.0
  %952 = vmatprep.subr.mxu0 0.0
  %953 = vmatpush1.msra.mxu0 0.0
  %954 = vmatprep.subr.mxu0 0.0
  %955 = vmatpush1.msra.mxu0 0.0
  %956 = vmatprep.subr.mxu0 0.0
  %957 = vmatpush1.msra.mxu0 0.0
  %958 = vmatprep.subr.mxu0 0.0
  %959 = vmatpush1.msra.mxu0 0.0
  %960 = vmatprep.subr.mxu0 0.0
  %961 = vmatpush1.msra.mxu0 0.0
  %962 = vmatprep.subr.mxu0 0.0
  %963 = vmatpush1.msra.mxu0 0.0
  %964 = vmatprep.subr.mxu0 0.0
  %965 = vmatpush1.msra.mxu0 0.0
  %966 = vmatprep.subr.mxu0 0.0
  %967 = vmatpush1.msra.mxu0 0.0
  %968 = vmatprep.subr.mxu0 0.0
  %969 = vmatpush1.msra.mxu0 0.0
  %970 = vmatprep.subr.mxu0 0.0
  %971 = vmatpush1.msra.mxu0 0.0
  %972 = vmatprep.subr.mxu0 0.0
  %973 = vmatpush1.msra.mxu0 0.0
  %974 = vmatprep.subr.mxu0 0.0
  %975 = vmatpush1.msra.mxu0 0.0
  %976 = vmatprep.subr.mxu0 0.0
  %977 = vmatpush1.msra.mxu0 0.0
  %978 = vmatprep.subr.mxu0 0.0
  %979 = vmatpush1.msra.mxu0 0.0
  %980 = vmatprep.subr.mxu0 0.0
  %981 = vmatpush1.msra.mxu0 0.0
  %982 = vmatprep.mubr.f32.mxu0 0.0
  %983 = vmatmul.mubr.f32.gmra.mrb[0].mxu0 %v916
  %v984 = vpop.f32.mrb[0].mxu0
  %v985 = vadd.f32 0.0, %v984
  %v986 = vpop.f32.mrb[0].mxu0
  %987 = vdwg.mxu0
  %988 = vmatprep.subr.mxu0 0.0
  %989 = vmatpush1.msra.mxu0 %v47
  %990 = vmatprep.subr.mxu0 0.0
  %991 = vmatpush1.msra.mxu0 %v48
  %992 = vmatprep.subr.mxu0 0.0
  %993 = vmatpush1.msra.mxu0 %v49
  %994 = vmatprep.subr.mxu0 0.0
  %995 = vmatpush1.msra.mxu0 %v50
  %996 = vmatprep.subr.mxu0 0.0
  %997 = vmatpush1.msra.mxu0 0.0
  %998 = vmatprep.subr.mxu0 0.0
  %999 = vmatpush1.msra.mxu0 0.0
  %1000 = vmatprep.subr.mxu0 0.0
  %1001 = vmatpush1.msra.mxu0 0.0
  %1002 = vmatprep.subr.mxu0 0.0
  %1003 = vmatpush1.msra.mxu0 0.0
  %1004 = vmatprep.subr.mxu0 0.0
  %1005 = vmatpush1.msra.mxu0 0.0
  %1006 = vmatprep.subr.mxu0 0.0
  %1007 = vmatpush1.msra.mxu0 0.0
  %1008 = vmatprep.subr.mxu0 0.0
  %1009 = vmatpush1.msra.mxu0 0.0
  %1010 = vmatprep.subr.mxu0 0.0
  %1011 = vmatpush1.msra.mxu0 0.0
  %1012 = vmatprep.subr.mxu0 0.0
  %1013 = vmatpush1.msra.mxu0 0.0
  %1014 = vmatprep.subr.mxu0 0.0
  %1015 = vmatpush1.msra.mxu0 0.0
  %1016 = vmatprep.subr.mxu0 0.0
  %1017 = vmatpush1.msra.mxu0 0.0
  %1018 = vmatprep.subr.mxu0 0.0
  %1019 = vmatpush1.msra.mxu0 0.0
  %1020 = vmatprep.subr.mxu0 0.0
  %1021 = vmatpush1.msra.mxu0 0.0
  %1022 = vmatprep.subr.mxu0 0.0
  %1023 = vmatpush1.msra.mxu0 0.0
  %1024 = vmatprep.subr.mxu0 0.0
  %1025 = vmatpush1.msra.mxu0 0.0
  %1026 = vmatprep.subr.mxu0 0.0
  %1027 = vmatpush1.msra.mxu0 0.0
  %1028 = vmatprep.subr.mxu0 0.0
  %1029 = vmatpush1.msra.mxu0 0.0
  %1030 = vmatprep.subr.mxu0 0.0
  %1031 = vmatpush1.msra.mxu0 0.0
  %1032 = vmatprep.subr.mxu0 0.0
  %1033 = vmatpush1.msra.mxu0 0.0
  %1034 = vmatprep.subr.mxu0 0.0
  %1035 = vmatpush1.msra.mxu0 0.0
  %1036 = vmatprep.subr.mxu0 0.0
  %1037 = vmatpush1.msra.mxu0 0.0
  %1038 = vmatprep.subr.mxu0 0.0
  %1039 = vmatpush1.msra.mxu0 0.0
  %1040 = vmatprep.subr.mxu0 0.0
  %1041 = vmatpush1.msra.mxu0 0.0
  %1042 = vmatprep.subr.mxu0 0.0
  %1043 = vmatpush1.msra.mxu0 0.0
  %1044 = vmatprep.subr.mxu0 0.0
  %1045 = vmatpush1.msra.mxu0 0.0
  %1046 = vmatprep.subr.mxu0 0.0
  %1047 = vmatpush1.msra.mxu0 0.0
  %1048 = vmatprep.subr.mxu0 0.0
  %1049 = vmatpush1.msra.mxu0 0.0
  %1050 = vmatprep.subr.mxu0 0.0
  %1051 = vmatpush1.msra.mxu0 0.0
  %1052 = vmatprep.mubr.f32.mxu0 0.0
  %1053 = vmatmul.mubr.f32.gmra.mrb[0].mxu0 %v916
  %v1054 = vpop.f32.mrb[0].mxu0
  %v1055 = vadd.f32 %v875, %v1054
  %v1056 = vpop.f32.mrb[0].mxu0
  %1057 = vdwg.mxu0
  %v1058 = vxor.u32 %v1055, 2147483648
  %v1059 = vmul.f32 %v1058, 1.442695
  %v1060 = vpow.pop %v1059
  %v1061 = vadd.f32 %v1060, 1.0
  %v1062 = vrcp.pop %v1061
  %v1063 = vmul.f32 1.0, %v1062
  %v1064 = vtanh.pop %v1055
  %v1065 = vmul.f32 %v1063, %v796
  %1067 = vrot.lane.b32.xlu0 %v1064, 32
  %v1068 = vpop.permute.xlu0 %1067
  %v1070 = vmul.f32 %v1063, %v1068
  %1072 = vrot.lane.b32.xlu0 %v1070, 32
  %v1073 = vpop.permute.xlu0 %1072
  %v1075 = vadd.f32 %v1065, %v1073
  %v1076 = vtanh.pop %v1075
  %1078 = vrot.lane.b32.xlu0 %v1076, 32
  %v1079 = vpop.permute.xlu0 %1078
  %v1081 = vmul.f32 %v1063, %v1079
  %1083 = vrot.lane.b32.xlu0 %v1081, 64
  %v1084 = vpop.permute.xlu0 %1083
  %v1085 = vsel %vm367, %v1084, 0
  %1087 = vmatprep.subr.mxu0 0.0
  %1088 = vmatpush1.msra.mxu0 %v51
  %1089 = vmatprep.subr.mxu0 0.0
  %1090 = vmatpush1.msra.mxu0 %v52
  %1091 = vmatprep.subr.mxu0 0.0
  %1092 = vmatpush1.msra.mxu0 %v53
  %1093 = vmatprep.subr.mxu0 0.0
  %1094 = vmatpush1.msra.mxu0 %v54
  %1095 = vmatprep.subr.mxu0 0.0
  %1096 = vmatpush1.msra.mxu0 0.0
  %1097 = vmatprep.subr.mxu0 0.0
  %1098 = vmatpush1.msra.mxu0 0.0
  %1099 = vmatprep.subr.mxu0 0.0
  %1100 = vmatpush1.msra.mxu0 0.0
  %1101 = vmatprep.subr.mxu0 0.0
  %1102 = vmatpush1.msra.mxu0 0.0
  %1103 = vmatprep.subr.mxu0 0.0
  %1104 = vmatpush1.msra.mxu0 0.0
  %1105 = vmatprep.subr.mxu0 0.0
  %1106 = vmatpush1.msra.mxu0 0.0
  %1107 = vmatprep.subr.mxu0 0.0
  %1108 = vmatpush1.msra.mxu0 0.0
  %1109 = vmatprep.subr.mxu0 0.0
  %1110 = vmatpush1.msra.mxu0 0.0
  %1111 = vmatprep.subr.mxu0 0.0
  %1112 = vmatpush1.msra.mxu0 0.0
  %1113 = vmatprep.subr.mxu0 0.0
  %1114 = vmatpush1.msra.mxu0 0.0
  %1115 = vmatprep.subr.mxu0 0.0
  %1116 = vmatpush1.msra.mxu0 0.0
  %1117 = vmatprep.subr.mxu0 0.0
  %1118 = vmatpush1.msra.mxu0 0.0
  %1119 = vmatprep.subr.mxu0 0.0
  %1120 = vmatpush1.msra.mxu0 0.0
  %1121 = vmatprep.subr.mxu0 0.0
  %1122 = vmatpush1.msra.mxu0 0.0
  %1123 = vmatprep.subr.mxu0 0.0
  %1124 = vmatpush1.msra.mxu0 0.0
  %1125 = vmatprep.subr.mxu0 0.0
  %1126 = vmatpush1.msra.mxu0 0.0
  %1127 = vmatprep.subr.mxu0 0.0
  %1128 = vmatpush1.msra.mxu0 0.0
  %1129 = vmatprep.subr.mxu0 0.0
  %1130 = vmatpush1.msra.mxu0 0.0
  %1131 = vmatprep.subr.mxu0 0.0
  %1132 = vmatpush1.msra.mxu0 0.0
  %1133 = vmatprep.subr.mxu0 0.0
  %1134 = vmatpush1.msra.mxu0 0.0
  %1135 = vmatprep.subr.mxu0 0.0
  %1136 = vmatpush1.msra.mxu0 0.0
  %1137 = vmatprep.subr.mxu0 0.0
  %1138 = vmatpush1.msra.mxu0 0.0
  %1139 = vmatprep.subr.mxu0 0.0
  %1140 = vmatpush1.msra.mxu0 0.0
  %1141 = vmatprep.subr.mxu0 0.0
  %1142 = vmatpush1.msra.mxu0 0.0
  %1143 = vmatprep.subr.mxu0 0.0
  %1144 = vmatpush1.msra.mxu0 0.0
  %1145 = vmatprep.subr.mxu0 0.0
  %1146 = vmatpush1.msra.mxu0 0.0
  %1147 = vmatprep.subr.mxu0 0.0
  %1148 = vmatpush1.msra.mxu0 0.0
  %1149 = vmatprep.subr.mxu0 0.0
  %1150 = vmatpush1.msra.mxu0 0.0
  %1151 = vmatprep.mubr.f32.mxu0 0.0
  %1152 = vmatmul.mubr.f32.gmra.mrb[0].mxu0 %v1085
  %v1153 = vpop.f32.mrb[0].mxu0
  %v1154 = vadd.f32 %v337, %v1153
  %v1155 = vpop.f32.mrb[0].mxu0
  %1156 = vdwg.mxu0
  %1158 = vst.msk [vmem:[#allocation2 + $0x2] sm:$0x3] %vm879, %v1084
  %v1160 = vrot.slane %v985, 4
  %v1162 = vadd.f32 %v245, %v1160
  %v1163 = vxor.u32 %v1162, 2147483648
  %v1164 = vmul.f32 %v1163, 1.442695
  %v1165 = vpow.pop %v1164
  %v1166 = vadd.f32 %v1165, 1.0
  %v1167 = vrcp.pop %v1166
  %v1168 = vmul.f32 1.0, %v1167
  %v1169 = vtanh.pop %v1162
  %v1171 = vrot.slane %v905, 6
  %v1173 = vmul.f32 %v1168, %v1171
  %1175 = vrot.lane.b32.xlu0 %v1169, 32
  %v1176 = vpop.permute.xlu0 %1175
  %v1178 = vmul.f32 %v1168, %v1176
  %1180 = vrot.lane.b32.xlu0 %v1178, 32
  %v1181 = vpop.permute.xlu0 %1180
  %v1183 = vadd.f32 %v1173, %v1181
  %v1184 = vtanh.pop %v1183
  %1186 = vrot.lane.b32.xlu0 %v1184, 32
  %v1187 = vpop.permute.xlu0 %1186
  %v1189 = vmul.f32 %v1168, %v1187
  %v1191 = vrot.slane %v1189, 4
  %1192 = vrot.lane.b32.xlu0 %v1191, 64
  %v1193 = vpop.permute.xlu0 %1192
  %v1194 = vsel %vm367, %v1193, 0
  %1196 = vmatprep.subr.mxu0 0.0
  %1197 = vmatpush1.msra.mxu0 %v329
  %1198 = vmatprep.subr.mxu0 0.0
  %1199 = vmatpush1.msra.mxu0 %v330
  %1200 = vmatprep.subr.mxu0 0.0
  %1201 = vmatpush1.msra.mxu0 %v331
  %1202 = vmatprep.subr.mxu0 0.0
  %1203 = vmatpush1.msra.mxu0 %v332
  %1204 = vmatprep.subr.mxu0 0.0
  %1205 = vmatpush1.msra.mxu0 0.0
  %1206 = vmatprep.subr.mxu0 0.0
  %1207 = vmatpush1.msra.mxu0 0.0
  %1208 = vmatprep.subr.mxu0 0.0
  %1209 = vmatpush1.msra.mxu0 0.0
  %1210 = vmatprep.subr.mxu0 0.0
  %1211 = vmatpush1.msra.mxu0 0.0
  %1212 = vmatprep.subr.mxu0 0.0
  %1213 = vmatpush1.msra.mxu0 0.0
  %1214 = vmatprep.subr.mxu0 0.0
  %1215 = vmatpush1.msra.mxu0 0.0
  %1216 = vmatprep.subr.mxu0 0.0
  %1217 = vmatpush1.msra.mxu0 0.0
  %1218 = vmatprep.subr.mxu0 0.0
  %1219 = vmatpush1.msra.mxu0 0.0
  %1220 = vmatprep.subr.mxu0 0.0
  %1221 = vmatpush1.msra.mxu0 0.0
  %1222 = vmatprep.subr.mxu0 0.0
  %1223 = vmatpush1.msra.mxu0 0.0
  %1224 = vmatprep.subr.mxu0 0.0
  %1225 = vmatpush1.msra.mxu0 0.0
  %1226 = vmatprep.subr.mxu0 0.0
  %1227 = vmatpush1.msra.mxu0 0.0
  %1228 = vmatprep.subr.mxu0 0.0
  %1229 = vmatpush1.msra.mxu0 0.0
  %1230 = vmatprep.subr.mxu0 0.0
  %1231 = vmatpush1.msra.mxu0 0.0
  %1232 = vmatprep.subr.mxu0 0.0
  %1233 = vmatpush1.msra.mxu0 0.0
  %1234 = vmatprep.subr.mxu0 0.0
  %1235 = vmatpush1.msra.mxu0 0.0
  %1236 = vmatprep.subr.mxu0 0.0
  %1237 = vmatpush1.msra.mxu0 0.0
  %1238 = vmatprep.subr.mxu0 0.0
  %1239 = vmatpush1.msra.mxu0 0.0
  %1240 = vmatprep.subr.mxu0 0.0
  %1241 = vmatpush1.msra.mxu0 0.0
  %1242 = vmatprep.subr.mxu0 0.0
  %1243 = vmatpush1.msra.mxu0 0.0
  %1244 = vmatprep.subr.mxu0 0.0
  %1245 = vmatpush1.msra.mxu0 0.0
  %1246 = vmatprep.subr.mxu0 0.0
  %1247 = vmatpush1.msra.mxu0 0.0
  %1248 = vmatprep.subr.mxu0 0.0
  %1249 = vmatpush1.msra.mxu0 0.0
  %1250 = vmatprep.subr.mxu0 0.0
  %1251 = vmatpush1.msra.mxu0 0.0
  %1252 = vmatprep.subr.mxu0 0.0
  %1253 = vmatpush1.msra.mxu0 0.0
  %1254 = vmatprep.subr.mxu0 0.0
  %1255 = vmatpush1.msra.mxu0 0.0
  %1256 = vmatprep.subr.mxu0 0.0
  %1257 = vmatpush1.msra.mxu0 0.0
  %1258 = vmatprep.subr.mxu0 0.0
  %1259 = vmatpush1.msra.mxu0 0.0
  %1260 = vmatprep.mubr.f32.mxu0 0.0
  %1261 = vmatmul.mubr.f32.gmra.mrb[0].mxu0 %v1194
  %v1262 = vpop.f32.mrb[0].mxu0
  %v1263 = vadd.f32 0.0, %v1262
  %v1264 = vpop.f32.mrb[0].mxu0
  %1265 = vdwg.mxu0
  %1266 = vmatprep.subr.mxu0 0.0
  %1267 = vmatpush1.msra.mxu0 %v47
  %1268 = vmatprep.subr.mxu0 0.0
  %1269 = vmatpush1.msra.mxu0 %v48
  %1270 = vmatprep.subr.mxu0 0.0
  %1271 = vmatpush1.msra.mxu0 %v49
  %1272 = vmatprep.subr.mxu0 0.0
  %1273 = vmatpush1.msra.mxu0 %v50
  %1274 = vmatprep.subr.mxu0 0.0
  %1275 = vmatpush1.msra.mxu0 0.0
  %1276 = vmatprep.subr.mxu0 0.0
  %1277 = vmatpush1.msra.mxu0 0.0
  %1278 = vmatprep.subr.mxu0 0.0
  %1279 = vmatpush1.msra.mxu0 0.0
  %1280 = vmatprep.subr.mxu0 0.0
  %1281 = vmatpush1.msra.mxu0 0.0
  %1282 = vmatprep.subr.mxu0 0.0
  %1283 = vmatpush1.msra.mxu0 0.0
  %1284 = vmatprep.subr.mxu0 0.0
  %1285 = vmatpush1.msra.mxu0 0.0
  %1286 = vmatprep.subr.mxu0 0.0
  %1287 = vmatpush1.msra.mxu0 0.0
  %1288 = vmatprep.subr.mxu0 0.0
  %1289 = vmatpush1.msra.mxu0 0.0
  %1290 = vmatprep.subr.mxu0 0.0
  %1291 = vmatpush1.msra.mxu0 0.0
  %1292 = vmatprep.subr.mxu0 0.0
  %1293 = vmatpush1.msra.mxu0 0.0
  %1294 = vmatprep.subr.mxu0 0.0
  %1295 = vmatpush1.msra.mxu0 0.0
  %1296 = vmatprep.subr.mxu0 0.0
  %1297 = vmatpush1.msra.mxu0 0.0
  %1298 = vmatprep.subr.mxu0 0.0
  %1299 = vmatpush1.msra.mxu0 0.0
  %1300 = vmatprep.subr.mxu0 0.0
  %1301 = vmatpush1.msra.mxu0 0.0
  %1302 = vmatprep.subr.mxu0 0.0
  %1303 = vmatpush1.msra.mxu0 0.0
  %1304 = vmatprep.subr.mxu0 0.0
  %1305 = vmatpush1.msra.mxu0 0.0
  %1306 = vmatprep.subr.mxu0 0.0
  %1307 = vmatpush1.msra.mxu0 0.0
  %1308 = vmatprep.subr.mxu0 0.0
  %1309 = vmatpush1.msra.mxu0 0.0
  %1310 = vmatprep.subr.mxu0 0.0
  %1311 = vmatpush1.msra.mxu0 0.0
  %1312 = vmatprep.subr.mxu0 0.0
  %1313 = vmatpush1.msra.mxu0 0.0
  %1314 = vmatprep.subr.mxu0 0.0
  %1315 = vmatpush1.msra.mxu0 0.0
  %1316 = vmatprep.subr.mxu0 0.0
  %1317 = vmatpush1.msra.mxu0 0.0
  %1318 = vmatprep.subr.mxu0 0.0
  %1319 = vmatpush1.msra.mxu0 0.0
  %1320 = vmatprep.subr.mxu0 0.0
  %1321 = vmatpush1.msra.mxu0 0.0
  %1322 = vmatprep.subr.mxu0 0.0
  %1323 = vmatpush1.msra.mxu0 0.0
  %1324 = vmatprep.subr.mxu0 0.0
  %1325 = vmatpush1.msra.mxu0 0.0
  %1326 = vmatprep.subr.mxu0 0.0
  %1327 = vmatpush1.msra.mxu0 0.0
  %1328 = vmatprep.subr.mxu0 0.0
  %1329 = vmatpush1.msra.mxu0 0.0
  %1330 = vmatprep.mubr.f32.mxu0 0.0
  %1331 = vmatmul.mubr.f32.gmra.mrb[0].mxu0 %v1194
  %v1332 = vpop.f32.mrb[0].mxu0
  %v1333 = vadd.f32 %v1154, %v1332
  %v1334 = vpop.f32.mrb[0].mxu0
  %1335 = vdwg.mxu0
  %v1336 = vxor.u32 %v1333, 2147483648
  %v1337 = vmul.f32 %v1336, 1.442695
  %v1338 = vpow.pop %v1337
  %v1339 = vadd.f32 %v1338, 1.0
  %v1340 = vrcp.pop %v1339
  %v1341 = vmul.f32 1.0, %v1340
  %v1342 = vtanh.pop %v1333
  %v1343 = vmul.f32 %v1341, %v1075
  %1345 = vrot.lane.b32.xlu0 %v1342, 32
  %v1346 = vpop.permute.xlu0 %1345
  %v1348 = vmul.f32 %v1341, %v1346
  %1350 = vrot.lane.b32.xlu0 %v1348, 32
  %v1351 = vpop.permute.xlu0 %1350
  %v1353 = vadd.f32 %v1343, %v1351
  %v1354 = vtanh.pop %v1353
  %1356 = vrot.lane.b32.xlu0 %v1354, 32
  %v1357 = vpop.permute.xlu0 %1356
  %v1359 = vmul.f32 %v1341, %v1357
  %1361 = vrot.lane.b32.xlu0 %v1359, 64
  %v1362 = vpop.permute.xlu0 %1361
  %v1363 = vsel %vm367, %v1362, 0
  %1365 = vmatprep.subr.mxu0 0.0
  %1366 = vmatpush1.msra.mxu0 %v51
  %1367 = vmatprep.subr.mxu0 0.0
  %1368 = vmatpush1.msra.mxu0 %v52
  %1369 = vmatprep.subr.mxu0 0.0
  %1370 = vmatpush1.msra.mxu0 %v53
  %1371 = vmatprep.subr.mxu0 0.0
  %1372 = vmatpush1.msra.mxu0 %v54
  %1373 = vmatprep.subr.mxu0 0.0
  %1374 = vmatpush1.msra.mxu0 0.0
  %1375 = vmatprep.subr.mxu0 0.0
  %1376 = vmatpush1.msra.mxu0 0.0
  %1377 = vmatprep.subr.mxu0 0.0
  %1378 = vmatpush1.msra.mxu0 0.0
  %1379 = vmatprep.subr.mxu0 0.0
  %1380 = vmatpush1.msra.mxu0 0.0
  %1381 = vmatprep.subr.mxu0 0.0
  %1382 = vmatpush1.msra.mxu0 0.0
  %1383 = vmatprep.subr.mxu0 0.0
  %1384 = vmatpush1.msra.mxu0 0.0
  %1385 = vmatprep.subr.mxu0 0.0
  %1386 = vmatpush1.msra.mxu0 0.0
  %1387 = vmatprep.subr.mxu0 0.0
  %1388 = vmatpush1.msra.mxu0 0.0
  %1389 = vmatprep.subr.mxu0 0.0
  %1390 = vmatpush1.msra.mxu0 0.0
  %1391 = vmatprep.subr.mxu0 0.0
  %1392 = vmatpush1.msra.mxu0 0.0
  %1393 = vmatprep.subr.mxu0 0.0
  %1394 = vmatpush1.msra.mxu0 0.0
  %1395 = vmatprep.subr.mxu0 0.0
  %1396 = vmatpush1.msra.mxu0 0.0
  %1397 = vmatprep.subr.mxu0 0.0
  %1398 = vmatpush1.msra.mxu0 0.0
  %1399 = vmatprep.subr.mxu0 0.0
  %1400 = vmatpush1.msra.mxu0 0.0
  %1401 = vmatprep.subr.mxu0 0.0
  %1402 = vmatpush1.msra.mxu0 0.0
  %1403 = vmatprep.subr.mxu0 0.0
  %1404 = vmatpush1.msra.mxu0 0.0
  %1405 = vmatprep.subr.mxu0 0.0
  %1406 = vmatpush1.msra.mxu0 0.0
  %1407 = vmatprep.subr.mxu0 0.0
  %1408 = vmatpush1.msra.mxu0 0.0
  %1409 = vmatprep.subr.mxu0 0.0
  %1410 = vmatpush1.msra.mxu0 0.0
  %1411 = vmatprep.subr.mxu0 0.0
  %1412 = vmatpush1.msra.mxu0 0.0
  %1413 = vmatprep.subr.mxu0 0.0
  %1414 = vmatpush1.msra.mxu0 0.0
  %1415 = vmatprep.subr.mxu0 0.0
  %1416 = vmatpush1.msra.mxu0 0.0
  %1417 = vmatprep.subr.mxu0 0.0
  %1418 = vmatpush1.msra.mxu0 0.0
  %1419 = vmatprep.subr.mxu0 0.0
  %1420 = vmatpush1.msra.mxu0 0.0
  %1421 = vmatprep.subr.mxu0 0.0
  %1422 = vmatpush1.msra.mxu0 0.0
  %1423 = vmatprep.subr.mxu0 0.0
  %1424 = vmatpush1.msra.mxu0 0.0
  %1425 = vmatprep.subr.mxu0 0.0
  %1426 = vmatpush1.msra.mxu0 0.0
  %1427 = vmatprep.subr.mxu0 0.0
  %1428 = vmatpush1.msra.mxu0 0.0
  %1429 = vmatprep.mubr.f32.mxu0 0.0
  %1430 = vmatmul.mubr.f32.gmra.mrb[0].mxu0 %v1363
  %v1431 = vpop.f32.mrb[0].mxu0
  %v1432 = vadd.f32 %v337, %v1431
  %v1433 = vpop.f32.mrb[0].mxu0
  %1434 = vdwg.mxu0
  %1436 = vst.msk [vmem:[#allocation2 + $0x4] sm:$0x3] %vm879, %v1362
  %v1438 = vrot.slane %v1263, 2
  %v1440 = vadd.f32 %v245, %v1438
  %v1441 = vxor.u32 %v1440, 2147483648
  %v1442 = vmul.f32 %v1441, 1.442695
  %v1443 = vpow.pop %v1442
  %v1444 = vadd.f32 %v1443, 1.0
  %v1445 = vrcp.pop %v1444
  %v1446 = vmul.f32 1.0, %v1445
  %v1447 = vtanh.pop %v1440
  %v1449 = vrot.slane %v1183, 6
  %v1451 = vmul.f32 %v1446, %v1449
  %1453 = vrot.lane.b32.xlu0 %v1447, 32
  %v1454 = vpop.permute.xlu0 %1453
  %v1456 = vmul.f32 %v1446, %v1454
  %1458 = vrot.lane.b32.xlu0 %v1456, 32
  %v1459 = vpop.permute.xlu0 %1458
  %v1461 = vadd.f32 %v1451, %v1459
  %v1462 = vtanh.pop %v1461
  %1464 = vrot.lane.b32.xlu0 %v1462, 32
  %v1465 = vpop.permute.xlu0 %1464
  %v1467 = vmul.f32 %v1446, %v1465
  %v1469 = vrot.slane %v1467, 6
  %1470 = vrot.lane.b32.xlu0 %v1469, 64
  %v1471 = vpop.permute.xlu0 %1470
  %v1472 = vsel %vm367, %v1471, 0
  %1474 = vmatprep.subr.mxu0 0.0
  %1475 = vmatpush1.msra.mxu0 %v329
  %1476 = vmatprep.subr.mxu0 0.0
  %1477 = vmatpush1.msra.mxu0 %v330
  %1478 = vmatprep.subr.mxu0 0.0
  %1479 = vmatpush1.msra.mxu0 %v331
  %1480 = vmatprep.subr.mxu0 0.0
  %1481 = vmatpush1.msra.mxu0 %v332
  %1482 = vmatprep.subr.mxu0 0.0
  %1483 = vmatpush1.msra.mxu0 0.0
  %1484 = vmatprep.subr.mxu0 0.0
  %1485 = vmatpush1.msra.mxu0 0.0
  %1486 = vmatprep.subr.mxu0 0.0
  %1487 = vmatpush1.msra.mxu0 0.0
  %1488 = vmatprep.subr.mxu0 0.0
  %1489 = vmatpush1.msra.mxu0 0.0
  %1490 = vmatprep.subr.mxu0 0.0
  %1491 = vmatpush1.msra.mxu0 0.0
  %1492 = vmatprep.subr.mxu0 0.0
  %1493 = vmatpush1.msra.mxu0 0.0
  %1494 = vmatprep.subr.mxu0 0.0
  %1495 = vmatpush1.msra.mxu0 0.0
  %1496 = vmatprep.subr.mxu0 0.0
  %1497 = vmatpush1.msra.mxu0 0.0
  %1498 = vmatprep.subr.mxu0 0.0
  %1499 = vmatpush1.msra.mxu0 0.0
  %1500 = vmatprep.subr.mxu0 0.0
  %1501 = vmatpush1.msra.mxu0 0.0
  %1502 = vmatprep.subr.mxu0 0.0
  %1503 = vmatpush1.msra.mxu0 0.0
  %1504 = vmatprep.subr.mxu0 0.0
  %1505 = vmatpush1.msra.mxu0 0.0
  %1506 = vmatprep.subr.mxu0 0.0
  %1507 = vmatpush1.msra.mxu0 0.0
  %1508 = vmatprep.subr.mxu0 0.0
  %1509 = vmatpush1.msra.mxu0 0.0
  %1510 = vmatprep.subr.mxu0 0.0
  %1511 = vmatpush1.msra.mxu0 0.0
  %1512 = vmatprep.subr.mxu0 0.0
  %1513 = vmatpush1.msra.mxu0 0.0
  %1514 = vmatprep.subr.mxu0 0.0
  %1515 = vmatpush1.msra.mxu0 0.0
  %1516 = vmatprep.subr.mxu0 0.0
  %1517 = vmatpush1.msra.mxu0 0.0
  %1518 = vmatprep.subr.mxu0 0.0
  %1519 = vmatpush1.msra.mxu0 0.0
  %1520 = vmatprep.subr.mxu0 0.0
  %1521 = vmatpush1.msra.mxu0 0.0
  %1522 = vmatprep.subr.mxu0 0.0
  %1523 = vmatpush1.msra.mxu0 0.0
  %1524 = vmatprep.subr.mxu0 0.0
  %1525 = vmatpush1.msra.mxu0 0.0
  %1526 = vmatprep.subr.mxu0 0.0
  %1527 = vmatpush1.msra.mxu0 0.0
  %1528 = vmatprep.subr.mxu0 0.0
  %1529 = vmatpush1.msra.mxu0 0.0
  %1530 = vmatprep.subr.mxu0 0.0
  %1531 = vmatpush1.msra.mxu0 0.0
  %1532 = vmatprep.subr.mxu0 0.0
  %1533 = vmatpush1.msra.mxu0 0.0
  %1534 = vmatprep.subr.mxu0 0.0
  %1535 = vmatpush1.msra.mxu0 0.0
  %1536 = vmatprep.subr.mxu0 0.0
  %1537 = vmatpush1.msra.mxu0 0.0
  %1538 = vmatprep.mubr.f32.mxu0 0.0
  %1539 = vmatmul.mubr.f32.gmra.mrb[0].mxu0 %v1472
  %v1540 = vpop.f32.mrb[0].mxu0
  %v1541 = vadd.f32 0.0, %v1540
  %v1542 = vpop.f32.mrb[0].mxu0
  %1543 = vdwg.mxu0
  %1544 = vmatprep.subr.mxu0 0.0
  %1545 = vmatpush1.msra.mxu0 %v47
  %1546 = vmatprep.subr.mxu0 0.0
  %1547 = vmatpush1.msra.mxu0 %v48
  %1548 = vmatprep.subr.mxu0 0.0
  %1549 = vmatpush1.msra.mxu0 %v49
  %1550 = vmatprep.subr.mxu0 0.0
  %1551 = vmatpush1.msra.mxu0 %v50
  %1552 = vmatprep.subr.mxu0 0.0
  %1553 = vmatpush1.msra.mxu0 0.0
  %1554 = vmatprep.subr.mxu0 0.0
  %1555 = vmatpush1.msra.mxu0 0.0
  %1556 = vmatprep.subr.mxu0 0.0
  %1557 = vmatpush1.msra.mxu0 0.0
  %1558 = vmatprep.subr.mxu0 0.0
  %1559 = vmatpush1.msra.mxu0 0.0
  %1560 = vmatprep.subr.mxu0 0.0
  %1561 = vmatpush1.msra.mxu0 0.0
  %1562 = vmatprep.subr.mxu0 0.0
  %1563 = vmatpush1.msra.mxu0 0.0
  %1564 = vmatprep.subr.mxu0 0.0
  %1565 = vmatpush1.msra.mxu0 0.0
  %1566 = vmatprep.subr.mxu0 0.0
  %1567 = vmatpush1.msra.mxu0 0.0
  %1568 = vmatprep.subr.mxu0 0.0
  %1569 = vmatpush1.msra.mxu0 0.0
  %1570 = vmatprep.subr.mxu0 0.0
  %1571 = vmatpush1.msra.mxu0 0.0
  %1572 = vmatprep.subr.mxu0 0.0
  %1573 = vmatpush1.msra.mxu0 0.0
  %1574 = vmatprep.subr.mxu0 0.0
  %1575 = vmatpush1.msra.mxu0 0.0
  %1576 = vmatprep.subr.mxu0 0.0
  %1577 = vmatpush1.msra.mxu0 0.0
  %1578 = vmatprep.subr.mxu0 0.0
  %1579 = vmatpush1.msra.mxu0 0.0
  %1580 = vmatprep.subr.mxu0 0.0
  %1581 = vmatpush1.msra.mxu0 0.0
  %1582 = vmatprep.subr.mxu0 0.0
  %1583 = vmatpush1.msra.mxu0 0.0
  %1584 = vmatprep.subr.mxu0 0.0
  %1585 = vmatpush1.msra.mxu0 0.0
  %1586 = vmatprep.subr.mxu0 0.0
  %1587 = vmatpush1.msra.mxu0 0.0
  %1588 = vmatprep.subr.mxu0 0.0
  %1589 = vmatpush1.msra.mxu0 0.0
  %1590 = vmatprep.subr.mxu0 0.0
  %1591 = vmatpush1.msra.mxu0 0.0
  %1592 = vmatprep.subr.mxu0 0.0
  %1593 = vmatpush1.msra.mxu0 0.0
  %1594 = vmatprep.subr.mxu0 0.0
  %1595 = vmatpush1.msra.mxu0 0.0
  %1596 = vmatprep.subr.mxu0 0.0
  %1597 = vmatpush1.msra.mxu0 0.0
  %1598 = vmatprep.subr.mxu0 0.0
  %1599 = vmatpush1.msra.mxu0 0.0
  %1600 = vmatprep.subr.mxu0 0.0
  %1601 = vmatpush1.msra.mxu0 0.0
  %1602 = vmatprep.subr.mxu0 0.0
  %1603 = vmatpush1.msra.mxu0 0.0
  %1604 = vmatprep.subr.mxu0 0.0
  %1605 = vmatpush1.msra.mxu0 0.0
  %1606 = vmatprep.subr.mxu0 0.0
  %1607 = vmatpush1.msra.mxu0 0.0
  %1608 = vmatprep.mubr.f32.mxu0 0.0
  %1609 = vmatmul.mubr.f32.gmra.mrb[0].mxu0 %v1472
  %v1610 = vpop.f32.mrb[0].mxu0
  %v1611 = vadd.f32 %v1432, %v1610
  %v1612 = vpop.f32.mrb[0].mxu0
  %1613 = vdwg.mxu0
  %v1614 = vxor.u32 %v1611, 2147483648
  %v1615 = vmul.f32 %v1614, 1.442695
  %v1616 = vpow.pop %v1615
  %v1617 = vadd.f32 %v1616, 1.0
  %v1618 = vrcp.pop %v1617
  %v1619 = vmul.f32 1.0, %v1618
  %v1620 = vtanh.pop %v1611
  %v1621 = vmul.f32 %v1619, %v1353
  %1623 = vrot.lane.b32.xlu0 %v1620, 32
  %v1624 = vpop.permute.xlu0 %1623
  %v1626 = vmul.f32 %v1619, %v1624
  %1628 = vrot.lane.b32.xlu0 %v1626, 32
  %v1629 = vpop.permute.xlu0 %1628
  %v1631 = vadd.f32 %v1621, %v1629
  %v1632 = vtanh.pop %v1631
  %1634 = vrot.lane.b32.xlu0 %v1632, 32
  %v1635 = vpop.permute.xlu0 %1634
  %v1637 = vmul.f32 %v1619, %v1635
  %1639 = vrot.lane.b32.xlu0 %v1637, 64
  %v1640 = vpop.permute.xlu0 %1639
  %v1641 = vsel %vm367, %v1640, 0
  %1643 = vmatprep.subr.mxu0 0.0
  %1644 = vmatpush1.msra.mxu0 %v51
  %1645 = vmatprep.subr.mxu0 0.0
  %1646 = vmatpush1.msra.mxu0 %v52
  %1647 = vmatprep.subr.mxu0 0.0
  %1648 = vmatpush1.msra.mxu0 %v53
  %1649 = vmatprep.subr.mxu0 0.0
  %1650 = vmatpush1.msra.mxu0 %v54
  %1651 = vmatprep.subr.mxu0 0.0
  %1652 = vmatpush1.msra.mxu0 0.0
  %1653 = vmatprep.subr.mxu0 0.0
  %1654 = vmatpush1.msra.mxu0 0.0
  %1655 = vmatprep.subr.mxu0 0.0
  %1656 = vmatpush1.msra.mxu0 0.0
  %1657 = vmatprep.subr.mxu0 0.0
  %1658 = vmatpush1.msra.mxu0 0.0
  %1659 = vmatprep.subr.mxu0 0.0
  %1660 = vmatpush1.msra.mxu0 0.0
  %1661 = vmatprep.subr.mxu0 0.0
  %1662 = vmatpush1.msra.mxu0 0.0
  %1663 = vmatprep.subr.mxu0 0.0
  %1664 = vmatpush1.msra.mxu0 0.0
  %1665 = vmatprep.subr.mxu0 0.0
  %1666 = vmatpush1.msra.mxu0 0.0
  %1667 = vmatprep.subr.mxu0 0.0
  %1668 = vmatpush1.msra.mxu0 0.0
  %1669 = vmatprep.subr.mxu0 0.0
  %1670 = vmatpush1.msra.mxu0 0.0
  %1671 = vmatprep.subr.mxu0 0.0
  %1672 = vmatpush1.msra.mxu0 0.0
  %1673 = vmatprep.subr.mxu0 0.0
  %1674 = vmatpush1.msra.mxu0 0.0
  %1675 = vmatprep.subr.mxu0 0.0
  %1676 = vmatpush1.msra.mxu0 0.0
  %1677 = vmatprep.subr.mxu0 0.0
  %1678 = vmatpush1.msra.mxu0 0.0
  %1679 = vmatprep.subr.mxu0 0.0
  %1680 = vmatpush1.msra.mxu0 0.0
  %1681 = vmatprep.subr.mxu0 0.0
  %1682 = vmatpush1.msra.mxu0 0.0
  %1683 = vmatprep.subr.mxu0 0.0
  %1684 = vmatpush1.msra.mxu0 0.0
  %1685 = vmatprep.subr.mxu0 0.0
  %1686 = vmatpush1.msra.mxu0 0.0
  %1687 = vmatprep.subr.mxu0 0.0
  %1688 = vmatpush1.msra.mxu0 0.0
  %1689 = vmatprep.subr.mxu0 0.0
  %1690 = vmatpush1.msra.mxu0 0.0
  %1691 = vmatprep.subr.mxu0 0.0
  %1692 = vmatpush1.msra.mxu0 0.0
  %1693 = vmatprep.subr.mxu0 0.0
  %1694 = vmatpush1.msra.mxu0 0.0
  %1695 = vmatprep.subr.mxu0 0.0
  %1696 = vmatpush1.msra.mxu0 0.0
  %1697 = vmatprep.subr.mxu0 0.0
  %1698 = vmatpush1.msra.mxu0 0.0
  %1699 = vmatprep.subr.mxu0 0.0
  %1700 = vmatpush1.msra.mxu0 0.0
  %1701 = vmatprep.subr.mxu0 0.0
  %1702 = vmatpush1.msra.mxu0 0.0
  %1703 = vmatprep.subr.mxu0 0.0
  %1704 = vmatpush1.msra.mxu0 0.0
  %1705 = vmatprep.subr.mxu0 0.0
  %1706 = vmatpush1.msra.mxu0 0.0
  %1707 = vmatprep.mubr.f32.mxu0 0.0
  %1708 = vmatmul.mubr.f32.gmra.mrb[0].mxu0 %v1641
  %v1709 = vpop.f32.mrb[0].mxu0
  %v1710 = vadd.f32 %v337, %v1709
  %v1711 = vpop.f32.mrb[0].mxu0
  %1712 = vdwg.mxu0
  %1714 = vst.msk [vmem:[#allocation2 + $0x6] sm:$0x3] %vm879, %v1640
  %v1715 = vadd.f32 %v250, %v1541
  %v1716 = vxor.u32 %v1715, 2147483648
  %v1717 = vmul.f32 %v1716, 1.442695
  %v1718 = vpow.pop %v1717
  %v1719 = vadd.f32 %v1718, 1.0
  %v1720 = vrcp.pop %v1719
  %v1721 = vmul.f32 1.0, %v1720
  %v1722 = vtanh.pop %v1715
  %v1724 = vrot.slane %v1461, 6
  %v1726 = vmul.f32 %v1721, %v1724
  %1728 = vrot.lane.b32.xlu0 %v1722, 32
  %v1729 = vpop.permute.xlu0 %1728
  %v1731 = vmul.f32 %v1721, %v1729
  %1733 = vrot.lane.b32.xlu0 %v1731, 32
  %v1734 = vpop.permute.xlu0 %1733
  %v1736 = vadd.f32 %v1726, %v1734
  %v1737 = vtanh.pop %v1736
  %1739 = vrot.lane.b32.xlu0 %v1737, 32
  %v1740 = vpop.permute.xlu0 %1739
  %v1742 = vmul.f32 %v1721, %v1740
  %1744 = vrot.lane.b32.xlu0 %v1742, 64
  %v1745 = vpop.permute.xlu0 %1744
  %v1746 = vsel %vm367, %v1745, 0
  %1748 = vmatprep.subr.mxu0 0.0
  %1749 = vmatpush1.msra.mxu0 %v329
  %1750 = vmatprep.subr.mxu0 0.0
  %1751 = vmatpush1.msra.mxu0 %v330
  %1752 = vmatprep.subr.mxu0 0.0
  %1753 = vmatpush1.msra.mxu0 %v331
  %1754 = vmatprep.subr.mxu0 0.0
  %1755 = vmatpush1.msra.mxu0 %v332
  %1756 = vmatprep.subr.mxu0 0.0
  %1757 = vmatpush1.msra.mxu0 0.0
  %1758 = vmatprep.subr.mxu0 0.0
  %1759 = vmatpush1.msra.mxu0 0.0
  %1760 = vmatprep.subr.mxu0 0.0
  %1761 = vmatpush1.msra.mxu0 0.0
  %1762 = vmatprep.subr.mxu0 0.0
  %1763 = vmatpush1.msra.mxu0 0.0
  %1764 = vmatprep.subr.mxu0 0.0
  %1765 = vmatpush1.msra.mxu0 0.0
  %1766 = vmatprep.subr.mxu0 0.0
  %1767 = vmatpush1.msra.mxu0 0.0
  %1768 = vmatprep.subr.mxu0 0.0
  %1769 = vmatpush1.msra.mxu0 0.0
  %1770 = vmatprep.subr.mxu0 0.0
  %1771 = vmatpush1.msra.mxu0 0.0
  %1772 = vmatprep.subr.mxu0 0.0
  %1773 = vmatpush1.msra.mxu0 0.0
  %1774 = vmatprep.subr.mxu0 0.0
  %1775 = vmatpush1.msra.mxu0 0.0
  %1776 = vmatprep.subr.mxu0 0.0
  %1777 = vmatpush1.msra.mxu0 0.0
  %1778 = vmatprep.subr.mxu0 0.0
  %1779 = vmatpush1.msra.mxu0 0.0
  %1780 = vmatprep.subr.mxu0 0.0
  %1781 = vmatpush1.msra.mxu0 0.0
  %1782 = vmatprep.subr.mxu0 0.0
  %1783 = vmatpush1.msra.mxu0 0.0
  %1784 = vmatprep.subr.mxu0 0.0
  %1785 = vmatpush1.msra.mxu0 0.0
  %1786 = vmatprep.subr.mxu0 0.0
  %1787 = vmatpush1.msra.mxu0 0.0
  %1788 = vmatprep.subr.mxu0 0.0
  %1789 = vmatpush1.msra.mxu0 0.0
  %1790 = vmatprep.subr.mxu0 0.0
  %1791 = vmatpush1.msra.mxu0 0.0
  %1792 = vmatprep.subr.mxu0 0.0
  %1793 = vmatpush1.msra.mxu0 0.0
  %1794 = vmatprep.subr.mxu0 0.0
  %1795 = vmatpush1.msra.mxu0 0.0
  %1796 = vmatprep.subr.mxu0 0.0
  %1797 = vmatpush1.msra.mxu0 0.0
  %1798 = vmatprep.subr.mxu0 0.0
  %1799 = vmatpush1.msra.mxu0 0.0
  %1800 = vmatprep.subr.mxu0 0.0
  %1801 = vmatpush1.msra.mxu0 0.0
  %1802 = vmatprep.subr.mxu0 0.0
  %1803 = vmatpush1.msra.mxu0 0.0
  %1804 = vmatprep.subr.mxu0 0.0
  %1805 = vmatpush1.msra.mxu0 0.0
  %1806 = vmatprep.subr.mxu0 0.0
  %1807 = vmatpush1.msra.mxu0 0.0
  %1808 = vmatprep.subr.mxu0 0.0
  %1809 = vmatpush1.msra.mxu0 0.0
  %1810 = vmatprep.subr.mxu0 0.0
  %1811 = vmatpush1.msra.mxu0 0.0
  %1812 = vmatprep.mubr.f32.mxu0 0.0
  %1813 = vmatmul.mubr.f32.gmra.mrb[0].mxu0 %v1746
  %v1814 = vpop.f32.mrb[0].mxu0
  %v1815 = vadd.f32 0.0, %v1814
  %v1816 = vpop.f32.mrb[0].mxu0
  %1817 = vdwg.mxu0
  %1818 = vmatprep.subr.mxu0 0.0
  %1819 = vmatpush1.msra.mxu0 %v47
  %1820 = vmatprep.subr.mxu0 0.0
  %1821 = vmatpush1.msra.mxu0 %v48
  %1822 = vmatprep.subr.mxu0 0.0
  %1823 = vmatpush1.msra.mxu0 %v49
  %1824 = vmatprep.subr.mxu0 0.0
  %1825 = vmatpush1.msra.mxu0 %v50
  %1826 = vmatprep.subr.mxu0 0.0
  %1827 = vmatpush1.msra.mxu0 0.0
  %1828 = vmatprep.subr.mxu0 0.0
  %1829 = vmatpush1.msra.mxu0 0.0
  %1830 = vmatprep.subr.mxu0 0.0
  %1831 = vmatpush1.msra.mxu0 0.0
  %1832 = vmatprep.subr.mxu0 0.0
  %1833 = vmatpush1.msra.mxu0 0.0
  %1834 = vmatprep.subr.mxu0 0.0
  %1835 = vmatpush1.msra.mxu0 0.0
  %1836 = vmatprep.subr.mxu0 0.0
  %1837 = vmatpush1.msra.mxu0 0.0
  %1838 = vmatprep.subr.mxu0 0.0
  %1839 = vmatpush1.msra.mxu0 0.0
  %1840 = vmatprep.subr.mxu0 0.0
  %1841 = vmatpush1.msra.mxu0 0.0
  %1842 = vmatprep.subr.mxu0 0.0
  %1843 = vmatpush1.msra.mxu0 0.0
  %1844 = vmatprep.subr.mxu0 0.0
  %1845 = vmatpush1.msra.mxu0 0.0
  %1846 = vmatprep.subr.mxu0 0.0
  %1847 = vmatpush1.msra.mxu0 0.0
  %1848 = vmatprep.subr.mxu0 0.0
  %1849 = vmatpush1.msra.mxu0 0.0
  %1850 = vmatprep.subr.mxu0 0.0
  %1851 = vmatpush1.msra.mxu0 0.0
  %1852 = vmatprep.subr.mxu0 0.0
  %1853 = vmatpush1.msra.mxu0 0.0
  %1854 = vmatprep.subr.mxu0 0.0
  %1855 = vmatpush1.msra.mxu0 0.0
  %1856 = vmatprep.subr.mxu0 0.0
  %1857 = vmatpush1.msra.mxu0 0.0
  %1858 = vmatprep.subr.mxu0 0.0
  %1859 = vmatpush1.msra.mxu0 0.0
  %1860 = vmatprep.subr.mxu0 0.0
  %1861 = vmatpush1.msra.mxu0 0.0
  %1862 = vmatprep.subr.mxu0 0.0
  %1863 = vmatpush1.msra.mxu0 0.0
  %1864 = vmatprep.subr.mxu0 0.0
  %1865 = vmatpush1.msra.mxu0 0.0
  %1866 = vmatprep.subr.mxu0 0.0
  %1867 = vmatpush1.msra.mxu0 0.0
  %1868 = vmatprep.subr.mxu0 0.0
  %1869 = vmatpush1.msra.mxu0 0.0
  %1870 = vmatprep.subr.mxu0 0.0
  %1871 = vmatpush1.msra.mxu0 0.0
  %1872 = vmatprep.subr.mxu0 0.0
  %1873 = vmatpush1.msra.mxu0 0.0
  %1874 = vmatprep.subr.mxu0 0.0
  %1875 = vmatpush1.msra.mxu0 0.0
  %1876 = vmatprep.subr.mxu0 0.0
  %1877 = vmatpush1.msra.mxu0 0.0
  %1878 = vmatprep.subr.mxu0 0.0
  %1879 = vmatpush1.msra.mxu0 0.0
  %1880 = vmatprep.subr.mxu0 0.0
  %1881 = vmatpush1.msra.mxu0 0.0
  %1882 = vmatprep.mubr.f32.mxu0 0.0
  %1883 = vmatmul.mubr.f32.gmra.mrb[0].mxu0 %v1746
  %v1884 = vpop.f32.mrb[0].mxu0
  %v1885 = vadd.f32 %v1710, %v1884
  %v1886 = vpop.f32.mrb[0].mxu0
  %1887 = vdwg.mxu0
  %v1888 = vxor.u32 %v1885, 2147483648
  %v1889 = vmul.f32 %v1888, 1.442695
  %v1890 = vpow.pop %v1889
  %v1891 = vadd.f32 %v1890, 1.0
  %v1892 = vrcp.pop %v1891
  %v1893 = vmul.f32 1.0, %v1892
  %v1894 = vtanh.pop %v1885
  %v1895 = vmul.f32 %v1893, %v1631
  %1897 = vrot.lane.b32.xlu0 %v1894, 32
  %v1898 = vpop.permute.xlu0 %1897
  %v1900 = vmul.f32 %v1893, %v1898
  %1902 = vrot.lane.b32.xlu0 %v1900, 32
  %v1903 = vpop.permute.xlu0 %1902
  %v1905 = vadd.f32 %v1895, %v1903
  %v1906 = vtanh.pop %v1905
  %1908 = vrot.lane.b32.xlu0 %v1906, 32
  %v1909 = vpop.permute.xlu0 %1908
  %v1911 = vmul.f32 %v1893, %v1909
  %1913 = vrot.lane.b32.xlu0 %v1911, 64
  %v1914 = vpop.permute.xlu0 %1913
  %v1915 = vsel %vm367, %v1914, 0
  %1917 = vmatprep.subr.mxu0 0.0
  %1918 = vmatpush1.msra.mxu0 %v51
  %1919 = vmatprep.subr.mxu0 0.0
  %1920 = vmatpush1.msra.mxu0 %v52
  %1921 = vmatprep.subr.mxu0 0.0
  %1922 = vmatpush1.msra.mxu0 %v53
  %1923 = vmatprep.subr.mxu0 0.0
  %1924 = vmatpush1.msra.mxu0 %v54
  %1925 = vmatprep.subr.mxu0 0.0
  %1926 = vmatpush1.msra.mxu0 0.0
  %1927 = vmatprep.subr.mxu0 0.0
  %1928 = vmatpush1.msra.mxu0 0.0
  %1929 = vmatprep.subr.mxu0 0.0
  %1930 = vmatpush1.msra.mxu0 0.0
  %1931 = vmatprep.subr.mxu0 0.0
  %1932 = vmatpush1.msra.mxu0 0.0
  %1933 = vmatprep.subr.mxu0 0.0
  %1934 = vmatpush1.msra.mxu0 0.0
  %1935 = vmatprep.subr.mxu0 0.0
  %1936 = vmatpush1.msra.mxu0 0.0
  %1937 = vmatprep.subr.mxu0 0.0
  %1938 = vmatpush1.msra.mxu0 0.0
  %1939 = vmatprep.subr.mxu0 0.0
  %1940 = vmatpush1.msra.mxu0 0.0
  %1941 = vmatprep.subr.mxu0 0.0
  %1942 = vmatpush1.msra.mxu0 0.0
  %1943 = vmatprep.subr.mxu0 0.0
  %1944 = vmatpush1.msra.mxu0 0.0
  %1945 = vmatprep.subr.mxu0 0.0
  %1946 = vmatpush1.msra.mxu0 0.0
  %1947 = vmatprep.subr.mxu0 0.0
  %1948 = vmatpush1.msra.mxu0 0.0
  %1949 = vmatprep.subr.mxu0 0.0
  %1950 = vmatpush1.msra.mxu0 0.0
  %1951 = vmatprep.subr.mxu0 0.0
  %1952 = vmatpush1.msra.mxu0 0.0
  %1953 = vmatprep.subr.mxu0 0.0
  %1954 = vmatpush1.msra.mxu0 0.0
  %1955 = vmatprep.subr.mxu0 0.0
  %1956 = vmatpush1.msra.mxu0 0.0
  %1957 = vmatprep.subr.mxu0 0.0
  %1958 = vmatpush1.msra.mxu0 0.0
  %1959 = vmatprep.subr.mxu0 0.0
  %1960 = vmatpush1.msra.mxu0 0.0
  %1961 = vmatprep.subr.mxu0 0.0
  %1962 = vmatpush1.msra.mxu0 0.0
  %1963 = vmatprep.subr.mxu0 0.0
  %1964 = vmatpush1.msra.mxu0 0.0
  %1965 = vmatprep.subr.mxu0 0.0
  %1966 = vmatpush1.msra.mxu0 0.0
  %1967 = vmatprep.subr.mxu0 0.0
  %1968 = vmatpush1.msra.mxu0 0.0
  %1969 = vmatprep.subr.mxu0 0.0
  %1970 = vmatpush1.msra.mxu0 0.0
  %1971 = vmatprep.subr.mxu0 0.0
  %1972 = vmatpush1.msra.mxu0 0.0
  %1973 = vmatprep.subr.mxu0 0.0
  %1974 = vmatpush1.msra.mxu0 0.0
  %1975 = vmatprep.subr.mxu0 0.0
  %1976 = vmatpush1.msra.mxu0 0.0
  %1977 = vmatprep.subr.mxu0 0.0
  %1978 = vmatpush1.msra.mxu0 0.0
  %1979 = vmatprep.subr.mxu0 0.0
  %1980 = vmatpush1.msra.mxu0 0.0
  %1981 = vmatprep.mubr.f32.mxu0 0.0
  %1982 = vmatmul.mubr.f32.gmra.mrb[0].mxu0 %v1915
  %v1983 = vpop.f32.mrb[0].mxu0
  %v1984 = vadd.f32 %v337, %v1983
  %v1985 = vpop.f32.mrb[0].mxu0
  %1986 = vdwg.mxu0
  %1988 = vst.msk [vmem:[#allocation2 + $0x8] sm:$0x3] %vm879, %v1914
  %v1990 = vrot.slane %v1815, 6
  %v1992 = vadd.f32 %v250, %v1990
  %v1993 = vxor.u32 %v1992, 2147483648
  %v1994 = vmul.f32 %v1993, 1.442695
  %v1995 = vpow.pop %v1994
  %v1996 = vadd.f32 %v1995, 1.0
  %v1997 = vrcp.pop %v1996
  %v1998 = vmul.f32 1.0, %v1997
  %v1999 = vtanh.pop %v1992
  %v2001 = vrot.slane %v1736, 6
  %v2003 = vmul.f32 %v1998, %v2001
  %2005 = vrot.lane.b32.xlu0 %v1999, 32
  %v2006 = vpop.permute.xlu0 %2005
  %v2008 = vmul.f32 %v1998, %v2006
  %2010 = vrot.lane.b32.xlu0 %v2008, 32
  %v2011 = vpop.permute.xlu0 %2010
  %v2013 = vadd.f32 %v2003, %v2011
  %v2014 = vtanh.pop %v2013
  %2016 = vrot.lane.b32.xlu0 %v2014, 32
  %v2017 = vpop.permute.xlu0 %2016
  %v2019 = vmul.f32 %v1998, %v2017
  %v2021 = vrot.slane %v2019, 2
  %2022 = vrot.lane.b32.xlu0 %v2021, 64
  %v2023 = vpop.permute.xlu0 %2022
  %v2024 = vsel %vm367, %v2023, 0
  %2026 = vmatprep.subr.mxu0 0.0
  %2027 = vmatpush1.msra.mxu0 %v329
  %2028 = vmatprep.subr.mxu0 0.0
  %2029 = vmatpush1.msra.mxu0 %v330
  %2030 = vmatprep.subr.mxu0 0.0
  %2031 = vmatpush1.msra.mxu0 %v331
  %2032 = vmatprep.subr.mxu0 0.0
  %2033 = vmatpush1.msra.mxu0 %v332
  %2034 = vmatprep.subr.mxu0 0.0
  %2035 = vmatpush1.msra.mxu0 0.0
  %2036 = vmatprep.subr.mxu0 0.0
  %2037 = vmatpush1.msra.mxu0 0.0
  %2038 = vmatprep.subr.mxu0 0.0
  %2039 = vmatpush1.msra.mxu0 0.0
  %2040 = vmatprep.subr.mxu0 0.0
  %2041 = vmatpush1.msra.mxu0 0.0
  %2042 = vmatprep.subr.mxu0 0.0
  %2043 = vmatpush1.msra.mxu0 0.0
  %2044 = vmatprep.subr.mxu0 0.0
  %2045 = vmatpush1.msra.mxu0 0.0
  %2046 = vmatprep.subr.mxu0 0.0
  %2047 = vmatpush1.msra.mxu0 0.0
  %2048 = vmatprep.subr.mxu0 0.0
  %2049 = vmatpush1.msra.mxu0 0.0
  %2050 = vmatprep.subr.mxu0 0.0
  %2051 = vmatpush1.msra.mxu0 0.0
  %2052 = vmatprep.subr.mxu0 0.0
  %2053 = vmatpush1.msra.mxu0 0.0
  %2054 = vmatprep.subr.mxu0 0.0
  %2055 = vmatpush1.msra.mxu0 0.0
  %2056 = vmatprep.subr.mxu0 0.0
  %2057 = vmatpush1.msra.mxu0 0.0
  %2058 = vmatprep.subr.mxu0 0.0
  %2059 = vmatpush1.msra.mxu0 0.0
  %2060 = vmatprep.subr.mxu0 0.0
  %2061 = vmatpush1.msra.mxu0 0.0
  %2062 = vmatprep.subr.mxu0 0.0
  %2063 = vmatpush1.msra.mxu0 0.0
  %2064 = vmatprep.subr.mxu0 0.0
  %2065 = vmatpush1.msra.mxu0 0.0
  %2066 = vmatprep.subr.mxu0 0.0
  %2067 = vmatpush1.msra.mxu0 0.0
  %2068 = vmatprep.subr.mxu0 0.0
  %2069 = vmatpush1.msra.mxu0 0.0
  %2070 = vmatprep.subr.mxu0 0.0
  %2071 = vmatpush1.msra.mxu0 0.0
  %2072 = vmatprep.subr.mxu0 0.0
  %2073 = vmatpush1.msra.mxu0 0.0
  %2074 = vmatprep.subr.mxu0 0.0
  %2075 = vmatpush1.msra.mxu0 0.0
  %2076 = vmatprep.subr.mxu0 0.0
  %2077 = vmatpush1.msra.mxu0 0.0
  %2078 = vmatprep.subr.mxu0 0.0
  %2079 = vmatpush1.msra.mxu0 0.0
  %2080 = vmatprep.subr.mxu0 0.0
  %2081 = vmatpush1.msra.mxu0 0.0
  %2082 = vmatprep.subr.mxu0 0.0
  %2083 = vmatpush1.msra.mxu0 0.0
  %2084 = vmatprep.subr.mxu0 0.0
  %2085 = vmatpush1.msra.mxu0 0.0
  %2086 = vmatprep.subr.mxu0 0.0
  %2087 = vmatpush1.msra.mxu0 0.0
  %2088 = vmatprep.subr.mxu0 0.0
  %2089 = vmatpush1.msra.mxu0 0.0
  %2090 = vmatprep.mubr.f32.mxu0 0.0
  %2091 = vmatmul.mubr.f32.gmra.mrb[0].mxu0 %v2024
  %v2092 = vpop.f32.mrb[0].mxu0
  %v2093 = vadd.f32 0.0, %v2092
  %v2094 = vpop.f32.mrb[0].mxu0
  %2095 = vdwg.mxu0
  %2096 = vmatprep.subr.mxu0 0.0
  %2097 = vmatpush1.msra.mxu0 %v47
  %2098 = vmatprep.subr.mxu0 0.0
  %2099 = vmatpush1.msra.mxu0 %v48
  %2100 = vmatprep.subr.mxu0 0.0
  %2101 = vmatpush1.msra.mxu0 %v49
  %2102 = vmatprep.subr.mxu0 0.0
  %2103 = vmatpush1.msra.mxu0 %v50
  %2104 = vmatprep.subr.mxu0 0.0
  %2105 = vmatpush1.msra.mxu0 0.0
  %2106 = vmatprep.subr.mxu0 0.0
  %2107 = vmatpush1.msra.mxu0 0.0
  %2108 = vmatprep.subr.mxu0 0.0
  %2109 = vmatpush1.msra.mxu0 0.0
  %2110 = vmatprep.subr.mxu0 0.0
  %2111 = vmatpush1.msra.mxu0 0.0
  %2112 = vmatprep.subr.mxu0 0.0
  %2113 = vmatpush1.msra.mxu0 0.0
  %2114 = vmatprep.subr.mxu0 0.0
  %2115 = vmatpush1.msra.mxu0 0.0
  %2116 = vmatprep.subr.mxu0 0.0
  %2117 = vmatpush1.msra.mxu0 0.0
  %2118 = vmatprep.subr.mxu0 0.0
  %2119 = vmatpush1.msra.mxu0 0.0
  %2120 = vmatprep.subr.mxu0 0.0
  %2121 = vmatpush1.msra.mxu0 0.0
  %2122 = vmatprep.subr.mxu0 0.0
  %2123 = vmatpush1.msra.mxu0 0.0
  %2124 = vmatprep.subr.mxu0 0.0
  %2125 = vmatpush1.msra.mxu0 0.0
  %2126 = vmatprep.subr.mxu0 0.0
  %2127 = vmatpush1.msra.mxu0 0.0
  %2128 = vmatprep.subr.mxu0 0.0
  %2129 = vmatpush1.msra.mxu0 0.0
  %2130 = vmatprep.subr.mxu0 0.0
  %2131 = vmatpush1.msra.mxu0 0.0
  %2132 = vmatprep.subr.mxu0 0.0
  %2133 = vmatpush1.msra.mxu0 0.0
  %2134 = vmatprep.subr.mxu0 0.0
  %2135 = vmatpush1.msra.mxu0 0.0
  %2136 = vmatprep.subr.mxu0 0.0
  %2137 = vmatpush1.msra.mxu0 0.0
  %2138 = vmatprep.subr.mxu0 0.0
  %2139 = vmatpush1.msra.mxu0 0.0
  %2140 = vmatprep.subr.mxu0 0.0
  %2141 = vmatpush1.msra.mxu0 0.0
  %2142 = vmatprep.subr.mxu0 0.0
  %2143 = vmatpush1.msra.mxu0 0.0
  %2144 = vmatprep.subr.mxu0 0.0
  %2145 = vmatpush1.msra.mxu0 0.0
  %2146 = vmatprep.subr.mxu0 0.0
  %2147 = vmatpush1.msra.mxu0 0.0
  %2148 = vmatprep.subr.mxu0 0.0
  %2149 = vmatpush1.msra.mxu0 0.0
  %2150 = vmatprep.subr.mxu0 0.0
  %2151 = vmatpush1.msra.mxu0 0.0
  %2152 = vmatprep.subr.mxu0 0.0
  %2153 = vmatpush1.msra.mxu0 0.0
  %2154 = vmatprep.subr.mxu0 0.0
  %2155 = vmatpush1.msra.mxu0 0.0
  %2156 = vmatprep.subr.mxu0 0.0
  %2157 = vmatpush1.msra.mxu0 0.0
  %2158 = vmatprep.subr.mxu0 0.0
  %2159 = vmatpush1.msra.mxu0 0.0
  %2160 = vmatprep.mubr.f32.mxu0 0.0
  %2161 = vmatmul.mubr.f32.gmra.mrb[0].mxu0 %v2024
  %v2162 = vpop.f32.mrb[0].mxu0
  %v2163 = vadd.f32 %v1984, %v2162
  %v2164 = vpop.f32.mrb[0].mxu0
  %2165 = vdwg.mxu0
  %v2166 = vxor.u32 %v2163, 2147483648
  %v2167 = vmul.f32 %v2166, 1.442695
  %v2168 = vpow.pop %v2167
  %v2169 = vadd.f32 %v2168, 1.0
  %v2170 = vrcp.pop %v2169
  %v2171 = vmul.f32 1.0, %v2170
  %v2172 = vtanh.pop %v2163
  %v2173 = vmul.f32 %v2171, %v1905
  %2175 = vrot.lane.b32.xlu0 %v2172, 32
  %v2176 = vpop.permute.xlu0 %2175
  %v2178 = vmul.f32 %v2171, %v2176
  %2180 = vrot.lane.b32.xlu0 %v2178, 32
  %v2181 = vpop.permute.xlu0 %2180
  %v2183 = vadd.f32 %v2173, %v2181
  %v2184 = vtanh.pop %v2183
  %2186 = vrot.lane.b32.xlu0 %v2184, 32
  %v2187 = vpop.permute.xlu0 %2186
  %v2189 = vmul.f32 %v2171, %v2187
  %2191 = vrot.lane.b32.xlu0 %v2189, 64
  %v2192 = vpop.permute.xlu0 %2191
  %v2193 = vsel %vm367, %v2192, 0
  %2195 = vmatprep.subr.mxu0 0.0
  %2196 = vmatpush1.msra.mxu0 %v51
  %2197 = vmatprep.subr.mxu0 0.0
  %2198 = vmatpush1.msra.mxu0 %v52
  %2199 = vmatprep.subr.mxu0 0.0
  %2200 = vmatpush1.msra.mxu0 %v53
  %2201 = vmatprep.subr.mxu0 0.0
  %2202 = vmatpush1.msra.mxu0 %v54
  %2203 = vmatprep.subr.mxu0 0.0
  %2204 = vmatpush1.msra.mxu0 0.0
  %2205 = vmatprep.subr.mxu0 0.0
  %2206 = vmatpush1.msra.mxu0 0.0
  %2207 = vmatprep.subr.mxu0 0.0
  %2208 = vmatpush1.msra.mxu0 0.0
  %2209 = vmatprep.subr.mxu0 0.0
  %2210 = vmatpush1.msra.mxu0 0.0
  %2211 = vmatprep.subr.mxu0 0.0
  %2212 = vmatpush1.msra.mxu0 0.0
  %2213 = vmatprep.subr.mxu0 0.0
  %2214 = vmatpush1.msra.mxu0 0.0
  %2215 = vmatprep.subr.mxu0 0.0
  %2216 = vmatpush1.msra.mxu0 0.0
  %2217 = vmatprep.subr.mxu0 0.0
  %2218 = vmatpush1.msra.mxu0 0.0
  %2219 = vmatprep.subr.mxu0 0.0
  %2220 = vmatpush1.msra.mxu0 0.0
  %2221 = vmatprep.subr.mxu0 0.0
  %2222 = vmatpush1.msra.mxu0 0.0
  %2223 = vmatprep.subr.mxu0 0.0
  %2224 = vmatpush1.msra.mxu0 0.0
  %2225 = vmatprep.subr.mxu0 0.0
  %2226 = vmatpush1.msra.mxu0 0.0
  %2227 = vmatprep.subr.mxu0 0.0
  %2228 = vmatpush1.msra.mxu0 0.0
  %2229 = vmatprep.subr.mxu0 0.0
  %2230 = vmatpush1.msra.mxu0 0.0
  %2231 = vmatprep.subr.mxu0 0.0
  %2232 = vmatpush1.msra.mxu0 0.0
  %2233 = vmatprep.subr.mxu0 0.0
  %2234 = vmatpush1.msra.mxu0 0.0
  %2235 = vmatprep.subr.mxu0 0.0
  %2236 = vmatpush1.msra.mxu0 0.0
  %2237 = vmatprep.subr.mxu0 0.0
  %2238 = vmatpush1.msra.mxu0 0.0
  %2239 = vmatprep.subr.mxu0 0.0
  %2240 = vmatpush1.msra.mxu0 0.0
  %2241 = vmatprep.subr.mxu0 0.0
  %2242 = vmatpush1.msra.mxu0 0.0
  %2243 = vmatprep.subr.mxu0 0.0
  %2244 = vmatpush1.msra.mxu0 0.0
  %2245 = vmatprep.subr.mxu0 0.0
  %2246 = vmatpush1.msra.mxu0 0.0
  %2247 = vmatprep.subr.mxu0 0.0
  %2248 = vmatpush1.msra.mxu0 0.0
  %2249 = vmatprep.subr.mxu0 0.0
  %2250 = vmatpush1.msra.mxu0 0.0
  %2251 = vmatprep.subr.mxu0 0.0
  %2252 = vmatpush1.msra.mxu0 0.0
  %2253 = vmatprep.subr.mxu0 0.0
  %2254 = vmatpush1.msra.mxu0 0.0
  %2255 = vmatprep.subr.mxu0 0.0
  %2256 = vmatpush1.msra.mxu0 0.0
  %2257 = vmatprep.subr.mxu0 0.0
  %2258 = vmatpush1.msra.mxu0 0.0
  %2259 = vmatprep.mubr.f32.mxu0 0.0
  %2260 = vmatmul.mubr.f32.gmra.mrb[0].mxu0 %v2193
  %v2261 = vpop.f32.mrb[0].mxu0
  %v2262 = vadd.f32 %v337, %v2261
  %v2263 = vpop.f32.mrb[0].mxu0
  %2264 = vdwg.mxu0
  %2266 = vst.msk [vmem:[#allocation2 + $0xa] sm:$0x3] %vm879, %v2192
  %v2268 = vrot.slane %v2093, 4
  %v2270 = vadd.f32 %v250, %v2268
  %v2271 = vxor.u32 %v2270, 2147483648
  %v2272 = vmul.f32 %v2271, 1.442695
  %v2273 = vpow.pop %v2272
  %v2274 = vadd.f32 %v2273, 1.0
  %v2275 = vrcp.pop %v2274
  %v2276 = vmul.f32 1.0, %v2275
  %v2277 = vtanh.pop %v2270
  %v2279 = vrot.slane %v2013, 6
  %v2281 = vmul.f32 %v2276, %v2279
  %2283 = vrot.lane.b32.xlu0 %v2277, 32
  %v2284 = vpop.permute.xlu0 %2283
  %v2286 = vmul.f32 %v2276, %v2284
  %2288 = vrot.lane.b32.xlu0 %v2286, 32
  %v2289 = vpop.permute.xlu0 %2288
  %v2291 = vadd.f32 %v2281, %v2289
  %v2292 = vtanh.pop %v2291
  %2294 = vrot.lane.b32.xlu0 %v2292, 32
  %v2295 = vpop.permute.xlu0 %2294
  %v2297 = vmul.f32 %v2276, %v2295
  %v2299 = vrot.slane %v2297, 4
  %2300 = vrot.lane.b32.xlu0 %v2299, 64
  %v2301 = vpop.permute.xlu0 %2300
  %v2302 = vsel %vm367, %v2301, 0
  %2304 = vmatprep.subr.mxu0 0.0
  %2305 = vmatpush1.msra.mxu0 %v329
  %2306 = vmatprep.subr.mxu0 0.0
  %2307 = vmatpush1.msra.mxu0 %v330
  %2308 = vmatprep.subr.mxu0 0.0
  %2309 = vmatpush1.msra.mxu0 %v331
  %2310 = vmatprep.subr.mxu0 0.0
  %2311 = vmatpush1.msra.mxu0 %v332
  %2312 = vmatprep.subr.mxu0 0.0
  %2313 = vmatpush1.msra.mxu0 0.0
  %2314 = vmatprep.subr.mxu0 0.0
  %2315 = vmatpush1.msra.mxu0 0.0
  %2316 = vmatprep.subr.mxu0 0.0
  %2317 = vmatpush1.msra.mxu0 0.0
  %2318 = vmatprep.subr.mxu0 0.0
  %2319 = vmatpush1.msra.mxu0 0.0
  %2320 = vmatprep.subr.mxu0 0.0
  %2321 = vmatpush1.msra.mxu0 0.0
  %2322 = vmatprep.subr.mxu0 0.0
  %2323 = vmatpush1.msra.mxu0 0.0
  %2324 = vmatprep.subr.mxu0 0.0
  %2325 = vmatpush1.msra.mxu0 0.0
  %2326 = vmatprep.subr.mxu0 0.0
  %2327 = vmatpush1.msra.mxu0 0.0
  %2328 = vmatprep.subr.mxu0 0.0
  %2329 = vmatpush1.msra.mxu0 0.0
  %2330 = vmatprep.subr.mxu0 0.0
  %2331 = vmatpush1.msra.mxu0 0.0
  %2332 = vmatprep.subr.mxu0 0.0
  %2333 = vmatpush1.msra.mxu0 0.0
  %2334 = vmatprep.subr.mxu0 0.0
  %2335 = vmatpush1.msra.mxu0 0.0
  %2336 = vmatprep.subr.mxu0 0.0
  %2337 = vmatpush1.msra.mxu0 0.0
  %2338 = vmatprep.subr.mxu0 0.0
  %2339 = vmatpush1.msra.mxu0 0.0
  %2340 = vmatprep.subr.mxu0 0.0
  %2341 = vmatpush1.msra.mxu0 0.0
  %2342 = vmatprep.subr.mxu0 0.0
  %2343 = vmatpush1.msra.mxu0 0.0
  %2344 = vmatprep.subr.mxu0 0.0
  %2345 = vmatpush1.msra.mxu0 0.0
  %2346 = vmatprep.subr.mxu0 0.0
  %2347 = vmatpush1.msra.mxu0 0.0
  %2348 = vmatprep.subr.mxu0 0.0
  %2349 = vmatpush1.msra.mxu0 0.0
  %2350 = vmatprep.subr.mxu0 0.0
  %2351 = vmatpush1.msra.mxu0 0.0
  %2352 = vmatprep.subr.mxu0 0.0
  %2353 = vmatpush1.msra.mxu0 0.0
  %2354 = vmatprep.subr.mxu0 0.0
  %2355 = vmatpush1.msra.mxu0 0.0
  %2356 = vmatprep.subr.mxu0 0.0
  %2357 = vmatpush1.msra.mxu0 0.0
  %2358 = vmatprep.subr.mxu0 0.0
  %2359 = vmatpush1.msra.mxu0 0.0
  %2360 = vmatprep.subr.mxu0 0.0
  %2361 = vmatpush1.msra.mxu0 0.0
  %2362 = vmatprep.subr.mxu0 0.0
  %2363 = vmatpush1.msra.mxu0 0.0
  %2364 = vmatprep.subr.mxu0 0.0
  %2365 = vmatpush1.msra.mxu0 0.0
  %2366 = vmatprep.subr.mxu0 0.0
  %2367 = vmatpush1.msra.mxu0 0.0
  %2368 = vmatprep.mubr.f32.mxu0 0.0
  %2369 = vmatmul.mubr.f32.gmra.mrb[0].mxu0 %v2302
  %v2370 = vpop.f32.mrb[0].mxu0
  %v2371 = vadd.f32 0.0, %v2370
  %v2372 = vpop.f32.mrb[0].mxu0
  %2373 = vdwg.mxu0
  %2374 = vmatprep.subr.mxu0 0.0
  %2375 = vmatpush1.msra.mxu0 %v47
  %2376 = vmatprep.subr.mxu0 0.0
  %2377 = vmatpush1.msra.mxu0 %v48
  %2378 = vmatprep.subr.mxu0 0.0
  %2379 = vmatpush1.msra.mxu0 %v49
  %2380 = vmatprep.subr.mxu0 0.0
  %2381 = vmatpush1.msra.mxu0 %v50
  %2382 = vmatprep.subr.mxu0 0.0
  %2383 = vmatpush1.msra.mxu0 0.0
  %2384 = vmatprep.subr.mxu0 0.0
  %2385 = vmatpush1.msra.mxu0 0.0
  %2386 = vmatprep.subr.mxu0 0.0
  %2387 = vmatpush1.msra.mxu0 0.0
  %2388 = vmatprep.subr.mxu0 0.0
  %2389 = vmatpush1.msra.mxu0 0.0
  %2390 = vmatprep.subr.mxu0 0.0
  %2391 = vmatpush1.msra.mxu0 0.0
  %2392 = vmatprep.subr.mxu0 0.0
  %2393 = vmatpush1.msra.mxu0 0.0
  %2394 = vmatprep.subr.mxu0 0.0
  %2395 = vmatpush1.msra.mxu0 0.0
  %2396 = vmatprep.subr.mxu0 0.0
  %2397 = vmatpush1.msra.mxu0 0.0
  %2398 = vmatprep.subr.mxu0 0.0
  %2399 = vmatpush1.msra.mxu0 0.0
  %2400 = vmatprep.subr.mxu0 0.0
  %2401 = vmatpush1.msra.mxu0 0.0
  %2402 = vmatprep.subr.mxu0 0.0
  %2403 = vmatpush1.msra.mxu0 0.0
  %2404 = vmatprep.subr.mxu0 0.0
  %2405 = vmatpush1.msra.mxu0 0.0
  %2406 = vmatprep.subr.mxu0 0.0
  %2407 = vmatpush1.msra.mxu0 0.0
  %2408 = vmatprep.subr.mxu0 0.0
  %2409 = vmatpush1.msra.mxu0 0.0
  %2410 = vmatprep.subr.mxu0 0.0
  %2411 = vmatpush1.msra.mxu0 0.0
  %2412 = vmatprep.subr.mxu0 0.0
  %2413 = vmatpush1.msra.mxu0 0.0
  %2414 = vmatprep.subr.mxu0 0.0
  %2415 = vmatpush1.msra.mxu0 0.0
  %2416 = vmatprep.subr.mxu0 0.0
  %2417 = vmatpush1.msra.mxu0 0.0
  %2418 = vmatprep.subr.mxu0 0.0
  %2419 = vmatpush1.msra.mxu0 0.0
  %2420 = vmatprep.subr.mxu0 0.0
  %2421 = vmatpush1.msra.mxu0 0.0
  %2422 = vmatprep.subr.mxu0 0.0
  %2423 = vmatpush1.msra.mxu0 0.0
  %2424 = vmatprep.subr.mxu0 0.0
  %2425 = vmatpush1.msra.mxu0 0.0
  %2426 = vmatprep.subr.mxu0 0.0
  %2427 = vmatpush1.msra.mxu0 0.0
  %2428 = vmatprep.subr.mxu0 0.0
  %2429 = vmatpush1.msra.mxu0 0.0
  %2430 = vmatprep.subr.mxu0 0.0
  %2431 = vmatpush1.msra.mxu0 0.0
  %2432 = vmatprep.subr.mxu0 0.0
  %2433 = vmatpush1.msra.mxu0 0.0
  %2434 = vmatprep.subr.mxu0 0.0
  %2435 = vmatpush1.msra.mxu0 0.0
  %2436 = vmatprep.subr.mxu0 0.0
  %2437 = vmatpush1.msra.mxu0 0.0
  %2438 = vmatprep.mubr.f32.mxu0 0.0
  %2439 = vmatmul.mubr.f32.gmra.mrb[0].mxu0 %v2302
  %v2440 = vpop.f32.mrb[0].mxu0
  %v2441 = vadd.f32 %v2262, %v2440
  %v2442 = vpop.f32.mrb[0].mxu0
  %2443 = vdwg.mxu0
  %v2444 = vxor.u32 %v2441, 2147483648
  %v2445 = vmul.f32 %v2444, 1.442695
  %v2446 = vpow.pop %v2445
  %v2447 = vadd.f32 %v2446, 1.0
  %v2448 = vrcp.pop %v2447
  %v2449 = vmul.f32 1.0, %v2448
  %v2450 = vtanh.pop %v2441
  %v2451 = vmul.f32 %v2449, %v2183
  %2453 = vrot.lane.b32.xlu0 %v2450, 32
  %v2454 = vpop.permute.xlu0 %2453
  %v2456 = vmul.f32 %v2449, %v2454
  %2458 = vrot.lane.b32.xlu0 %v2456, 32
  %v2459 = vpop.permute.xlu0 %2458
  %v2461 = vadd.f32 %v2451, %v2459
  %v2462 = vtanh.pop %v2461
  %2464 = vrot.lane.b32.xlu0 %v2462, 32
  %v2465 = vpop.permute.xlu0 %2464
  %v2467 = vmul.f32 %v2449, %v2465
  %2469 = vrot.lane.b32.xlu0 %v2467, 64
  %v2470 = vpop.permute.xlu0 %2469
  %v2471 = vsel %vm367, %v2470, 0
  %2473 = vmatprep.subr.mxu0 0.0
  %2474 = vmatpush1.msra.mxu0 %v51
  %2475 = vmatprep.subr.mxu0 0.0
  %2476 = vmatpush1.msra.mxu0 %v52
  %2477 = vmatprep.subr.mxu0 0.0
  %2478 = vmatpush1.msra.mxu0 %v53
  %2479 = vmatprep.subr.mxu0 0.0
  %2480 = vmatpush1.msra.mxu0 %v54
  %2481 = vmatprep.subr.mxu0 0.0
  %2482 = vmatpush1.msra.mxu0 0.0
  %2483 = vmatprep.subr.mxu0 0.0
  %2484 = vmatpush1.msra.mxu0 0.0
  %2485 = vmatprep.subr.mxu0 0.0
  %2486 = vmatpush1.msra.mxu0 0.0
  %2487 = vmatprep.subr.mxu0 0.0
  %2488 = vmatpush1.msra.mxu0 0.0
  %2489 = vmatprep.subr.mxu0 0.0
  %2490 = vmatpush1.msra.mxu0 0.0
  %2491 = vmatprep.subr.mxu0 0.0
  %2492 = vmatpush1.msra.mxu0 0.0
  %2493 = vmatprep.subr.mxu0 0.0
  %2494 = vmatpush1.msra.mxu0 0.0
  %2495 = vmatprep.subr.mxu0 0.0
  %2496 = vmatpush1.msra.mxu0 0.0
  %2497 = vmatprep.subr.mxu0 0.0
  %2498 = vmatpush1.msra.mxu0 0.0
  %2499 = vmatprep.subr.mxu0 0.0
  %2500 = vmatpush1.msra.mxu0 0.0
  %2501 = vmatprep.subr.mxu0 0.0
  %2502 = vmatpush1.msra.mxu0 0.0
  %2503 = vmatprep.subr.mxu0 0.0
  %2504 = vmatpush1.msra.mxu0 0.0
  %2505 = vmatprep.subr.mxu0 0.0
  %2506 = vmatpush1.msra.mxu0 0.0
  %2507 = vmatprep.subr.mxu0 0.0
  %2508 = vmatpush1.msra.mxu0 0.0
  %2509 = vmatprep.subr.mxu0 0.0
  %2510 = vmatpush1.msra.mxu0 0.0
  %2511 = vmatprep.subr.mxu0 0.0
  %2512 = vmatpush1.msra.mxu0 0.0
  %2513 = vmatprep.subr.mxu0 0.0
  %2514 = vmatpush1.msra.mxu0 0.0
  %2515 = vmatprep.subr.mxu0 0.0
  %2516 = vmatpush1.msra.mxu0 0.0
  %2517 = vmatprep.subr.mxu0 0.0
  %2518 = vmatpush1.msra.mxu0 0.0
  %2519 = vmatprep.subr.mxu0 0.0
  %2520 = vmatpush1.msra.mxu0 0.0
  %2521 = vmatprep.subr.mxu0 0.0
  %2522 = vmatpush1.msra.mxu0 0.0
  %2523 = vmatprep.subr.mxu0 0.0
  %2524 = vmatpush1.msra.mxu0 0.0
  %2525 = vmatprep.subr.mxu0 0.0
  %2526 = vmatpush1.msra.mxu0 0.0
  %2527 = vmatprep.subr.mxu0 0.0
  %2528 = vmatpush1.msra.mxu0 0.0
  %2529 = vmatprep.subr.mxu0 0.0
  %2530 = vmatpush1.msra.mxu0 0.0
  %2531 = vmatprep.subr.mxu0 0.0
  %2532 = vmatpush1.msra.mxu0 0.0
  %2533 = vmatprep.subr.mxu0 0.0
  %2534 = vmatpush1.msra.mxu0 0.0
  %2535 = vmatprep.subr.mxu0 0.0
  %2536 = vmatpush1.msra.mxu0 0.0
  %2537 = vmatprep.mubr.f32.mxu0 0.0
  %2538 = vmatmul.mubr.f32.gmra.mrb[0].mxu0 %v2471
  %v2539 = vpop.f32.mrb[0].mxu0
  %v2540 = vadd.f32 %v337, %v2539
  %v2541 = vpop.f32.mrb[0].mxu0
  %2542 = vdwg.mxu0
  %2544 = vst.msk [vmem:[#allocation2 + $0xc] sm:$0x3] %vm879, %v2470
  %v2546 = vrot.slane %v2371, 2
  %v2548 = vadd.f32 %v250, %v2546
  %v2549 = vxor.u32 %v2548, 2147483648
  %v2550 = vmul.f32 %v2549, 1.442695
  %v2551 = vpow.pop %v2550
  %v2552 = vadd.f32 %v2551, 1.0
  %v2553 = vrcp.pop %v2552
  %v2554 = vmul.f32 1.0, %v2553
  %v2555 = vtanh.pop %v2548
  %v2557 = vrot.slane %v2291, 6
  %v2559 = vmul.f32 %v2554, %v2557
  %2561 = vrot.lane.b32.xlu0 %v2555, 32
  %v2562 = vpop.permute.xlu0 %2561
  %v2564 = vmul.f32 %v2554, %v2562
  %2566 = vrot.lane.b32.xlu0 %v2564, 32
  %v2567 = vpop.permute.xlu0 %2566
  %v2569 = vadd.f32 %v2559, %v2567
  %v2570 = vtanh.pop %v2569
  %2572 = vrot.lane.b32.xlu0 %v2570, 32
  %v2573 = vpop.permute.xlu0 %2572
  %v2575 = vmul.f32 %v2554, %v2573
  %v2577 = vrot.slane %v2575, 6
  %2578 = vrot.lane.b32.xlu0 %v2577, 64
  %v2579 = vpop.permute.xlu0 %2578
  %v2580 = vsel %vm367, %v2579, 0
  %2582 = vmatprep.subr.mxu0 0.0
  %2583 = vmatpush1.msra.mxu0 %v47
  %2584 = vmatprep.subr.mxu0 0.0
  %2585 = vmatpush1.msra.mxu0 %v48
  %2586 = vmatprep.subr.mxu0 0.0
  %2587 = vmatpush1.msra.mxu0 %v49
  %2588 = vmatprep.subr.mxu0 0.0
  %2589 = vmatpush1.msra.mxu0 %v50
  %2590 = vmatprep.subr.mxu0 0.0
  %2591 = vmatpush1.msra.mxu0 0.0
  %2592 = vmatprep.subr.mxu0 0.0
  %2593 = vmatpush1.msra.mxu0 0.0
  %2594 = vmatprep.subr.mxu0 0.0
  %2595 = vmatpush1.msra.mxu0 0.0
  %2596 = vmatprep.subr.mxu0 0.0
  %2597 = vmatpush1.msra.mxu0 0.0
  %2598 = vmatprep.subr.mxu0 0.0
  %2599 = vmatpush1.msra.mxu0 0.0
  %2600 = vmatprep.subr.mxu0 0.0
  %2601 = vmatpush1.msra.mxu0 0.0
  %2602 = vmatprep.subr.mxu0 0.0
  %2603 = vmatpush1.msra.mxu0 0.0
  %2604 = vmatprep.subr.mxu0 0.0
  %2605 = vmatpush1.msra.mxu0 0.0
  %2606 = vmatprep.subr.mxu0 0.0
  %2607 = vmatpush1.msra.mxu0 0.0
  %2608 = vmatprep.subr.mxu0 0.0
  %2609 = vmatpush1.msra.mxu0 0.0
  %2610 = vmatprep.subr.mxu0 0.0
  %2611 = vmatpush1.msra.mxu0 0.0
  %2612 = vmatprep.subr.mxu0 0.0
  %2613 = vmatpush1.msra.mxu0 0.0
  %2614 = vmatprep.subr.mxu0 0.0
  %2615 = vmatpush1.msra.mxu0 0.0
  %2616 = vmatprep.subr.mxu0 0.0
  %2617 = vmatpush1.msra.mxu0 0.0
  %2618 = vmatprep.subr.mxu0 0.0
  %2619 = vmatpush1.msra.mxu0 0.0
  %2620 = vmatprep.subr.mxu0 0.0
  %2621 = vmatpush1.msra.mxu0 0.0
  %2622 = vmatprep.subr.mxu0 0.0
  %2623 = vmatpush1.msra.mxu0 0.0
  %2624 = vmatprep.subr.mxu0 0.0
  %2625 = vmatpush1.msra.mxu0 0.0
  %2626 = vmatprep.subr.mxu0 0.0
  %2627 = vmatpush1.msra.mxu0 0.0
  %2628 = vmatprep.subr.mxu0 0.0
  %2629 = vmatpush1.msra.mxu0 0.0
  %2630 = vmatprep.subr.mxu0 0.0
  %2631 = vmatpush1.msra.mxu0 0.0
  %2632 = vmatprep.subr.mxu0 0.0
  %2633 = vmatpush1.msra.mxu0 0.0
  %2634 = vmatprep.subr.mxu0 0.0
  %2635 = vmatpush1.msra.mxu0 0.0
  %2636 = vmatprep.subr.mxu0 0.0
  %2637 = vmatpush1.msra.mxu0 0.0
  %2638 = vmatprep.subr.mxu0 0.0
  %2639 = vmatpush1.msra.mxu0 0.0
  %2640 = vmatprep.subr.mxu0 0.0
  %2641 = vmatpush1.msra.mxu0 0.0
  %2642 = vmatprep.subr.mxu0 0.0
  %2643 = vmatpush1.msra.mxu0 0.0
  %2644 = vmatprep.subr.mxu0 0.0
  %2645 = vmatpush1.msra.mxu0 0.0
  %2646 = vmatprep.mubr.f32.mxu0 0.0
  %2647 = vmatmul.mubr.f32.gmra.mrb[0].mxu0 %v2580
  %v2648 = vpop.f32.mrb[0].mxu0
  %v2649 = vadd.f32 %v2540, %v2648
  %v2650 = vpop.f32.mrb[0].mxu0
  %2651 = vdwg.mxu0
  %v2652 = vxor.u32 %v2649, 2147483648
  %v2653 = vmul.f32 %v2652, 1.442695
  %v2654 = vpow.pop %v2653
  %v2655 = vadd.f32 %v2654, 1.0
  %v2656 = vrcp.pop %v2655
  %v2657 = vmul.f32 1.0, %v2656
  %v2658 = vtanh.pop %v2649
  %v2659 = vmul.f32 %v2657, %v2461
  %2661 = vrot.lane.b32.xlu0 %v2658, 32
  %v2662 = vpop.permute.xlu0 %2661
  %v2664 = vmul.f32 %v2657, %v2662
  %2666 = vrot.lane.b32.xlu0 %v2664, 32
  %v2667 = vpop.permute.xlu0 %2666
  %v2669 = vadd.f32 %v2659, %v2667
  %v2670 = vtanh.pop %v2669
  %2672 = vrot.lane.b32.xlu0 %v2670, 32
  %v2673 = vpop.permute.xlu0 %2672
  %v2675 = vmul.f32 %v2657, %v2673
  %2677 = vrot.lane.b32.xlu0 %v2675, 64
  %v2678 = vpop.permute.xlu0 %2677
  %2680 = vst.msk [vmem:[#allocation2 + $0xe] sm:$0x3] %vm879, %v2678
  %v2681 = vld [vmem:[#allocation2] sm:$0xff]
  %v2682 = vld [vmem:[#allocation2 + $0x8] sm:$0xff]
  %v2683 = vld [vmem:[%s2] sm:$0xff]
  %v2684 = vld [vmem:[%s2 + $0x8] sm:$0xff]
  %2686 = vset.pattern.permute.xlu0 0
  %2687 = vperm.xlu0 %2686, %v2683
  %v2688 = vpop.permute.xlu0 %2687
  %2691 = vset.pattern.permute.xlu0 0
  %2692 = vperm.xlu0 %2691, %v2684
  %v2693 = vpop.permute.xlu0 %2692
  %v2695 = vmul.f32 %v2681, %v2688
  %v2696 = vmul.f32 %v2682, %v2693
  %v2697 = vld [vmem:[%s12] sm:$0xff]
  %v2698 = vld [vmem:[%s12 + $0x8] sm:$0xff]
  %v2699 = vld [vmem:[%s12 + $0x10] sm:$0xff]
  %v2700 = vld [vmem:[%s12 + $0x18] sm:$0xff]
  %v2701 = vld [vmem:[%s13] sm:$0x1]
  %v2703 = vlaneseq
  %v2704 = vshrl.u32 %v2703, 7
  %v2705 = vsub.s32 0, %v2704
  %v2706 = vrot.slane %v2701, %v2705
  %v2709 = vsel %vm367, %v2695, 0
  %v2712 = vsel %vm367, %v2696, 0
  %2714 = vmatprep.subr.mxu0 0.0
  %2715 = vmatpush1.msra.mxu0 %v2697
  %2716 = vmatprep.subr.mxu0 0.0
  %2717 = vmatpush1.msra.mxu0 %v2698
  %2718 = vmatprep.subr.mxu0 0.0
  %2719 = vmatpush1.msra.mxu0 %v2699
  %2720 = vmatprep.subr.mxu0 0.0
  %2721 = vmatpush1.msra.mxu0 %v2700
  %2722 = vmatprep.subr.mxu0 0.0
  %2723 = vmatpush1.msra.mxu0 0.0
  %2724 = vmatprep.subr.mxu0 0.0
  %2725 = vmatpush1.msra.mxu0 0.0
  %2726 = vmatprep.subr.mxu0 0.0
  %2727 = vmatpush1.msra.mxu0 0.0
  %2728 = vmatprep.subr.mxu0 0.0
  %2729 = vmatpush1.msra.mxu0 0.0
  %2730 = vmatprep.subr.mxu0 0.0
  %2731 = vmatpush1.msra.mxu0 0.0
  %2732 = vmatprep.subr.mxu0 0.0
  %2733 = vmatpush1.msra.mxu0 0.0
  %2734 = vmatprep.subr.mxu0 0.0
  %2735 = vmatpush1.msra.mxu0 0.0
  %2736 = vmatprep.subr.mxu0 0.0
  %2737 = vmatpush1.msra.mxu0 0.0
  %2738 = vmatprep.subr.mxu0 0.0
  %2739 = vmatpush1.msra.mxu0 0.0
  %2740 = vmatprep.subr.mxu0 0.0
  %2741 = vmatpush1.msra.mxu0 0.0
  %2742 = vmatprep.subr.mxu0 0.0
  %2743 = vmatpush1.msra.mxu0 0.0
  %2744 = vmatprep.subr.mxu0 0.0
  %2745 = vmatpush1.msra.mxu0 0.0
  %2746 = vmatprep.subr.mxu0 0.0
  %2747 = vmatpush1.msra.mxu0 0.0
  %2748 = vmatprep.subr.mxu0 0.0
  %2749 = vmatpush1.msra.mxu0 0.0
  %2750 = vmatprep.subr.mxu0 0.0
  %2751 = vmatpush1.msra.mxu0 0.0
  %2752 = vmatprep.subr.mxu0 0.0
  %2753 = vmatpush1.msra.mxu0 0.0
  %2754 = vmatprep.subr.mxu0 0.0
  %2755 = vmatpush1.msra.mxu0 0.0
  %2756 = vmatprep.subr.mxu0 0.0
  %2757 = vmatpush1.msra.mxu0 0.0
  %2758 = vmatprep.subr.mxu0 0.0
  %2759 = vmatpush1.msra.mxu0 0.0
  %2760 = vmatprep.subr.mxu0 0.0
  %2761 = vmatpush1.msra.mxu0 0.0
  %2762 = vmatprep.subr.mxu0 0.0
  %2763 = vmatpush1.msra.mxu0 0.0
  %2764 = vmatprep.subr.mxu0 0.0
  %2765 = vmatpush1.msra.mxu0 0.0
  %2766 = vmatprep.subr.mxu0 0.0
  %2767 = vmatpush1.msra.mxu0 0.0
  %2768 = vmatprep.subr.mxu0 0.0
  %2769 = vmatpush1.msra.mxu0 0.0
  %2770 = vmatprep.subr.mxu0 0.0
  %2771 = vmatpush1.msra.mxu0 0.0
  %2772 = vmatprep.subr.mxu0 0.0
  %2773 = vmatpush1.msra.mxu0 0.0
  %2774 = vmatprep.subr.mxu0 0.0
  %2775 = vmatpush1.msra.mxu0 0.0
  %2776 = vmatprep.subr.mxu0 0.0
  %2777 = vmatpush1.msra.mxu0 0.0
  %2778 = vmatprep.mubr.f32.mxu0 0.0
  %2779 = vmatmul.mubr.f32.gmra.mrb[0].mxu0 %v2709
  %v2780 = vpop.f32.mrb[0].mxu0
  %v2781 = vadd.f32 %v2706, %v2780
  %v2782 = vpop.f32.mrb[0].mxu0
  %2783 = vmatprep.mubr.f32.mxu0 0.0
  %2784 = vmatmul.mubr.f32.gmra.mrb[0].mxu0 %v2712
  %v2785 = vpop.f32.mrb[0].mxu0
  %v2786 = vadd.f32 %v2706, %v2785
  %v2787 = vpop.f32.mrb[0].mxu0
  %2788 = vdwg.mxu0
  %2789 = vst [vmem:[%s14] sm:$0xff] %v2781
  %2790 = vst [vmem:[%s14 + $0x8] sm:$0xff] %v2786
  // Predicated region
  $region58: #{language_model_forward.1} parent=0 // pred_check
    _
  $region59: #{language_model_forward.1} parent=0 // pred_check_branch
    %2792 = sbr.rel (0) target = $region61
  $region60: #{language_model_forward.1} parent=0 // pred_region
    _
  $region61: #{language_model_forward.1} parent=0 // pred_fallthru
    _
  // Predicated region
  $region62: #{language_model_forward.1} parent=0 // pred_check
    _
  $region63: #{language_model_forward.1} parent=0 // pred_check_branch
    %2794 = sbr.rel (0) target = $region65
  $region64: #{language_model_forward.1} parent=0 // pred_region
    _
  $region65: #{language_model_forward.1} parent=0 // pred_fallthru
    _

</llo_original>
